<compile_context>
chip_gen: v5e
topology: v5e:2x2
jax: 0.10.0
libtpu: 0.0.40
codegen_flags: <defaults>
</compile_context>

<pallas_src>
import math

import jax
import jax.numpy as jnp
from jax.experimental import pallas as pl
from jax.experimental.pallas import tpu as pltpu

# ---------------- small synthetic config (module __init__ only wraps model.text) ---------
VOCAB = 64
SEQ = 8                 # text sequence length
WIDTH = 32              # transformer width
HEADS = 4
LAYERS = 2
MLP = 4 * WIDTH
EMBED = 32              # text_projection output dim
PAD_ID = 0
S = SEQ + 1             # +1 appended CLS token (CoCa)
DH = WIDTH // HEADS
EPS_LN = 1e-5           # nn.LayerNorm default
EPS_NORM = 1e-12        # F.normalize default
# Finite "masked" value.  The diagonal of the causal mask is always unmasked, so every
# softmax row has a finite max and masked entries underflow to exactly 0; if the masking
# were ever changed to allow a fully-masked row this would silently give a uniform row.
NEG_INF = -1e30


def _layer_norm(x, g, b):
    mu = jnp.mean(x, axis=-1, keepdims=True)
    var = jnp.mean((x - mu) ** 2, axis=-1, keepdims=True)
    return (x - mu) * jax.lax.rsqrt(var + EPS_LN) * g + b


def _gelu(x):
    # tanh-approximate GELU: routes through the EUP (free slot next to VALU/MXU work).
    # TODO(synk): restore exact erf GELU (jax.lax.erf) if bit parity with PyTorch
    # nn.GELU(default) is required; difference is ~3e-3 max abs.
    c = math.sqrt(2.0 / math.pi)
    return 0.5 * x * (1.0 + jnp.tanh(c * (x + 0.044715 * x * x * x)))


# ---------------- Pallas kernel: one batch sample per grid step ---------------------------
def _coca_kernel(x_ref, keep_ref, pos_ref,
                 ln1_g_ref, ln1_b_ref, wqkv_ref, bqkv_ref, woh_ref, bo_ref,
                 ln2_g_ref, ln2_b_ref, w1_ref, b1_ref, w2_ref, b2_ref,
                 lnf_g_ref, lnf_b_ref, proj_ref,
                 tok_out_ref, lat_ref):
    D = WIDTH
    scale = 1.0 / math.sqrt(DH)

    # positional embedding add (fused)
    x = x_ref[...] + pos_ref[...]                                   # [S, D]

    # ---- additive attention mask built in-kernel (causal + open_clip build_cls_mask) ----
    # keep_ref holds [1, text != pad] per sample.  It is index-shifted relative to the
    # key positions on purpose (CLS is appended at the END of the sequence, the
    # unconditional keep sits at key 0): this reproduces open_clip's
    # build_cls_mask + F.pad behaviour exactly — do NOT "fix" the shift.
    row = jax.lax.broadcasted_iota(jnp.int32, (S, S), 0)
    col = jax.lax.broadcasted_iota(jnp.int32, (S, S), 1)
    causal_ok = col <= row                                          # [S, S]
    keep_ok = keep_ref[...] > 0.5                                   # [1, S]
    cls_row = row == (S - 1)                                        # only CLS query row is pad-masked
    ok = causal_ok & (jnp.logical_not(cls_row) | keep_ok)           # [S, S]
    mask = jnp.where(ok, 0.0, NEG_INF).astype(jnp.float32)

    # ---- transformer: layers unrolled (toy depth), stacked weights VMEM-resident --------
    # TODO(synk): at production depth, move layers onto a grid axis / fori_loop so live
    # ranges reset per layer (and weights can be streamed).
    for li in range(LAYERS):
        # multi-head self-attention (pre-norm residual)
        h = _layer_norm(x, ln1_g_ref[li], ln1_b_ref[li])            # [S, D]
        # single 2-D matmul against the un-broadcast weight (weight stationary in MXU)
        qkv = jnp.dot(h, wqkv_ref[li],
                      preferred_element_type=jnp.float32) + bqkv_ref[li]          # [S, 3D]

        # head-major views [H, S, DH]: leading-axis stack of static lane slices
        q = jnp.stack([qkv[:, 0 * D + hh * DH: 0 * D + (hh + 1) * DH]
                       for hh in range(HEADS)], axis=0)
        k = jnp.stack([qkv[:, 1 * D + hh * DH: 1 * D + (hh + 1) * DH]
                       for hh in range(HEADS)], axis=0)
        v = jnp.stack([qkv[:, 2 * D + hh * DH: 2 * D + (hh + 1) * DH]
                       for hh in range(HEADS)], axis=0)

        # head-batched attention: two leading-batch contractions (no per-head loop)
        s = jnp.einsum('hqd,hkd->hqk', q, k,
                       preferred_element_type=jnp.float32) * scale + mask[None]   # [H, S, S]
        s = s - jnp.max(s, axis=-1, keepdims=True)
        p = jnp.exp(s)
        p = p * pl.reciprocal(jnp.sum(p, axis=-1, keepdims=True), approx=True)
        o = jnp.einsum('hqk,hkd->hqd', p, v,
                       preferred_element_type=jnp.float32)                        # [H, S, DH]

        # head-batched output projection against W_o viewed as [H, DH, D], reduced over
        # heads: avoids the minor-dim (lane) concat of head outputs entirely.
        attn = jnp.sum(jnp.einsum('hsd,hdf->hsf', o, woh_ref[li],
                                  preferred_element_type=jnp.float32),
                       axis=0) + bo_ref[li]                                       # [S, D]
        x = x + attn

        # MLP (pre-norm residual) — plain 2-D matmuls against un-broadcast weights
        h2 = _layer_norm(x, ln2_g_ref[li], ln2_b_ref[li])
        h2 = jnp.dot(h2, w1_ref[li], preferred_element_type=jnp.float32) + b1_ref[li]
        h2 = _gelu(h2)
        h2 = jnp.dot(h2, w2_ref[li], preferred_element_type=jnp.float32) + b2_ref[li]
        x = x + h2

    # tokens output: only the SEQ token rows (CLS row dropped in-kernel; NO ln_final on
    # the CLS-pool path).  TODO(synk): at production width present this lane-dense
    # ([SEQ*WIDTH] slab) to get unmasked stores; WIDTH=32 here lowers to masked vst.
    tok_out_ref[...] = x[:SEQ, :]

    # ---- pooled head: ln_final(x[-1]) @ text_projection, then F.normalize(dim=-1) -------
    pooled = x[S - 1:S, :]                                          # [1, D] (CLS token)
    hp = _layer_norm(pooled, lnf_g_ref[...], lnf_b_ref[...])
    z = jnp.dot(hp, proj_ref[...], preferred_element_type=jnp.float32)   # [1, E]
    # x / max(||x||, eps) == x * rsqrt(max(||x||^2, eps^2))  (rsqrt runs on the EUP)
    inv = jax.lax.rsqrt(jnp.maximum(jnp.sum(z * z, axis=-1, keepdims=True),
                                    EPS_NORM * EPS_NORM))
    lat_ref[...] = z * inv


def _full_spec(arr):
    # whole-array block with a constant block index: fetched once, stays VMEM-resident
    # across the batch grid (no per-step re-DMA).
    idx = (0,) * arr.ndim
    return pl.BlockSpec(arr.shape, lambda b: idx)


def _coca_fused(x_emb, keep_ext, params):
    B = x_emb.shape[0]
    weight_names = ['ln1_g', 'ln1_b', 'wqkv', 'bqkv', 'wo_h', 'bo',
                    'ln2_g', 'ln2_b', 'w1', 'b1', 'w2', 'b2',
                    'lnf_g', 'lnf_b', 'proj']
    weights = [params[n] for n in weight_names]

    # rough cost estimate (per sample) so XLA doesn't treat the fused call as zero-cost
    flops_per_sample = LAYERS * (2 * S * WIDTH * 3 * WIDTH        # qkv projection
                                 + 4 * S * S * WIDTH              # scores + p@v
                                 + 2 * S * WIDTH * WIDTH          # output projection
                                 + 4 * S * WIDTH * MLP)           # MLP
    flops_per_sample += 2 * WIDTH * EMBED                         # text projection
    trans_per_sample = LAYERS * (HEADS * S * S + S * MLP) + 4 * LAYERS * S + EMBED
    bytes_accessed = 4 * (x_emb.size + keep_ext.size + params['pos_emb'].size
                          + sum(int(w.size) for w in weights)
                          + B * SEQ * WIDTH + B * EMBED)

    in_specs = [
        pl.BlockSpec((None, S, WIDTH), lambda b: (b, 0, 0)),      # x: one sample per step
        pl.BlockSpec((None, 1, S), lambda b: (b, 0, 0)),          # keep vector
        pl.BlockSpec((S, WIDTH), lambda b: (0, 0)),               # pos_emb (resident)
    ] + [_full_spec(w) for w in weights]

    out_specs = (
        pl.BlockSpec((None, SEQ, WIDTH), lambda b: (b, 0, 0)),    # tokens (CLS row dropped)
        pl.BlockSpec((None, 1, EMBED), lambda b: (b, 0, 0)),      # normalized latent
    )

    tok, lat = pl.pallas_call(
        _coca_kernel,
        grid=(B,),
        in_specs=in_specs,
        out_specs=out_specs,
        out_shape=(jax.ShapeDtypeStruct((B, SEQ, WIDTH), jnp.float32),
                   jax.ShapeDtypeStruct((B, 1, EMBED), jnp.float32)),
        compiler_params=pltpu.CompilerParams(dimension_semantics=("parallel",)),
        cost_estimate=pl.CostEstimate(flops=B * flops_per_sample,
                                      transcendentals=B * trans_per_sample,
                                      bytes_accessed=bytes_accessed),
    )(x_emb, keep_ext, params['pos_emb'], *weights)
    return tok, lat


# ---------------- full forward (only the embedding gather stays in XLA glue) -------------
def coca_text_encoder(text, params):
    B, L = text.shape
    assert L == SEQ

    # token embedding gather + CLS append (glue; data-dependent vocab gather)
    x = jnp.take(params['tok_emb'], text, axis=0)                  # [B, SEQ, D]
    cls = jnp.broadcast_to(params['cls_emb'][None, :, :], (B, 1, WIDTH))
    x = jnp.concatenate([x, cls], axis=1)                          # [B, S, D]

    # open_clip build_cls_mask key-keep vector: [True, text != pad_id] per batch row
    keep_ext = jnp.concatenate(
        [jnp.ones((B, 1), jnp.float32), (text != PAD_ID).astype(jnp.float32)],
        axis=1).reshape(B, 1, S)                                   # [B, 1, S]

    token_emb, lat = _coca_fused(x, keep_ext, params)
    text_latent = lat[:, 0, :]            # ln_final + projection + L2 normalize (in kernel)
    return text_latent, token_emb          # tokens already exclude the CLS row (in kernel)


# ---------------- deterministic synthetic parameters (layer weights stacked) -------------
def init_params(key):
    ks = iter(jax.random.split(key, 32))

    def nrm(shape, scale=0.02):
        return scale * jax.random.normal(next(ks), shape, jnp.float32)

    Ly = LAYERS
    # W_o generated in the standard [D_in, D_out] layout, then presented head-major
    # [H, DH, D] so the kernel can do a head-batched output projection (no lane concat).
    wo = nrm((Ly, WIDTH, WIDTH))
    return {
        'tok_emb': nrm((VOCAB, WIDTH)),
        'cls_emb': nrm((1, WIDTH)),
        'pos_emb': nrm((S, WIDTH), 0.01),
        'lnf_g': jnp.ones((1, WIDTH), jnp.float32),
        'lnf_b': jnp.zeros((1, WIDTH), jnp.float32),
        'proj': nrm((WIDTH, EMBED)),
        # stacked per-layer weights (f32 at toy size; TODO(synk): bf16 at production)
        'ln1_g': jnp.ones((Ly, 1, WIDTH), jnp.float32),
        'ln1_b': jnp.zeros((Ly, 1, WIDTH), jnp.float32),
        'wqkv': nrm((Ly, WIDTH, 3 * WIDTH)),
        'bqkv': jnp.zeros((Ly, 1, 3 * WIDTH), jnp.float32),
        'wo_h': wo.reshape(Ly, HEADS, DH, WIDTH),
        'bo': jnp.zeros((Ly, 1, WIDTH), jnp.float32),
        'ln2_g': jnp.ones((Ly, 1, WIDTH), jnp.float32),
        'ln2_b': jnp.zeros((Ly, 1, WIDTH), jnp.float32),
        'w1': nrm((Ly, WIDTH, MLP)),
        'b1': jnp.zeros((Ly, 1, MLP), jnp.float32),
        'w2': nrm((Ly, MLP, WIDTH)),
        'b2': jnp.zeros((Ly, 1, WIDTH), jnp.float32),
    }


if __name__ == "__main__":
    key = jax.random.PRNGKey(0)
    pkey, tkey = jax.random.split(key)
    params = init_params(pkey)

    B = 2
    text_input = jax.random.randint(tkey, (B, SEQ), 0, VOCAB, dtype=jnp.int32)

    fwd = jax.jit(coca_text_encoder)
    text_latent, token_emb = fwd(text_input, params)
    jax.block_until_ready((text_latent, token_emb))

    assert text_latent.shape == (B, EMBED)
    assert token_emb.shape == (B, SEQ, WIDTH)
    # text_latent is L2-normalized along dim=-1
    norms = jnp.linalg.norm(text_latent, axis=-1)
    assert bool(jnp.all(jnp.abs(norms - 1.0) < 1e-4))
    assert bool(jnp.all(jnp.isfinite(token_emb)))

    print("KERNEL_OK")
</pallas_src>

<mosaic_0001>
module attributes {stable_mosaic.version = 11 : i64} {
  func.func @_coca_kernel(%arg0: i32, %arg1: memref<1x9x32xf32, #tpu.memory_space<vmem>>, %arg2: memref<1x1x9xf32, #tpu.memory_space<vmem>>, %arg3: memref<9x32xf32, #tpu.memory_space<vmem>>, %arg4: memref<2x1x32xf32, #tpu.memory_space<vmem>>, %arg5: memref<2x1x32xf32, #tpu.memory_space<vmem>>, %arg6: memref<2x32x96xf32, #tpu.memory_space<vmem>>, %arg7: memref<2x1x96xf32, #tpu.memory_space<vmem>>, %arg8: memref<2x4x8x32xf32, #tpu.memory_space<vmem>>, %arg9: memref<2x1x32xf32, #tpu.memory_space<vmem>>, %arg10: memref<2x1x32xf32, #tpu.memory_space<vmem>>, %arg11: memref<2x1x32xf32, #tpu.memory_space<vmem>>, %arg12: memref<2x32x128xf32, #tpu.memory_space<vmem>>, %arg13: memref<2x1x128xf32, #tpu.memory_space<vmem>>, %arg14: memref<2x128x32xf32, #tpu.memory_space<vmem>>, %arg15: memref<2x1x32xf32, #tpu.memory_space<vmem>>, %arg16: memref<1x32xf32, #tpu.memory_space<vmem>>, %arg17: memref<1x32xf32, #tpu.memory_space<vmem>>, %arg18: memref<32x32xf32, #tpu.memory_space<vmem>>, %arg19: memref<1x8x32xf32, #tpu.memory_space<vmem>>, %arg20: memref<1x1x32xf32, #tpu.memory_space<vmem>>) attributes {dimension_semantics = [#tpu.dimension_semantics<parallel>], iteration_bounds = array<i64: 2>, scalar_prefetch = 0 : i64, scratch_operands = 0 : i64, tpu.core_type = #tpu.core_type<tc>, window_params = [{transform_indices = @transform_0, window_bounds = array<i64: 1, 9, 32>}, {transform_indices = @transform_1, window_bounds = array<i64: 1, 1, 9>}, {pipeline_mode = #tpu.pipeline_mode<synchronous>, transform_indices = @transform_2, window_bounds = array<i64: 9, 32>}, {pipeline_mode = #tpu.pipeline_mode<synchronous>, transform_indices = @transform_3, window_bounds = array<i64: 2, 1, 32>}, {pipeline_mode = #tpu.pipeline_mode<synchronous>, transform_indices = @transform_4, window_bounds = array<i64: 2, 1, 32>}, {pipeline_mode = #tpu.pipeline_mode<synchronous>, transform_indices = @transform_5, window_bounds = array<i64: 2, 32, 96>}, {pipeline_mode = #tpu.pipeline_mode<synchronous>, transform_indices = @transform_6, window_bounds = array<i64: 2, 1, 96>}, {pipeline_mode = #tpu.pipeline_mode<synchronous>, transform_indices = @transform_7, window_bounds = array<i64: 2, 4, 8, 32>}, {pipeline_mode = #tpu.pipeline_mode<synchronous>, transform_indices = @transform_8, window_bounds = array<i64: 2, 1, 32>}, {pipeline_mode = #tpu.pipeline_mode<synchronous>, transform_indices = @transform_9, window_bounds = array<i64: 2, 1, 32>}, {pipeline_mode = #tpu.pipeline_mode<synchronous>, transform_indices = @transform_10, window_bounds = array<i64: 2, 1, 32>}, {pipeline_mode = #tpu.pipeline_mode<synchronous>, transform_indices = @transform_11, window_bounds = array<i64: 2, 32, 128>}, {pipeline_mode = #tpu.pipeline_mode<synchronous>, transform_indices = @transform_12, window_bounds = array<i64: 2, 1, 128>}, {pipeline_mode = #tpu.pipeline_mode<synchronous>, transform_indices = @transform_13, window_bounds = array<i64: 2, 128, 32>}, {pipeline_mode = #tpu.pipeline_mode<synchronous>, transform_indices = @transform_14, window_bounds = array<i64: 2, 1, 32>}, {pipeline_mode = #tpu.pipeline_mode<synchronous>, transform_indices = @transform_15, window_bounds = array<i64: 1, 32>}, {pipeline_mode = #tpu.pipeline_mode<synchronous>, transform_indices = @transform_16, window_bounds = array<i64: 1, 32>}, {pipeline_mode = #tpu.pipeline_mode<synchronous>, transform_indices = @transform_17, window_bounds = array<i64: 32, 32>}, {transform_indices = @transform_18, window_bounds = array<i64: 1, 8, 32>}, {transform_indices = @transform_19, window_bounds = array<i64: 1, 1, 32>}]} {
    %c0 = arith.constant 0 : index
    %c0_0 = arith.constant 0 : index
    %c0_1 = arith.constant 0 : index
    %0 = vector.load %arg1[%c0, %c0_0, %c0_1] : memref<1x9x32xf32, #tpu.memory_space<vmem>>, vector<1x9x32xf32>
    %1 = vector.shape_cast %0 : vector<1x9x32xf32> to vector<9x32xf32>
    %c0_2 = arith.constant 0 : index
    %c0_3 = arith.constant 0 : index
    %2 = vector.load %arg3[%c0_2, %c0_3] : memref<9x32xf32, #tpu.memory_space<vmem>>, vector<9x32xf32>
    %3 = arith.addf %1, %2 : vector<9x32xf32>
    %4 = tpu.iota {dimensions = array<i32: 0>} : vector<9x9xi32>
    %5 = tpu.iota {dimensions = array<i32: 1>} : vector<9x9xi32>
    %6 = arith.cmpi sle, %5, %4 : vector<9x9xi32>
    %c0_4 = arith.constant 0 : index
    %c0_5 = arith.constant 0 : index
    %c0_6 = arith.constant 0 : index
    %7 = vector.load %arg2[%c0_4, %c0_5, %c0_6] : memref<1x1x9xf32, #tpu.memory_space<vmem>>, vector<1x1x9xf32>
    %8 = vector.shape_cast %7 : vector<1x1x9xf32> to vector<1x9xf32>
    %cst = arith.constant 5.000000e-01 : f32
    %9 = vector.broadcast %cst : f32 to vector<1x9xf32>
    %10 = arith.cmpf ogt, %8, %9 : vector<1x9xf32>
    %c8_i32 = arith.constant 8 : i32
    %11 = vector.broadcast %c8_i32 : i32 to vector<9x9xi32>
    %12 = arith.cmpi eq, %4, %11 : vector<9x9xi32>
    %cst_7 = arith.constant dense<true> : vector<9x9xi1>
    %13 = arith.xori %12, %cst_7 : vector<9x9xi1>
    %14 = vector.broadcast %10 : vector<1x9xi1> to vector<9x9xi1>
    %15 = arith.ori %13, %14 : vector<9x9xi1>
    %16 = arith.andi %6, %15 : vector<9x9xi1>
    %cst_8 = arith.constant 0.000000e+00 : f32
    %cst_9 = arith.constant -1.000000e+30 : f32
    %17 = vector.broadcast %cst_8 : f32 to vector<9x9xf32>
    %18 = vector.broadcast %cst_9 : f32 to vector<9x9xf32>
    %19 = arith.select %16, %17, %18 : vector<9x9xi1>, vector<9x9xf32>
    %c0_10 = arith.constant 0 : index
    %c0_11 = arith.constant 0 : index
    %c0_12 = arith.constant 0 : index
    %20 = vector.load %arg4[%c0_10, %c0_11, %c0_12] : memref<2x1x32xf32, #tpu.memory_space<vmem>>, vector<1x1x32xf32>
    %21 = vector.shape_cast %20 : vector<1x1x32xf32> to vector<1x32xf32>
    %c0_13 = arith.constant 0 : index
    %c0_14 = arith.constant 0 : index
    %c0_15 = arith.constant 0 : index
    %22 = vector.load %arg5[%c0_13, %c0_14, %c0_15] : memref<2x1x32xf32, #tpu.memory_space<vmem>>, vector<1x1x32xf32>
    %23 = vector.shape_cast %22 : vector<1x1x32xf32> to vector<1x32xf32>
    %cst_16 = arith.constant dense<0.000000e+00> : vector<9xf32>
    %24 = vector.multi_reduction <add>, %3, %cst_16 [1] : vector<9x32xf32> to vector<9xf32>
    %25 = vector.shape_cast %24 : vector<9xf32> to vector<9x1xf32>
    %cst_17 = arith.constant 3.200000e+01 : f32
    %26 = vector.broadcast %cst_17 : f32 to vector<9x1xf32>
    %27 = arith.divf %25, %26 : vector<9x1xf32>
    %28 = vector.broadcast %27 : vector<9x1xf32> to vector<9x32xf32>
    %29 = arith.subf %3, %28 : vector<9x32xf32>
    %30 = arith.mulf %29, %29 : vector<9x32xf32>
    %cst_18 = arith.constant dense<0.000000e+00> : vector<9xf32>
    %31 = vector.multi_reduction <add>, %30, %cst_18 [1] : vector<9x32xf32> to vector<9xf32>
    %32 = vector.shape_cast %31 : vector<9xf32> to vector<9x1xf32>
    %cst_19 = arith.constant 3.200000e+01 : f32
    %33 = vector.broadcast %cst_19 : f32 to vector<9x1xf32>
    %34 = arith.divf %32, %33 : vector<9x1xf32>
    %35 = vector.broadcast %27 : vector<9x1xf32> to vector<9x32xf32>
    %36 = arith.subf %3, %35 : vector<9x32xf32>
    %cst_20 = arith.constant 9.99999974E-6 : f32
    %37 = vector.broadcast %cst_20 : f32 to vector<9x1xf32>
    %38 = arith.addf %34, %37 : vector<9x1xf32>
    %39 = math.rsqrt %38 : vector<9x1xf32>
    %40 = vector.broadcast %39 : vector<9x1xf32> to vector<9x32xf32>
    %41 = arith.mulf %36, %40 : vector<9x32xf32>
    %42 = vector.broadcast %21 : vector<1x32xf32> to vector<9x32xf32>
    %43 = arith.mulf %41, %42 : vector<9x32xf32>
    %44 = vector.broadcast %23 : vector<1x32xf32> to vector<9x32xf32>
    %45 = arith.addf %43, %44 : vector<9x32xf32>
    %c0_21 = arith.constant 0 : index
    %c0_22 = arith.constant 0 : index
    %c0_23 = arith.constant 0 : index
    %46 = vector.load %arg6[%c0_21, %c0_22, %c0_23] : memref<2x32x96xf32, #tpu.memory_space<vmem>>, vector<1x32x96xf32>
    %47 = vector.shape_cast %46 : vector<1x32x96xf32> to vector<32x96xf32>
    %cst_24 = arith.constant dense<0.000000e+00> : vector<9x96xf32>
    %48 = tpu.matmul %45, %47, %cst_24 {dimension_numbers = #tpu.dot_dimension_numbers<[1], [0], [0], [1], [0, 0, 1, 1], [], []>} : vector<9x32xf32>, vector<32x96xf32>, vector<9x96xf32> -> vector<9x96xf32>
    %c0_25 = arith.constant 0 : index
    %c0_26 = arith.constant 0 : index
    %c0_27 = arith.constant 0 : index
    %49 = vector.load %arg7[%c0_25, %c0_26, %c0_27] : memref<2x1x96xf32, #tpu.memory_space<vmem>>, vector<1x1x96xf32>
    %50 = vector.shape_cast %49 : vector<1x1x96xf32> to vector<1x96xf32>
    %51 = vector.broadcast %50 : vector<1x96xf32> to vector<9x96xf32>
    %52 = arith.addf %48, %51 : vector<9x96xf32>
    %53 = vector.extract_strided_slice %52 {offsets = [0, 0], sizes = [9, 8], strides = [1, 1]} : vector<9x96xf32> to vector<9x8xf32>
    %54 = vector.extract_strided_slice %52 {offsets = [0, 8], sizes = [9, 8], strides = [1, 1]} : vector<9x96xf32> to vector<9x8xf32>
    %55 = vector.extract_strided_slice %52 {offsets = [0, 16], sizes = [9, 8], strides = [1, 1]} : vector<9x96xf32> to vector<9x8xf32>
    %56 = vector.extract_strided_slice %52 {offsets = [0, 24], sizes = [9, 8], strides = [1, 1]} : vector<9x96xf32> to vector<9x8xf32>
    %57 = vector.shape_cast %53 : vector<9x8xf32> to vector<1x9x8xf32>
    %58 = vector.shape_cast %54 : vector<9x8xf32> to vector<1x9x8xf32>
    %59 = vector.shape_cast %55 : vector<9x8xf32> to vector<1x9x8xf32>
    %60 = vector.shape_cast %56 : vector<9x8xf32> to vector<1x9x8xf32>
    %61 = tpu.concatenate %57, %58, %59, %60 in 0 : vector<1x9x8xf32>, vector<1x9x8xf32>, vector<1x9x8xf32>, vector<1x9x8xf32> -> vector<4x9x8xf32>
    %62 = vector.extract_strided_slice %52 {offsets = [0, 32], sizes = [9, 8], strides = [1, 1]} : vector<9x96xf32> to vector<9x8xf32>
    %63 = vector.extract_strided_slice %52 {offsets = [0, 40], sizes = [9, 8], strides = [1, 1]} : vector<9x96xf32> to vector<9x8xf32>
    %64 = vector.extract_strided_slice %52 {offsets = [0, 48], sizes = [9, 8], strides = [1, 1]} : vector<9x96xf32> to vector<9x8xf32>
    %65 = vector.extract_strided_slice %52 {offsets = [0, 56], sizes = [9, 8], strides = [1, 1]} : vector<9x96xf32> to vector<9x8xf32>
    %66 = vector.shape_cast %62 : vector<9x8xf32> to vector<1x9x8xf32>
    %67 = vector.shape_cast %63 : vector<9x8xf32> to vector<1x9x8xf32>
    %68 = vector.shape_cast %64 : vector<9x8xf32> to vector<1x9x8xf32>
    %69 = vector.shape_cast %65 : vector<9x8xf32> to vector<1x9x8xf32>
    %70 = tpu.concatenate %66, %67, %68, %69 in 0 : vector<1x9x8xf32>, vector<1x9x8xf32>, vector<1x9x8xf32>, vector<1x9x8xf32> -> vector<4x9x8xf32>
    %71 = vector.extract_strided_slice %52 {offsets = [0, 64], sizes = [9, 8], strides = [1, 1]} : vector<9x96xf32> to vector<9x8xf32>
    %72 = vector.extract_strided_slice %52 {offsets = [0, 72], sizes = [9, 8], strides = [1, 1]} : vector<9x96xf32> to vector<9x8xf32>
    %73 = vector.extract_strided_slice %52 {offsets = [0, 80], sizes = [9, 8], strides = [1, 1]} : vector<9x96xf32> to vector<9x8xf32>
    %74 = vector.extract_strided_slice %52 {offsets = [0, 88], sizes = [9, 8], strides = [1, 1]} : vector<9x96xf32> to vector<9x8xf32>
    %75 = vector.shape_cast %71 : vector<9x8xf32> to vector<1x9x8xf32>
    %76 = vector.shape_cast %72 : vector<9x8xf32> to vector<1x9x8xf32>
    %77 = vector.shape_cast %73 : vector<9x8xf32> to vector<1x9x8xf32>
    %78 = vector.shape_cast %74 : vector<9x8xf32> to vector<1x9x8xf32>
    %79 = tpu.concatenate %75, %76, %77, %78 in 0 : vector<1x9x8xf32>, vector<1x9x8xf32>, vector<1x9x8xf32>, vector<1x9x8xf32> -> vector<4x9x8xf32>
    "tpu.trace_start"() <{level = 10 : i32, message = "hqd,hkd->hqk"}> : () -> ()
    %cst_28 = arith.constant dense<0.000000e+00> : vector<4x9x9xf32>
    %80 = tpu.matmul %61, %70, %cst_28 {dimension_numbers = #tpu.dot_dimension_numbers<[2], [2], [1], [1], [0, 0, 0, 1, 1, 1], [0], [0]>} : vector<4x9x8xf32>, vector<4x9x8xf32>, vector<4x9x9xf32> -> vector<4x9x9xf32>
    "tpu.trace_stop"() : () -> ()
    %cst_29 = arith.constant 0.353553385 : f32
    %81 = vector.broadcast %cst_29 : f32 to vector<4x9x9xf32>
    %82 = arith.mulf %80, %81 : vector<4x9x9xf32>
    %83 = vector.shape_cast %19 : vector<9x9xf32> to vector<1x9x9xf32>
    %84 = vector.broadcast %83 : vector<1x9x9xf32> to vector<4x9x9xf32>
    %85 = arith.addf %82, %84 : vector<4x9x9xf32>
    %cst_30 = arith.constant dense<0xFF800000> : vector<4x9xf32>
    %86 = vector.multi_reduction <maximumf>, %85, %cst_30 [2] : vector<4x9x9xf32> to vector<4x9xf32>
    %87 = vector.shape_cast %86 : vector<4x9xf32> to vector<4x9x1xf32>
    %88 = vector.broadcast %87 : vector<4x9x1xf32> to vector<4x9x9xf32>
    %89 = arith.subf %85, %88 : vector<4x9x9xf32>
    %90 = math.exp %89 : vector<4x9x9xf32>
    %cst_31 = arith.constant dense<0.000000e+00> : vector<4x9xf32>
    %91 = vector.multi_reduction <add>, %90, %cst_31 [2] : vector<4x9x9xf32> to vector<4x9xf32>
    %92 = vector.shape_cast %91 : vector<4x9xf32> to vector<4x9x1xf32>
    %93 = tpu.reciprocal %92 {approx = true} : vector<4x9x1xf32> -> vector<4x9x1xf32>
    %94 = vector.broadcast %93 : vector<4x9x1xf32> to vector<4x9x9xf32>
    %95 = arith.mulf %90, %94 : vector<4x9x9xf32>
    "tpu.trace_start"() <{level = 10 : i32, message = "hqk,hkd->hqd"}> : () -> ()
    %cst_32 = arith.constant dense<0.000000e+00> : vector<4x9x8xf32>
    %96 = tpu.matmul %95, %79, %cst_32 {dimension_numbers = #tpu.dot_dimension_numbers<[2], [1], [1], [2], [0, 0, 0, 1, 1, 2], [0], [0]>} : vector<4x9x9xf32>, vector<4x9x8xf32>, vector<4x9x8xf32> -> vector<4x9x8xf32>
    "tpu.trace_stop"() : () -> ()
    %c0_33 = arith.constant 0 : index
    %c0_34 = arith.constant 0 : index
    %c0_35 = arith.constant 0 : index
    %c0_36 = arith.constant 0 : index
    %97 = vector.load %arg8[%c0_33, %c0_34, %c0_35, %c0_36] : memref<2x4x8x32xf32, #tpu.memory_space<vmem>>, vector<1x4x8x32xf32>
    %98 = vector.shape_cast %97 : vector<1x4x8x32xf32> to vector<4x8x32xf32>
    "tpu.trace_start"() <{level = 10 : i32, message = "hsd,hdf->hsf"}> : () -> ()
    %cst_37 = arith.constant dense<0.000000e+00> : vector<4x9x32xf32>
    %99 = tpu.matmul %96, %98, %cst_37 {dimension_numbers = #tpu.dot_dimension_numbers<[2], [1], [1], [2], [0, 0, 0, 1, 1, 2], [0], [0]>} : vector<4x9x8xf32>, vector<4x8x32xf32>, vector<4x9x32xf32> -> vector<4x9x32xf32>
    "tpu.trace_stop"() : () -> ()
    %cst_38 = arith.constant dense<0.000000e+00> : vector<9x32xf32>
    %100 = vector.multi_reduction <add>, %99, %cst_38 [0] : vector<4x9x32xf32> to vector<9x32xf32>
    %c0_39 = arith.constant 0 : index
    %c0_40 = arith.constant 0 : index
    %c0_41 = arith.constant 0 : index
    %101 = vector.load %arg9[%c0_39, %c0_40, %c0_41] : memref<2x1x32xf32, #tpu.memory_space<vmem>>, vector<1x1x32xf32>
    %102 = vector.shape_cast %101 : vector<1x1x32xf32> to vector<1x32xf32>
    %103 = vector.broadcast %102 : vector<1x32xf32> to vector<9x32xf32>
    %104 = arith.addf %100, %103 : vector<9x32xf32>
    %105 = arith.addf %3, %104 : vector<9x32xf32>
    %c0_42 = arith.constant 0 : index
    %c0_43 = arith.constant 0 : index
    %c0_44 = arith.constant 0 : index
    %106 = vector.load %arg10[%c0_42, %c0_43, %c0_44] : memref<2x1x32xf32, #tpu.memory_space<vmem>>, vector<1x1x32xf32>
    %107 = vector.shape_cast %106 : vector<1x1x32xf32> to vector<1x32xf32>
    %c0_45 = arith.constant 0 : index
    %c0_46 = arith.constant 0 : index
    %c0_47 = arith.constant 0 : index
    %108 = vector.load %arg11[%c0_45, %c0_46, %c0_47] : memref<2x1x32xf32, #tpu.memory_space<vmem>>, vector<1x1x32xf32>
    %109 = vector.shape_cast %108 : vector<1x1x32xf32> to vector<1x32xf32>
    %cst_48 = arith.constant dense<0.000000e+00> : vector<9xf32>
    %110 = vector.multi_reduction <add>, %105, %cst_48 [1] : vector<9x32xf32> to vector<9xf32>
    %111 = vector.shape_cast %110 : vector<9xf32> to vector<9x1xf32>
    %cst_49 = arith.constant 3.200000e+01 : f32
    %112 = vector.broadcast %cst_49 : f32 to vector<9x1xf32>
    %113 = arith.divf %111, %112 : vector<9x1xf32>
    %114 = vector.broadcast %113 : vector<9x1xf32> to vector<9x32xf32>
    %115 = arith.subf %105, %114 : vector<9x32xf32>
    %116 = arith.mulf %115, %115 : vector<9x32xf32>
    %cst_50 = arith.constant dense<0.000000e+00> : vector<9xf32>
    %117 = vector.multi_reduction <add>, %116, %cst_50 [1] : vector<9x32xf32> to vector<9xf32>
    %118 = vector.shape_cast %117 : vector<9xf32> to vector<9x1xf32>
    %cst_51 = arith.constant 3.200000e+01 : f32
    %119 = vector.broadcast %cst_51 : f32 to vector<9x1xf32>
    %120 = arith.divf %118, %119 : vector<9x1xf32>
    %121 = vector.broadcast %113 : vector<9x1xf32> to vector<9x32xf32>
    %122 = arith.subf %105, %121 : vector<9x32xf32>
    %cst_52 = arith.constant 9.99999974E-6 : f32
    %123 = vector.broadcast %cst_52 : f32 to vector<9x1xf32>
    %124 = arith.addf %120, %123 : vector<9x1xf32>
    %125 = math.rsqrt %124 : vector<9x1xf32>
    %126 = vector.broadcast %125 : vector<9x1xf32> to vector<9x32xf32>
    %127 = arith.mulf %122, %126 : vector<9x32xf32>
    %128 = vector.broadcast %107 : vector<1x32xf32> to vector<9x32xf32>
    %129 = arith.mulf %127, %128 : vector<9x32xf32>
    %130 = vector.broadcast %109 : vector<1x32xf32> to vector<9x32xf32>
    %131 = arith.addf %129, %130 : vector<9x32xf32>
    %c0_53 = arith.constant 0 : index
    %c0_54 = arith.constant 0 : index
    %c0_55 = arith.constant 0 : index
    %132 = vector.load %arg12[%c0_53, %c0_54, %c0_55] : memref<2x32x128xf32, #tpu.memory_space<vmem>>, vector<1x32x128xf32>
    %133 = vector.shape_cast %132 : vector<1x32x128xf32> to vector<32x128xf32>
    %cst_56 = arith.constant dense<0.000000e+00> : vector<9x128xf32>
    %134 = tpu.matmul %131, %133, %cst_56 {dimension_numbers = #tpu.dot_dimension_numbers<[1], [0], [0], [1], [0, 0, 1, 1], [], []>} : vector<9x32xf32>, vector<32x128xf32>, vector<9x128xf32> -> vector<9x128xf32>
    %c0_57 = arith.constant 0 : index
    %c0_58 = arith.constant 0 : index
    %c0_59 = arith.constant 0 : index
    %135 = vector.load %arg13[%c0_57, %c0_58, %c0_59] : memref<2x1x128xf32, #tpu.memory_space<vmem>>, vector<1x1x128xf32>
    %136 = vector.shape_cast %135 : vector<1x1x128xf32> to vector<1x128xf32>
    %137 = vector.broadcast %136 : vector<1x128xf32> to vector<9x128xf32>
    %138 = arith.addf %134, %137 : vector<9x128xf32>
    %cst_60 = arith.constant 5.000000e-01 : f32
    %139 = vector.broadcast %cst_60 : f32 to vector<9x128xf32>
    %140 = arith.mulf %139, %138 : vector<9x128xf32>
    %cst_61 = arith.constant 4.471500e-02 : f32
    %141 = vector.broadcast %cst_61 : f32 to vector<9x128xf32>
    %142 = arith.mulf %141, %138 : vector<9x128xf32>
    %143 = arith.mulf %142, %138 : vector<9x128xf32>
    %144 = arith.mulf %143, %138 : vector<9x128xf32>
    %145 = arith.addf %138, %144 : vector<9x128xf32>
    %cst_62 = arith.constant 0.797884583 : f32
    %146 = vector.broadcast %cst_62 : f32 to vector<9x128xf32>
    %147 = arith.mulf %146, %145 : vector<9x128xf32>
    %148 = math.tanh %147 : vector<9x128xf32>
    %cst_63 = arith.constant 1.000000e+00 : f32
    %149 = vector.broadcast %cst_63 : f32 to vector<9x128xf32>
    %150 = arith.addf %149, %148 : vector<9x128xf32>
    %151 = arith.mulf %140, %150 : vector<9x128xf32>
    %c0_64 = arith.constant 0 : index
    %c0_65 = arith.constant 0 : index
    %c0_66 = arith.constant 0 : index
    %152 = vector.load %arg14[%c0_64, %c0_65, %c0_66] : memref<2x128x32xf32, #tpu.memory_space<vmem>>, vector<1x128x32xf32>
    %153 = vector.shape_cast %152 : vector<1x128x32xf32> to vector<128x32xf32>
    %cst_67 = arith.constant dense<0.000000e+00> : vector<9x32xf32>
    %154 = tpu.matmul %151, %153, %cst_67 {dimension_numbers = #tpu.dot_dimension_numbers<[1], [0], [0], [1], [0, 0, 1, 1], [], []>} : vector<9x128xf32>, vector<128x32xf32>, vector<9x32xf32> -> vector<9x32xf32>
    %c0_68 = arith.constant 0 : index
    %c0_69 = arith.constant 0 : index
    %c0_70 = arith.constant 0 : index
    %155 = vector.load %arg15[%c0_68, %c0_69, %c0_70] : memref<2x1x32xf32, #tpu.memory_space<vmem>>, vector<1x1x32xf32>
    %156 = vector.shape_cast %155 : vector<1x1x32xf32> to vector<1x32xf32>
    %157 = vector.broadcast %156 : vector<1x32xf32> to vector<9x32xf32>
    %158 = arith.addf %154, %157 : vector<9x32xf32>
    %159 = arith.addf %105, %158 : vector<9x32xf32>
    %c1 = arith.constant 1 : index
    %c0_71 = arith.constant 0 : index
    %c0_72 = arith.constant 0 : index
    %160 = vector.load %arg4[%c1, %c0_71, %c0_72] : memref<2x1x32xf32, #tpu.memory_space<vmem>>, vector<1x1x32xf32>
    %161 = vector.shape_cast %160 : vector<1x1x32xf32> to vector<1x32xf32>
    %c1_73 = arith.constant 1 : index
    %c0_74 = arith.constant 0 : index
    %c0_75 = arith.constant 0 : index
    %162 = vector.load %arg5[%c1_73, %c0_74, %c0_75] : memref<2x1x32xf32, #tpu.memory_space<vmem>>, vector<1x1x32xf32>
    %163 = vector.shape_cast %162 : vector<1x1x32xf32> to vector<1x32xf32>
    %cst_76 = arith.constant dense<0.000000e+00> : vector<9xf32>
    %164 = vector.multi_reduction <add>, %159, %cst_76 [1] : vector<9x32xf32> to vector<9xf32>
    %165 = vector.shape_cast %164 : vector<9xf32> to vector<9x1xf32>
    %cst_77 = arith.constant 3.200000e+01 : f32
    %166 = vector.broadcast %cst_77 : f32 to vector<9x1xf32>
    %167 = arith.divf %165, %166 : vector<9x1xf32>
    %168 = vector.broadcast %167 : vector<9x1xf32> to vector<9x32xf32>
    %169 = arith.subf %159, %168 : vector<9x32xf32>
    %170 = arith.mulf %169, %169 : vector<9x32xf32>
    %cst_78 = arith.constant dense<0.000000e+00> : vector<9xf32>
    %171 = vector.multi_reduction <add>, %170, %cst_78 [1] : vector<9x32xf32> to vector<9xf32>
    %172 = vector.shape_cast %171 : vector<9xf32> to vector<9x1xf32>
    %cst_79 = arith.constant 3.200000e+01 : f32
    %173 = vector.broadcast %cst_79 : f32 to vector<9x1xf32>
    %174 = arith.divf %172, %173 : vector<9x1xf32>
    %175 = vector.broadcast %167 : vector<9x1xf32> to vector<9x32xf32>
    %176 = arith.subf %159, %175 : vector<9x32xf32>
    %cst_80 = arith.constant 9.99999974E-6 : f32
    %177 = vector.broadcast %cst_80 : f32 to vector<9x1xf32>
    %178 = arith.addf %174, %177 : vector<9x1xf32>
    %179 = math.rsqrt %178 : vector<9x1xf32>
    %180 = vector.broadcast %179 : vector<9x1xf32> to vector<9x32xf32>
    %181 = arith.mulf %176, %180 : vector<9x32xf32>
    %182 = vector.broadcast %161 : vector<1x32xf32> to vector<9x32xf32>
    %183 = arith.mulf %181, %182 : vector<9x32xf32>
    %184 = vector.broadcast %163 : vector<1x32xf32> to vector<9x32xf32>
    %185 = arith.addf %183, %184 : vector<9x32xf32>
    %c1_81 = arith.constant 1 : index
    %c0_82 = arith.constant 0 : index
    %c0_83 = arith.constant 0 : index
    %186 = vector.load %arg6[%c1_81, %c0_82, %c0_83] : memref<2x32x96xf32, #tpu.memory_space<vmem>>, vector<1x32x96xf32>
    %187 = vector.shape_cast %186 : vector<1x32x96xf32> to vector<32x96xf32>
    %cst_84 = arith.constant dense<0.000000e+00> : vector<9x96xf32>
    %188 = tpu.matmul %185, %187, %cst_84 {dimension_numbers = #tpu.dot_dimension_numbers<[1], [0], [0], [1], [0, 0, 1, 1], [], []>} : vector<9x32xf32>, vector<32x96xf32>, vector<9x96xf32> -> vector<9x96xf32>
    %c1_85 = arith.constant 1 : index
    %c0_86 = arith.constant 0 : index
    %c0_87 = arith.constant 0 : index
    %189 = vector.load %arg7[%c1_85, %c0_86, %c0_87] : memref<2x1x96xf32, #tpu.memory_space<vmem>>, vector<1x1x96xf32>
    %190 = vector.shape_cast %189 : vector<1x1x96xf32> to vector<1x96xf32>
    %191 = vector.broadcast %190 : vector<1x96xf32> to vector<9x96xf32>
    %192 = arith.addf %188, %191 : vector<9x96xf32>
    %193 = vector.extract_strided_slice %192 {offsets = [0, 0], sizes = [9, 8], strides = [1, 1]} : vector<9x96xf32> to vector<9x8xf32>
    %194 = vector.extract_strided_slice %192 {offsets = [0, 8], sizes = [9, 8], strides = [1, 1]} : vector<9x96xf32> to vector<9x8xf32>
    %195 = vector.extract_strided_slice %192 {offsets = [0, 16], sizes = [9, 8], strides = [1, 1]} : vector<9x96xf32> to vector<9x8xf32>
    %196 = vector.extract_strided_slice %192 {offsets = [0, 24], sizes = [9, 8], strides = [1, 1]} : vector<9x96xf32> to vector<9x8xf32>
    %197 = vector.shape_cast %193 : vector<9x8xf32> to vector<1x9x8xf32>
    %198 = vector.shape_cast %194 : vector<9x8xf32> to vector<1x9x8xf32>
    %199 = vector.shape_cast %195 : vector<9x8xf32> to vector<1x9x8xf32>
    %200 = vector.shape_cast %196 : vector<9x8xf32> to vector<1x9x8xf32>
    %201 = tpu.concatenate %197, %198, %199, %200 in 0 : vector<1x9x8xf32>, vector<1x9x8xf32>, vector<1x9x8xf32>, vector<1x9x8xf32> -> vector<4x9x8xf32>
    %202 = vector.extract_strided_slice %192 {offsets = [0, 32], sizes = [9, 8], strides = [1, 1]} : vector<9x96xf32> to vector<9x8xf32>
    %203 = vector.extract_strided_slice %192 {offsets = [0, 40], sizes = [9, 8], strides = [1, 1]} : vector<9x96xf32> to vector<9x8xf32>
    %204 = vector.extract_strided_slice %192 {offsets = [0, 48], sizes = [9, 8], strides = [1, 1]} : vector<9x96xf32> to vector<9x8xf32>
    %205 = vector.extract_strided_slice %192 {offsets = [0, 56], sizes = [9, 8], strides = [1, 1]} : vector<9x96xf32> to vector<9x8xf32>
    %206 = vector.shape_cast %202 : vector<9x8xf32> to vector<1x9x8xf32>
    %207 = vector.shape_cast %203 : vector<9x8xf32> to vector<1x9x8xf32>
    %208 = vector.shape_cast %204 : vector<9x8xf32> to vector<1x9x8xf32>
    %209 = vector.shape_cast %205 : vector<9x8xf32> to vector<1x9x8xf32>
    %210 = tpu.concatenate %206, %207, %208, %209 in 0 : vector<1x9x8xf32>, vector<1x9x8xf32>, vector<1x9x8xf32>, vector<1x9x8xf32> -> vector<4x9x8xf32>
    %211 = vector.extract_strided_slice %192 {offsets = [0, 64], sizes = [9, 8], strides = [1, 1]} : vector<9x96xf32> to vector<9x8xf32>
    %212 = vector.extract_strided_slice %192 {offsets = [0, 72], sizes = [9, 8], strides = [1, 1]} : vector<9x96xf32> to vector<9x8xf32>
    %213 = vector.extract_strided_slice %192 {offsets = [0, 80], sizes = [9, 8], strides = [1, 1]} : vector<9x96xf32> to vector<9x8xf32>
    %214 = vector.extract_strided_slice %192 {offsets = [0, 88], sizes = [9, 8], strides = [1, 1]} : vector<9x96xf32> to vector<9x8xf32>
    %215 = vector.shape_cast %211 : vector<9x8xf32> to vector<1x9x8xf32>
    %216 = vector.shape_cast %212 : vector<9x8xf32> to vector<1x9x8xf32>
    %217 = vector.shape_cast %213 : vector<9x8xf32> to vector<1x9x8xf32>
    %218 = vector.shape_cast %214 : vector<9x8xf32> to vector<1x9x8xf32>
    %219 = tpu.concatenate %215, %216, %217, %218 in 0 : vector<1x9x8xf32>, vector<1x9x8xf32>, vector<1x9x8xf32>, vector<1x9x8xf32> -> vector<4x9x8xf32>
    "tpu.trace_start"() <{level = 10 : i32, message = "hqd,hkd->hqk"}> : () -> ()
    %cst_88 = arith.constant dense<0.000000e+00> : vector<4x9x9xf32>
    %220 = tpu.matmul %201, %210, %cst_88 {dimension_numbers = #tpu.dot_dimension_numbers<[2], [2], [1], [1], [0, 0, 0, 1, 1, 1], [0], [0]>} : vector<4x9x8xf32>, vector<4x9x8xf32>, vector<4x9x9xf32> -> vector<4x9x9xf32>
    "tpu.trace_stop"() : () -> ()
    %cst_89 = arith.constant 0.353553385 : f32
    %221 = vector.broadcast %cst_89 : f32 to vector<4x9x9xf32>
    %222 = arith.mulf %220, %221 : vector<4x9x9xf32>
    %223 = vector.shape_cast %19 : vector<9x9xf32> to vector<1x9x9xf32>
    %224 = vector.broadcast %223 : vector<1x9x9xf32> to vector<4x9x9xf32>
    %225 = arith.addf %222, %224 : vector<4x9x9xf32>
    %cst_90 = arith.constant dense<0xFF800000> : vector<4x9xf32>
    %226 = vector.multi_reduction <maximumf>, %225, %cst_90 [2] : vector<4x9x9xf32> to vector<4x9xf32>
    %227 = vector.shape_cast %226 : vector<4x9xf32> to vector<4x9x1xf32>
    %228 = vector.broadcast %227 : vector<4x9x1xf32> to vector<4x9x9xf32>
    %229 = arith.subf %225, %228 : vector<4x9x9xf32>
    %230 = math.exp %229 : vector<4x9x9xf32>
    %cst_91 = arith.constant dense<0.000000e+00> : vector<4x9xf32>
    %231 = vector.multi_reduction <add>, %230, %cst_91 [2] : vector<4x9x9xf32> to vector<4x9xf32>
    %232 = vector.shape_cast %231 : vector<4x9xf32> to vector<4x9x1xf32>
    %233 = tpu.reciprocal %232 {approx = true} : vector<4x9x1xf32> -> vector<4x9x1xf32>
    %234 = vector.broadcast %233 : vector<4x9x1xf32> to vector<4x9x9xf32>
    %235 = arith.mulf %230, %234 : vector<4x9x9xf32>
    "tpu.trace_start"() <{level = 10 : i32, message = "hqk,hkd->hqd"}> : () -> ()
    %cst_92 = arith.constant dense<0.000000e+00> : vector<4x9x8xf32>
    %236 = tpu.matmul %235, %219, %cst_92 {dimension_numbers = #tpu.dot_dimension_numbers<[2], [1], [1], [2], [0, 0, 0, 1, 1, 2], [0], [0]>} : vector<4x9x9xf32>, vector<4x9x8xf32>, vector<4x9x8xf32> -> vector<4x9x8xf32>
    "tpu.trace_stop"() : () -> ()
    %c1_93 = arith.constant 1 : index
    %c0_94 = arith.constant 0 : index
    %c0_95 = arith.constant 0 : index
    %c0_96 = arith.constant 0 : index
    %237 = vector.load %arg8[%c1_93, %c0_94, %c0_95, %c0_96] : memref<2x4x8x32xf32, #tpu.memory_space<vmem>>, vector<1x4x8x32xf32>
    %238 = vector.shape_cast %237 : vector<1x4x8x32xf32> to vector<4x8x32xf32>
    "tpu.trace_start"() <{level = 10 : i32, message = "hsd,hdf->hsf"}> : () -> ()
    %cst_97 = arith.constant dense<0.000000e+00> : vector<4x9x32xf32>
    %239 = tpu.matmul %236, %238, %cst_97 {dimension_numbers = #tpu.dot_dimension_numbers<[2], [1], [1], [2], [0, 0, 0, 1, 1, 2], [0], [0]>} : vector<4x9x8xf32>, vector<4x8x32xf32>, vector<4x9x32xf32> -> vector<4x9x32xf32>
    "tpu.trace_stop"() : () -> ()
    %cst_98 = arith.constant dense<0.000000e+00> : vector<9x32xf32>
    %240 = vector.multi_reduction <add>, %239, %cst_98 [0] : vector<4x9x32xf32> to vector<9x32xf32>
    %c1_99 = arith.constant 1 : index
    %c0_100 = arith.constant 0 : index
    %c0_101 = arith.constant 0 : index
    %241 = vector.load %arg9[%c1_99, %c0_100, %c0_101] : memref<2x1x32xf32, #tpu.memory_space<vmem>>, vector<1x1x32xf32>
    %242 = vector.shape_cast %241 : vector<1x1x32xf32> to vector<1x32xf32>
    %243 = vector.broadcast %242 : vector<1x32xf32> to vector<9x32xf32>
    %244 = arith.addf %240, %243 : vector<9x32xf32>
    %245 = arith.addf %159, %244 : vector<9x32xf32>
    %c1_102 = arith.constant 1 : index
    %c0_103 = arith.constant 0 : index
    %c0_104 = arith.constant 0 : index
    %246 = vector.load %arg10[%c1_102, %c0_103, %c0_104] : memref<2x1x32xf32, #tpu.memory_space<vmem>>, vector<1x1x32xf32>
    %247 = vector.shape_cast %246 : vector<1x1x32xf32> to vector<1x32xf32>
    %c1_105 = arith.constant 1 : index
    %c0_106 = arith.constant 0 : index
    %c0_107 = arith.constant 0 : index
    %248 = vector.load %arg11[%c1_105, %c0_106, %c0_107] : memref<2x1x32xf32, #tpu.memory_space<vmem>>, vector<1x1x32xf32>
    %249 = vector.shape_cast %248 : vector<1x1x32xf32> to vector<1x32xf32>
    %cst_108 = arith.constant dense<0.000000e+00> : vector<9xf32>
    %250 = vector.multi_reduction <add>, %245, %cst_108 [1] : vector<9x32xf32> to vector<9xf32>
    %251 = vector.shape_cast %250 : vector<9xf32> to vector<9x1xf32>
    %cst_109 = arith.constant 3.200000e+01 : f32
    %252 = vector.broadcast %cst_109 : f32 to vector<9x1xf32>
    %253 = arith.divf %251, %252 : vector<9x1xf32>
    %254 = vector.broadcast %253 : vector<9x1xf32> to vector<9x32xf32>
    %255 = arith.subf %245, %254 : vector<9x32xf32>
    %256 = arith.mulf %255, %255 : vector<9x32xf32>
    %cst_110 = arith.constant dense<0.000000e+00> : vector<9xf32>
    %257 = vector.multi_reduction <add>, %256, %cst_110 [1] : vector<9x32xf32> to vector<9xf32>
    %258 = vector.shape_cast %257 : vector<9xf32> to vector<9x1xf32>
    %cst_111 = arith.constant 3.200000e+01 : f32
    %259 = vector.broadcast %cst_111 : f32 to vector<9x1xf32>
    %260 = arith.divf %258, %259 : vector<9x1xf32>
    %261 = vector.broadcast %253 : vector<9x1xf32> to vector<9x32xf32>
    %262 = arith.subf %245, %261 : vector<9x32xf32>
    %cst_112 = arith.constant 9.99999974E-6 : f32
    %263 = vector.broadcast %cst_112 : f32 to vector<9x1xf32>
    %264 = arith.addf %260, %263 : vector<9x1xf32>
    %265 = math.rsqrt %264 : vector<9x1xf32>
    %266 = vector.broadcast %265 : vector<9x1xf32> to vector<9x32xf32>
    %267 = arith.mulf %262, %266 : vector<9x32xf32>
    %268 = vector.broadcast %247 : vector<1x32xf32> to vector<9x32xf32>
    %269 = arith.mulf %267, %268 : vector<9x32xf32>
    %270 = vector.broadcast %249 : vector<1x32xf32> to vector<9x32xf32>
    %271 = arith.addf %269, %270 : vector<9x32xf32>
    %c1_113 = arith.constant 1 : index
    %c0_114 = arith.constant 0 : index
    %c0_115 = arith.constant 0 : index
    %272 = vector.load %arg12[%c1_113, %c0_114, %c0_115] : memref<2x32x128xf32, #tpu.memory_space<vmem>>, vector<1x32x128xf32>
    %273 = vector.shape_cast %272 : vector<1x32x128xf32> to vector<32x128xf32>
    %cst_116 = arith.constant dense<0.000000e+00> : vector<9x128xf32>
    %274 = tpu.matmul %271, %273, %cst_116 {dimension_numbers = #tpu.dot_dimension_numbers<[1], [0], [0], [1], [0, 0, 1, 1], [], []>} : vector<9x32xf32>, vector<32x128xf32>, vector<9x128xf32> -> vector<9x128xf32>
    %c1_117 = arith.constant 1 : index
    %c0_118 = arith.constant 0 : index
    %c0_119 = arith.constant 0 : index
    %275 = vector.load %arg13[%c1_117, %c0_118, %c0_119] : memref<2x1x128xf32, #tpu.memory_space<vmem>>, vector<1x1x128xf32>
    %276 = vector.shape_cast %275 : vector<1x1x128xf32> to vector<1x128xf32>
    %277 = vector.broadcast %276 : vector<1x128xf32> to vector<9x128xf32>
    %278 = arith.addf %274, %277 : vector<9x128xf32>
    %cst_120 = arith.constant 5.000000e-01 : f32
    %279 = vector.broadcast %cst_120 : f32 to vector<9x128xf32>
    %280 = arith.mulf %279, %278 : vector<9x128xf32>
    %cst_121 = arith.constant 4.471500e-02 : f32
    %281 = vector.broadcast %cst_121 : f32 to vector<9x128xf32>
    %282 = arith.mulf %281, %278 : vector<9x128xf32>
    %283 = arith.mulf %282, %278 : vector<9x128xf32>
    %284 = arith.mulf %283, %278 : vector<9x128xf32>
    %285 = arith.addf %278, %284 : vector<9x128xf32>
    %cst_122 = arith.constant 0.797884583 : f32
    %286 = vector.broadcast %cst_122 : f32 to vector<9x128xf32>
    %287 = arith.mulf %286, %285 : vector<9x128xf32>
    %288 = math.tanh %287 : vector<9x128xf32>
    %cst_123 = arith.constant 1.000000e+00 : f32
    %289 = vector.broadcast %cst_123 : f32 to vector<9x128xf32>
    %290 = arith.addf %289, %288 : vector<9x128xf32>
    %291 = arith.mulf %280, %290 : vector<9x128xf32>
    %c1_124 = arith.constant 1 : index
    %c0_125 = arith.constant 0 : index
    %c0_126 = arith.constant 0 : index
    %292 = vector.load %arg14[%c1_124, %c0_125, %c0_126] : memref<2x128x32xf32, #tpu.memory_space<vmem>>, vector<1x128x32xf32>
    %293 = vector.shape_cast %292 : vector<1x128x32xf32> to vector<128x32xf32>
    %cst_127 = arith.constant dense<0.000000e+00> : vector<9x32xf32>
    %294 = tpu.matmul %291, %293, %cst_127 {dimension_numbers = #tpu.dot_dimension_numbers<[1], [0], [0], [1], [0, 0, 1, 1], [], []>} : vector<9x128xf32>, vector<128x32xf32>, vector<9x32xf32> -> vector<9x32xf32>
    %c1_128 = arith.constant 1 : index
    %c0_129 = arith.constant 0 : index
    %c0_130 = arith.constant 0 : index
    %295 = vector.load %arg15[%c1_128, %c0_129, %c0_130] : memref<2x1x32xf32, #tpu.memory_space<vmem>>, vector<1x1x32xf32>
    %296 = vector.shape_cast %295 : vector<1x1x32xf32> to vector<1x32xf32>
    %297 = vector.broadcast %296 : vector<1x32xf32> to vector<9x32xf32>
    %298 = arith.addf %294, %297 : vector<9x32xf32>
    %299 = arith.addf %245, %298 : vector<9x32xf32>
    %300 = vector.extract_strided_slice %299 {offsets = [0, 0], sizes = [8, 32], strides = [1, 1]} : vector<9x32xf32> to vector<8x32xf32>
    %c0_131 = arith.constant 0 : index
    %c0_132 = arith.constant 0 : index
    %c0_133 = arith.constant 0 : index
    %301 = vector.load %arg19[%c0_131, %c0_132, %c0_133] : memref<1x8x32xf32, #tpu.memory_space<vmem>>, vector<1x8x32xf32>
    %302 = vector.shape_cast %301 : vector<1x8x32xf32> to vector<8x32xf32>
    %303 = vector.shape_cast %300 : vector<8x32xf32> to vector<1x8x32xf32>
    tpu.vector_store %arg19[%c0_131, %c0_132, %c0_133], %303 {strides = array<i32>} : memref<1x8x32xf32, #tpu.memory_space<vmem>>, vector<1x8x32xf32>,
    %304 = vector.extract_strided_slice %299 {offsets = [8, 0], sizes = [1, 32], strides = [1, 1]} : vector<9x32xf32> to vector<1x32xf32>
    %c0_134 = arith.constant 0 : index
    %c0_135 = arith.constant 0 : index
    %305 = vector.load %arg16[%c0_134, %c0_135] : memref<1x32xf32, #tpu.memory_space<vmem>>, vector<1x32xf32>
    %c0_136 = arith.constant 0 : index
    %c0_137 = arith.constant 0 : index
    %306 = vector.load %arg17[%c0_136, %c0_137] : memref<1x32xf32, #tpu.memory_space<vmem>>, vector<1x32xf32>
    %cst_138 = arith.constant dense<0.000000e+00> : vector<1xf32>
    %307 = vector.multi_reduction <add>, %304, %cst_138 [1] : vector<1x32xf32> to vector<1xf32>
    %308 = vector.shape_cast %307 : vector<1xf32> to vector<1x1xf32>
    %cst_139 = arith.constant 3.200000e+01 : f32
    %309 = vector.broadcast %cst_139 : f32 to vector<1x1xf32>
    %310 = arith.divf %308, %309 : vector<1x1xf32>
    %311 = vector.broadcast %310 : vector<1x1xf32> to vector<1x32xf32>
    %312 = arith.subf %304, %311 : vector<1x32xf32>
    %313 = arith.mulf %312, %312 : vector<1x32xf32>
    %cst_140 = arith.constant dense<0.000000e+00> : vector<1xf32>
    %314 = vector.multi_reduction <add>, %313, %cst_140 [1] : vector<1x32xf32> to vector<1xf32>
    %315 = vector.shape_cast %314 : vector<1xf32> to vector<1x1xf32>
    %cst_141 = arith.constant 3.200000e+01 : f32
    %316 = vector.broadcast %cst_141 : f32 to vector<1x1xf32>
    %317 = arith.divf %315, %316 : vector<1x1xf32>
    %318 = vector.broadcast %310 : vector<1x1xf32> to vector<1x32xf32>
    %319 = arith.subf %304, %318 : vector<1x32xf32>
    %cst_142 = arith.constant 9.99999974E-6 : f32
    %320 = vector.broadcast %cst_142 : f32 to vector<1x1xf32>
    %321 = arith.addf %317, %320 : vector<1x1xf32>
    %322 = math.rsqrt %321 : vector<1x1xf32>
    %323 = vector.broadcast %322 : vector<1x1xf32> to vector<1x32xf32>
    %324 = arith.mulf %319, %323 : vector<1x32xf32>
    %325 = arith.mulf %324, %305 : vector<1x32xf32>
    %326 = arith.addf %325, %306 : vector<1x32xf32>
    %c0_143 = arith.constant 0 : index
    %c0_144 = arith.constant 0 : index
    %327 = vector.load %arg18[%c0_143, %c0_144] : memref<32x32xf32, #tpu.memory_space<vmem>>, vector<32x32xf32>
    %cst_145 = arith.constant dense<0.000000e+00> : vector<1x32xf32>
    %328 = tpu.matmul %326, %327, %cst_145 {dimension_numbers = #tpu.dot_dimension_numbers<[1], [0], [0], [1], [0, 0, 1, 1], [], []>} : vector<1x32xf32>, vector<32x32xf32>, vector<1x32xf32> -> vector<1x32xf32>
    %329 = arith.mulf %328, %328 : vector<1x32xf32>
    %cst_146 = arith.constant dense<0.000000e+00> : vector<1xf32>
    %330 = vector.multi_reduction <add>, %329, %cst_146 [1] : vector<1x32xf32> to vector<1xf32>
    %331 = vector.shape_cast %330 : vector<1xf32> to vector<1x1xf32>
    %cst_147 = arith.constant 1.000000e-24 : f32
    %332 = vector.broadcast %cst_147 : f32 to vector<1x1xf32>
    %333 = arith.maximumf %331, %332 : vector<1x1xf32>
    %334 = math.rsqrt %333 : vector<1x1xf32>
    %335 = vector.broadcast %334 : vector<1x1xf32> to vector<1x32xf32>
    %336 = arith.mulf %328, %335 : vector<1x32xf32>
    %c0_148 = arith.constant 0 : index
    %c0_149 = arith.constant 0 : index
    %c0_150 = arith.constant 0 : index
    %337 = vector.load %arg20[%c0_148, %c0_149, %c0_150] : memref<1x1x32xf32, #tpu.memory_space<vmem>>, vector<1x1x32xf32>
    %338 = vector.shape_cast %337 : vector<1x1x32xf32> to vector<1x32xf32>
    %339 = vector.shape_cast %336 : vector<1x32xf32> to vector<1x1x32xf32>
    tpu.vector_store %arg20[%c0_148, %c0_149, %c0_150], %339 {strides = array<i32>} : memref<1x1x32xf32, #tpu.memory_space<vmem>>, vector<1x1x32xf32>,
    return
  }
  func.func @transform_0(%arg0: i32) -> (i32, i32, i32) {
    %c0_i32 = arith.constant 0 : i32
    %c0_i32_0 = arith.constant 0 : i32
    %c0_i32_1 = arith.constant 0 : i32
    return %arg0, %c0_i32, %c0_i32_0 : i32, i32, i32
  }
  func.func @transform_1(%arg0: i32) -> (i32, i32, i32) {
    %c0_i32 = arith.constant 0 : i32
    %c0_i32_0 = arith.constant 0 : i32
    %c0_i32_1 = arith.constant 0 : i32
    return %arg0, %c0_i32, %c0_i32_0 : i32, i32, i32
  }
  func.func @transform_2(%arg0: i32) -> (i32, i32) {
    %c0_i32 = arith.constant 0 : i32
    %c0_i32_0 = arith.constant 0 : i32
    %c0_i32_1 = arith.constant 0 : i32
    return %c0_i32, %c0_i32_0 : i32, i32
  }
  func.func @transform_3(%arg0: i32) -> (i32, i32, i32) {
    %c0_i32 = arith.constant 0 : i32
    %c0_i32_0 = arith.constant 0 : i32
    %c0_i32_1 = arith.constant 0 : i32
    %c0_i32_2 = arith.constant 0 : i32
    return %c0_i32, %c0_i32_0, %c0_i32_1 : i32, i32, i32
  }
  func.func @transform_4(%arg0: i32) -> (i32, i32, i32) {
    %c0_i32 = arith.constant 0 : i32
    %c0_i32_0 = arith.constant 0 : i32
    %c0_i32_1 = arith.constant 0 : i32
    %c0_i32_2 = arith.constant 0 : i32
    return %c0_i32, %c0_i32_0, %c0_i32_1 : i32, i32, i32
  }
  func.func @transform_5(%arg0: i32) -> (i32, i32, i32) {
    %c0_i32 = arith.constant 0 : i32
    %c0_i32_0 = arith.constant 0 : i32
    %c0_i32_1 = arith.constant 0 : i32
    %c0_i32_2 = arith.constant 0 : i32
    return %c0_i32, %c0_i32_0, %c0_i32_1 : i32, i32, i32
  }
  func.func @transform_6(%arg0: i32) -> (i32, i32, i32) {
    %c0_i32 = arith.constant 0 : i32
    %c0_i32_0 = arith.constant 0 : i32
    %c0_i32_1 = arith.constant 0 : i32
    %c0_i32_2 = arith.constant 0 : i32
    return %c0_i32, %c0_i32_0, %c0_i32_1 : i32, i32, i32
  }
  func.func @transform_7(%arg0: i32) -> (i32, i32, i32, i32) {
    %c0_i32 = arith.constant 0 : i32
    %c0_i32_0 = arith.constant 0 : i32
    %c0_i32_1 = arith.constant 0 : i32
    %c0_i32_2 = arith.constant 0 : i32
    %c0_i32_3 = arith.constant 0 : i32
    return %c0_i32, %c0_i32_0, %c0_i32_1, %c0_i32_2 : i32, i32, i32, i32
  }
  func.func @transform_8(%arg0: i32) -> (i32, i32, i32) {
    %c0_i32 = arith.constant 0 : i32
    %c0_i32_0 = arith.constant 0 : i32
    %c0_i32_1 = arith.constant 0 : i32
    %c0_i32_2 = arith.constant 0 : i32
    return %c0_i32, %c0_i32_0, %c0_i32_1 : i32, i32, i32
  }
  func.func @transform_9(%arg0: i32) -> (i32, i32, i32) {
    %c0_i32 = arith.constant 0 : i32
    %c0_i32_0 = arith.constant 0 : i32
    %c0_i32_1 = arith.constant 0 : i32
    %c0_i32_2 = arith.constant 0 : i32
    return %c0_i32, %c0_i32_0, %c0_i32_1 : i32, i32, i32
  }
  func.func @transform_10(%arg0: i32) -> (i32, i32, i32) {
    %c0_i32 = arith.constant 0 : i32
    %c0_i32_0 = arith.constant 0 : i32
    %c0_i32_1 = arith.constant 0 : i32
    %c0_i32_2 = arith.constant 0 : i32
    return %c0_i32, %c0_i32_0, %c0_i32_1 : i32, i32, i32
  }
  func.func @transform_11(%arg0: i32) -> (i32, i32, i32) {
    %c0_i32 = arith.constant 0 : i32
    %c0_i32_0 = arith.constant 0 : i32
    %c0_i32_1 = arith.constant 0 : i32
    %c0_i32_2 = arith.constant 0 : i32
    return %c0_i32, %c0_i32_0, %c0_i32_1 : i32, i32, i32
  }
  func.func @transform_12(%arg0: i32) -> (i32, i32, i32) {
    %c0_i32 = arith.constant 0 : i32
    %c0_i32_0 = arith.constant 0 : i32
    %c0_i32_1 = arith.constant 0 : i32
    %c0_i32_2 = arith.constant 0 : i32
    return %c0_i32, %c0_i32_0, %c0_i32_1 : i32, i32, i32
  }
  func.func @transform_13(%arg0: i32) -> (i32, i32, i32) {
    %c0_i32 = arith.constant 0 : i32
    %c0_i32_0 = arith.constant 0 : i32
    %c0_i32_1 = arith.constant 0 : i32
    %c0_i32_2 = arith.constant 0 : i32
    return %c0_i32, %c0_i32_0, %c0_i32_1 : i32, i32, i32
  }
  func.func @transform_14(%arg0: i32) -> (i32, i32, i32) {
    %c0_i32 = arith.constant 0 : i32
    %c0_i32_0 = arith.constant 0 : i32
    %c0_i32_1 = arith.constant 0 : i32
    %c0_i32_2 = arith.constant 0 : i32
    return %c0_i32, %c0_i32_0, %c0_i32_1 : i32, i32, i32
  }
  func.func @transform_15(%arg0: i32) -> (i32, i32) {
    %c0_i32 = arith.constant 0 : i32
    %c0_i32_0 = arith.constant 0 : i32
    %c0_i32_1 = arith.constant 0 : i32
    return %c0_i32, %c0_i32_0 : i32, i32
  }
  func.func @transform_16(%arg0: i32) -> (i32, i32) {
    %c0_i32 = arith.constant 0 : i32
    %c0_i32_0 = arith.constant 0 : i32
    %c0_i32_1 = arith.constant 0 : i32
    return %c0_i32, %c0_i32_0 : i32, i32
  }
  func.func @transform_17(%arg0: i32) -> (i32, i32) {
    %c0_i32 = arith.constant 0 : i32
    %c0_i32_0 = arith.constant 0 : i32
    %c0_i32_1 = arith.constant 0 : i32
    return %c0_i32, %c0_i32_0 : i32, i32
  }
  func.func @transform_18(%arg0: i32) -> (i32, i32, i32) {
    %c0_i32 = arith.constant 0 : i32
    %c0_i32_0 = arith.constant 0 : i32
    %c0_i32_1 = arith.constant 0 : i32
    return %arg0, %c0_i32, %c0_i32_0 : i32, i32, i32
  }
  func.func @transform_19(%arg0: i32) -> (i32, i32, i32) {
    %c0_i32 = arith.constant 0 : i32
    %c0_i32_0 = arith.constant 0 : i32
    %c0_i32_1 = arith.constant 0 : i32
    return %arg0, %c0_i32, %c0_i32_0 : i32, i32, i32
  }
}

</mosaic_0001>

<llo_original>
// kernel: coca_text_encoder.1
$region0: #{coca_text_encoder.1}
  #allocation0 [shape = 'u32[]', space=smem, size = 0x4, offset = 0x4, fixed_abs, tag = 'smem constant byte address 0x4 - core index']
  #allocation1 [shape = 'u32[72,128]{1,0:T(1,128)}', space=vmem, size = 0x9000, scoped, tag = 'internal scratch']
  %s0 = inlined_call_operand.vmem [shape: f32[2,9,32], index: 0, kind: input, shape index: {}]
  %s1 = inlined_call_operand.vmem [shape: f32[2,1,9], index: 1, kind: input, shape index: {}]
  %s2 = inlined_call_operand.vmem [shape: f32[9,32], index: 2, kind: input, shape index: {}]
  %s3 = inlined_call_operand.vmem [shape: f32[2,1,32], index: 3, kind: input, shape index: {}]
  %s4 = inlined_call_operand.vmem [shape: f32[2,1,32], index: 4, kind: input, shape index: {}]
  %s5 = inlined_call_operand.vmem [shape: f32[2,32,96], index: 5, kind: input, shape index: {}]
  %s6 = inlined_call_operand.vmem [shape: f32[2,1,96], index: 6, kind: input, shape index: {}]
  %s7 = inlined_call_operand.vmem [shape: f32[2,4,8,32], index: 7, kind: input, shape index: {}]
  %s8 = inlined_call_operand.vmem [shape: f32[2,1,32], index: 8, kind: input, shape index: {}]
  %s9 = inlined_call_operand.vmem [shape: f32[2,1,32], index: 9, kind: input, shape index: {}]
  %s10 = inlined_call_operand.vmem [shape: f32[2,1,32], index: 10, kind: input, shape index: {}]
  %s11 = inlined_call_operand.vmem [shape: f32[2,32,128], index: 11, kind: input, shape index: {}]
  %s12 = inlined_call_operand.vmem [shape: f32[2,1,128], index: 12, kind: input, shape index: {}]
  %s13 = inlined_call_operand.vmem [shape: f32[2,128,32], index: 13, kind: input, shape index: {}]
  %s14 = inlined_call_operand.vmem [shape: f32[2,1,32], index: 14, kind: input, shape index: {}]
  %s15 = inlined_call_operand.vmem [shape: f32[1,32], index: 15, kind: input, shape index: {}]
  %s16 = inlined_call_operand.vmem [shape: f32[1,32], index: 16, kind: input, shape index: {}]
  %s17 = inlined_call_operand.vmem [shape: f32[32,32], index: 17, kind: input, shape index: {}]
  %s18 = inlined_call_operand.hbm [shape: f32[2,8,32], index: 18, kind: output, shape index: {0}]
  %s19 = inlined_call_operand.hbm [shape: f32[2,1,32], index: 19, kind: output, shape index: {1}]
  %20 = xla_tuple %s18, %s19
  %s21 = sld [smem:[#allocation0]]
  $region113: #{coca_text_encoder.1} parent=0
    _
  %s23 = ssub.s32 1, %s21
  %s24 = scalar_select 0, %s23, %s21
  $region1: #{coca_text_encoder.1} parent=0
    #allocation2 [shape = 'u8[8192]{0}', space=vmem, size = 0x2000, scoped, tag = 'output window, operand 0']
    #allocation3 [shape = 's32[2]{0}', space=sflag, size = 0x8, scoped, tag = 'scoped memory for coca_text_encoder.1']
    #allocation4 [shape = 'u8[1024]{0}', space=vmem, size = 0x400, scoped, tag = 'output window, operand 1']
    #allocation5 [shape = 's32[2]{0}', space=sflag, size = 0x8, scoped, tag = 'scoped memory for coca_text_encoder.1']
    %25 = vsyncpa [#allocation3], 0
    %s26 = scalar_lea.sflag [#allocation3], 1
    %27 = vsyncpa %s26, 0
    %28 = vsyncpa [#allocation5], 0
    %s29 = scalar_lea.sflag [#allocation5], 1
    %30 = vsyncpa %s29, 0
    loop: start=0, step=1, limit=4
    $region2: #{coca_text_encoder.1} parent=1 // loop_pre_header
      _
    $region3: #{coca_text_encoder.1} parent=1 // loop_header
      %s32 = sphi 0, %s36
      %p33 = scmp.ge.s32.totalorder %s32, 4
      %s42 = sphi 0, %s44
      %s45 = sphi 0, %s42
      %s46 = sphi 0, %s45
      %s62 = sphi 0, %s46
      %s68 = sphi 0, %s70
      %s71 = sphi 0, %s68
      %s72 = sphi 0, %s71
      %s88 = sphi 0, %s72
      %s92 = sphi 0, %s92
      %s94 = sphi 0, %s92
      %s95 = sphi 0, %s94
      %s109 = sphi 0, %s95
      %s113 = sphi 0, %s113
      %s115 = sphi 0, %s113
      %s116 = sphi 0, %s115
      %s130 = sphi 0, %s116
      %s134 = sphi 0, %s134
      %s136 = sphi 0, %s134
      %s137 = sphi 0, %s136
      %s151 = sphi 0, %s137
      %s155 = sphi 0, %s155
      %s157 = sphi 0, %s155
      %s158 = sphi 0, %s157
      %s172 = sphi 0, %s158
      %s176 = sphi 0, %s176
      %s178 = sphi 0, %s176
      %s179 = sphi 0, %s178
      %s193 = sphi 0, %s179
      %s197 = sphi 0, %s197
      %s199 = sphi 0, %s197
      %s200 = sphi 0, %s199
      %s214 = sphi 0, %s200
      %s218 = sphi 0, %s218
      %s220 = sphi 0, %s218
      %s221 = sphi 0, %s220
      %s235 = sphi 0, %s221
      %s239 = sphi 0, %s239
      %s241 = sphi 0, %s239
      %s242 = sphi 0, %s241
      %s256 = sphi 0, %s242
      %s260 = sphi 0, %s260
      %s262 = sphi 0, %s260
      %s263 = sphi 0, %s262
      %s277 = sphi 0, %s263
      %s281 = sphi 0, %s281
      %s283 = sphi 0, %s281
      %s284 = sphi 0, %s283
      %s298 = sphi 0, %s284
      %s302 = sphi 0, %s302
      %s304 = sphi 0, %s302
      %s305 = sphi 0, %s304
      %s319 = sphi 0, %s305
      %s323 = sphi 0, %s323
      %s325 = sphi 0, %s323
      %s326 = sphi 0, %s325
      %s340 = sphi 0, %s326
      %s344 = sphi 0, %s344
      %s346 = sphi 0, %s344
      %s347 = sphi 0, %s346
      %s361 = sphi 0, %s347
      %s365 = sphi 0, %s365
      %s367 = sphi 0, %s365
      %s368 = sphi 0, %s367
      %s382 = sphi 0, %s368
      %s386 = sphi 0, %s386
      %s388 = sphi 0, %s386
      %s389 = sphi 0, %s388
      %s403 = sphi 0, %s389
      %s407 = sphi 0, %s407
      %s409 = sphi 0, %s407
      %s410 = sphi 0, %s409
      %s424 = sphi 0, %s410
      %s430 = sphi 0, %s432
      %s433 = sphi 0, %s430
      %s434 = sphi 0, %s433
      %s450 = sphi 0, %s434
      %s456 = sphi 0, %s458
      %s459 = sphi 0, %s456
      %s460 = sphi 0, %s459
      %s476 = sphi 0, %s460
    $region4: #{coca_text_encoder.1} parent=1 // loop_header_branch
      %35 = sbr.rel (%p33) target = $region8
    $region5: #{coca_text_encoder.1} parent=1 // loop_body
      %s37 = ssub.s32 %s32, 1
      %s38 = ssub.s32 %s32, 2
      %s39 = sadd.s32 %s32, 1
      %s40 = ssub.s32 %s32, %s39
      %p41 = scmp.eq.s32.totalorder %s40, 0
      %s43 = sadd.s32 %s42, 1
      %s44 = scalar_select %p41, %s42, %s43
      %p47 = pneg %p41
      %p48 = scmp.eq.s32.totalorder %s32, 1
      %p49 = por %p47, %p48
      %p50 = scmp.ne.s32.totalorder %s42, %s45
      %p51 = scmp.eq.s32.totalorder %s32, 0
      %p52 = por %p50, %p51
      %p53 = scmp.ne.s32.totalorder %s42, %s45
      %p54 = scmp.eq.s32.totalorder %s37, 1
      %p55 = por %p53, %p54
      %p56 = scmp.ne.s32.totalorder %s45, %s46
      %p57 = scmp.eq.s32.totalorder %s37, 0
      %p58 = por %p56, %p57
      %p59 = scmp.ne.s32.totalorder %s45, %s46
      %p60 = scmp.eq.s32.totalorder %s38, 1
      %p61 = por %p59, %p60
      %p63 = scmp.ne.s32.totalorder %s46, %s62
      %p64 = scmp.eq.s32.totalorder %s38, 0
      %p65 = por %p63, %p64
      %s66 = ssub.s32 %s32, %s39
      %p67 = scmp.eq.s32.totalorder %s66, 0
      %s69 = sadd.s32 %s68, 1
      %s70 = scalar_select %p67, %s68, %s69
      %p73 = pneg %p67
      %p74 = scmp.eq.s32.totalorder %s32, 1
      %p75 = por %p73, %p74
      %p76 = scmp.ne.s32.totalorder %s68, %s71
      %p77 = scmp.eq.s32.totalorder %s32, 0
      %p78 = por %p76, %p77
      %p79 = scmp.ne.s32.totalorder %s68, %s71
      %p80 = scmp.eq.s32.totalorder %s37, 1
      %p81 = por %p79, %p80
      %p82 = scmp.ne.s32.totalorder %s71, %s72
      %p83 = scmp.eq.s32.totalorder %s37, 0
      %p84 = por %p82, %p83
      %p85 = scmp.ne.s32.totalorder %s71, %s72
      %p86 = scmp.eq.s32.totalorder %s38, 1
      %p87 = por %p85, %p86
      %p89 = scmp.ne.s32.totalorder %s72, %s88
      %p90 = scmp.eq.s32.totalorder %s38, 0
      %p91 = por %p89, %p90
      %s93 = sadd.s32 %s92, 1
      %p96 = scmp.eq.s32.totalorder %s32, 1
      %p97 = scmp.ne.s32.totalorder %s92, %s94
      %p98 = scmp.eq.s32.totalorder %s32, 0
      %p99 = por %p97, %p98
      %p100 = scmp.ne.s32.totalorder %s92, %s94
      %p101 = scmp.eq.s32.totalorder %s37, 1
      %p102 = por %p100, %p101
      %p103 = scmp.ne.s32.totalorder %s94, %s95
      %p104 = scmp.eq.s32.totalorder %s37, 0
      %p105 = por %p103, %p104
      %p106 = scmp.ne.s32.totalorder %s94, %s95
      %p107 = scmp.eq.s32.totalorder %s38, 1
      %p108 = por %p106, %p107
      %p110 = scmp.ne.s32.totalorder %s95, %s109
      %p111 = scmp.eq.s32.totalorder %s38, 0
      %p112 = por %p110, %p111
      %s114 = sadd.s32 %s113, 1
      %p117 = scmp.eq.s32.totalorder %s32, 1
      %p118 = scmp.ne.s32.totalorder %s113, %s115
      %p119 = scmp.eq.s32.totalorder %s32, 0
      %p120 = por %p118, %p119
      %p121 = scmp.ne.s32.totalorder %s113, %s115
      %p122 = scmp.eq.s32.totalorder %s37, 1
      %p123 = por %p121, %p122
      %p124 = scmp.ne.s32.totalorder %s115, %s116
      %p125 = scmp.eq.s32.totalorder %s37, 0
      %p126 = por %p124, %p125
      %p127 = scmp.ne.s32.totalorder %s115, %s116
      %p128 = scmp.eq.s32.totalorder %s38, 1
      %p129 = por %p127, %p128
      %p131 = scmp.ne.s32.totalorder %s116, %s130
      %p132 = scmp.eq.s32.totalorder %s38, 0
      %p133 = por %p131, %p132
      %s135 = sadd.s32 %s134, 1
      %p138 = scmp.eq.s32.totalorder %s32, 1
      %p139 = scmp.ne.s32.totalorder %s134, %s136
      %p140 = scmp.eq.s32.totalorder %s32, 0
      %p141 = por %p139, %p140
      %p142 = scmp.ne.s32.totalorder %s134, %s136
      %p143 = scmp.eq.s32.totalorder %s37, 1
      %p144 = por %p142, %p143
      %p145 = scmp.ne.s32.totalorder %s136, %s137
      %p146 = scmp.eq.s32.totalorder %s37, 0
      %p147 = por %p145, %p146
      %p148 = scmp.ne.s32.totalorder %s136, %s137
      %p149 = scmp.eq.s32.totalorder %s38, 1
      %p150 = por %p148, %p149
      %p152 = scmp.ne.s32.totalorder %s137, %s151
      %p153 = scmp.eq.s32.totalorder %s38, 0
      %p154 = por %p152, %p153
      %s156 = sadd.s32 %s155, 1
      %p159 = scmp.eq.s32.totalorder %s32, 1
      %p160 = scmp.ne.s32.totalorder %s155, %s157
      %p161 = scmp.eq.s32.totalorder %s32, 0
      %p162 = por %p160, %p161
      %p163 = scmp.ne.s32.totalorder %s155, %s157
      %p164 = scmp.eq.s32.totalorder %s37, 1
      %p165 = por %p163, %p164
      %p166 = scmp.ne.s32.totalorder %s157, %s158
      %p167 = scmp.eq.s32.totalorder %s37, 0
      %p168 = por %p166, %p167
      %p169 = scmp.ne.s32.totalorder %s157, %s158
      %p170 = scmp.eq.s32.totalorder %s38, 1
      %p171 = por %p169, %p170
      %p173 = scmp.ne.s32.totalorder %s158, %s172
      %p174 = scmp.eq.s32.totalorder %s38, 0
      %p175 = por %p173, %p174
      %s177 = sadd.s32 %s176, 1
      %p180 = scmp.eq.s32.totalorder %s32, 1
      %p181 = scmp.ne.s32.totalorder %s176, %s178
      %p182 = scmp.eq.s32.totalorder %s32, 0
      %p183 = por %p181, %p182
      %p184 = scmp.ne.s32.totalorder %s176, %s178
      %p185 = scmp.eq.s32.totalorder %s37, 1
      %p186 = por %p184, %p185
      %p187 = scmp.ne.s32.totalorder %s178, %s179
      %p188 = scmp.eq.s32.totalorder %s37, 0
      %p189 = por %p187, %p188
      %p190 = scmp.ne.s32.totalorder %s178, %s179
      %p191 = scmp.eq.s32.totalorder %s38, 1
      %p192 = por %p190, %p191
      %p194 = scmp.ne.s32.totalorder %s179, %s193
      %p195 = scmp.eq.s32.totalorder %s38, 0
      %p196 = por %p194, %p195
      %s198 = sadd.s32 %s197, 1
      %p201 = scmp.eq.s32.totalorder %s32, 1
      %p202 = scmp.ne.s32.totalorder %s197, %s199
      %p203 = scmp.eq.s32.totalorder %s32, 0
      %p204 = por %p202, %p203
      %p205 = scmp.ne.s32.totalorder %s197, %s199
      %p206 = scmp.eq.s32.totalorder %s37, 1
      %p207 = por %p205, %p206
      %p208 = scmp.ne.s32.totalorder %s199, %s200
      %p209 = scmp.eq.s32.totalorder %s37, 0
      %p210 = por %p208, %p209
      %p211 = scmp.ne.s32.totalorder %s199, %s200
      %p212 = scmp.eq.s32.totalorder %s38, 1
      %p213 = por %p211, %p212
      %p215 = scmp.ne.s32.totalorder %s200, %s214
      %p216 = scmp.eq.s32.totalorder %s38, 0
      %p217 = por %p215, %p216
      %s219 = sadd.s32 %s218, 1
      %p222 = scmp.eq.s32.totalorder %s32, 1
      %p223 = scmp.ne.s32.totalorder %s218, %s220
      %p224 = scmp.eq.s32.totalorder %s32, 0
      %p225 = por %p223, %p224
      %p226 = scmp.ne.s32.totalorder %s218, %s220
      %p227 = scmp.eq.s32.totalorder %s37, 1
      %p228 = por %p226, %p227
      %p229 = scmp.ne.s32.totalorder %s220, %s221
      %p230 = scmp.eq.s32.totalorder %s37, 0
      %p231 = por %p229, %p230
      %p232 = scmp.ne.s32.totalorder %s220, %s221
      %p233 = scmp.eq.s32.totalorder %s38, 1
      %p234 = por %p232, %p233
      %p236 = scmp.ne.s32.totalorder %s221, %s235
      %p237 = scmp.eq.s32.totalorder %s38, 0
      %p238 = por %p236, %p237
      %s240 = sadd.s32 %s239, 1
      %p243 = scmp.eq.s32.totalorder %s32, 1
      %p244 = scmp.ne.s32.totalorder %s239, %s241
      %p245 = scmp.eq.s32.totalorder %s32, 0
      %p246 = por %p244, %p245
      %p247 = scmp.ne.s32.totalorder %s239, %s241
      %p248 = scmp.eq.s32.totalorder %s37, 1
      %p249 = por %p247, %p248
      %p250 = scmp.ne.s32.totalorder %s241, %s242
      %p251 = scmp.eq.s32.totalorder %s37, 0
      %p252 = por %p250, %p251
      %p253 = scmp.ne.s32.totalorder %s241, %s242
      %p254 = scmp.eq.s32.totalorder %s38, 1
      %p255 = por %p253, %p254
      %p257 = scmp.ne.s32.totalorder %s242, %s256
      %p258 = scmp.eq.s32.totalorder %s38, 0
      %p259 = por %p257, %p258
      %s261 = sadd.s32 %s260, 1
      %p264 = scmp.eq.s32.totalorder %s32, 1
      %p265 = scmp.ne.s32.totalorder %s260, %s262
      %p266 = scmp.eq.s32.totalorder %s32, 0
      %p267 = por %p265, %p266
      %p268 = scmp.ne.s32.totalorder %s260, %s262
      %p269 = scmp.eq.s32.totalorder %s37, 1
      %p270 = por %p268, %p269
      %p271 = scmp.ne.s32.totalorder %s262, %s263
      %p272 = scmp.eq.s32.totalorder %s37, 0
      %p273 = por %p271, %p272
      %p274 = scmp.ne.s32.totalorder %s262, %s263
      %p275 = scmp.eq.s32.totalorder %s38, 1
      %p276 = por %p274, %p275
      %p278 = scmp.ne.s32.totalorder %s263, %s277
      %p279 = scmp.eq.s32.totalorder %s38, 0
      %p280 = por %p278, %p279
      %s282 = sadd.s32 %s281, 1
      %p285 = scmp.eq.s32.totalorder %s32, 1
      %p286 = scmp.ne.s32.totalorder %s281, %s283
      %p287 = scmp.eq.s32.totalorder %s32, 0
      %p288 = por %p286, %p287
      %p289 = scmp.ne.s32.totalorder %s281, %s283
      %p290 = scmp.eq.s32.totalorder %s37, 1
      %p291 = por %p289, %p290
      %p292 = scmp.ne.s32.totalorder %s283, %s284
      %p293 = scmp.eq.s32.totalorder %s37, 0
      %p294 = por %p292, %p293
      %p295 = scmp.ne.s32.totalorder %s283, %s284
      %p296 = scmp.eq.s32.totalorder %s38, 1
      %p297 = por %p295, %p296
      %p299 = scmp.ne.s32.totalorder %s284, %s298
      %p300 = scmp.eq.s32.totalorder %s38, 0
      %p301 = por %p299, %p300
      %s303 = sadd.s32 %s302, 1
      %p306 = scmp.eq.s32.totalorder %s32, 1
      %p307 = scmp.ne.s32.totalorder %s302, %s304
      %p308 = scmp.eq.s32.totalorder %s32, 0
      %p309 = por %p307, %p308
      %p310 = scmp.ne.s32.totalorder %s302, %s304
      %p311 = scmp.eq.s32.totalorder %s37, 1
      %p312 = por %p310, %p311
      %p313 = scmp.ne.s32.totalorder %s304, %s305
      %p314 = scmp.eq.s32.totalorder %s37, 0
      %p315 = por %p313, %p314
      %p316 = scmp.ne.s32.totalorder %s304, %s305
      %p317 = scmp.eq.s32.totalorder %s38, 1
      %p318 = por %p316, %p317
      %p320 = scmp.ne.s32.totalorder %s305, %s319
      %p321 = scmp.eq.s32.totalorder %s38, 0
      %p322 = por %p320, %p321
      %s324 = sadd.s32 %s323, 1
      %p327 = scmp.eq.s32.totalorder %s32, 1
      %p328 = scmp.ne.s32.totalorder %s323, %s325
      %p329 = scmp.eq.s32.totalorder %s32, 0
      %p330 = por %p328, %p329
      %p331 = scmp.ne.s32.totalorder %s323, %s325
      %p332 = scmp.eq.s32.totalorder %s37, 1
      %p333 = por %p331, %p332
      %p334 = scmp.ne.s32.totalorder %s325, %s326
      %p335 = scmp.eq.s32.totalorder %s37, 0
      %p336 = por %p334, %p335
      %p337 = scmp.ne.s32.totalorder %s325, %s326
      %p338 = scmp.eq.s32.totalorder %s38, 1
      %p339 = por %p337, %p338
      %p341 = scmp.ne.s32.totalorder %s326, %s340
      %p342 = scmp.eq.s32.totalorder %s38, 0
      %p343 = por %p341, %p342
      %s345 = sadd.s32 %s344, 1
      %p348 = scmp.eq.s32.totalorder %s32, 1
      %p349 = scmp.ne.s32.totalorder %s344, %s346
      %p350 = scmp.eq.s32.totalorder %s32, 0
      %p351 = por %p349, %p350
      %p352 = scmp.ne.s32.totalorder %s344, %s346
      %p353 = scmp.eq.s32.totalorder %s37, 1
      %p354 = por %p352, %p353
      %p355 = scmp.ne.s32.totalorder %s346, %s347
      %p356 = scmp.eq.s32.totalorder %s37, 0
      %p357 = por %p355, %p356
      %p358 = scmp.ne.s32.totalorder %s346, %s347
      %p359 = scmp.eq.s32.totalorder %s38, 1
      %p360 = por %p358, %p359
      %p362 = scmp.ne.s32.totalorder %s347, %s361
      %p363 = scmp.eq.s32.totalorder %s38, 0
      %p364 = por %p362, %p363
      %s366 = sadd.s32 %s365, 1
      %p369 = scmp.eq.s32.totalorder %s32, 1
      %p370 = scmp.ne.s32.totalorder %s365, %s367
      %p371 = scmp.eq.s32.totalorder %s32, 0
      %p372 = por %p370, %p371
      %p373 = scmp.ne.s32.totalorder %s365, %s367
      %p374 = scmp.eq.s32.totalorder %s37, 1
      %p375 = por %p373, %p374
      %p376 = scmp.ne.s32.totalorder %s367, %s368
      %p377 = scmp.eq.s32.totalorder %s37, 0
      %p378 = por %p376, %p377
      %p379 = scmp.ne.s32.totalorder %s367, %s368
      %p380 = scmp.eq.s32.totalorder %s38, 1
      %p381 = por %p379, %p380
      %p383 = scmp.ne.s32.totalorder %s368, %s382
      %p384 = scmp.eq.s32.totalorder %s38, 0
      %p385 = por %p383, %p384
      %s387 = sadd.s32 %s386, 1
      %p390 = scmp.eq.s32.totalorder %s32, 1
      %p391 = scmp.ne.s32.totalorder %s386, %s388
      %p392 = scmp.eq.s32.totalorder %s32, 0
      %p393 = por %p391, %p392
      %p394 = scmp.ne.s32.totalorder %s386, %s388
      %p395 = scmp.eq.s32.totalorder %s37, 1
      %p396 = por %p394, %p395
      %p397 = scmp.ne.s32.totalorder %s388, %s389
      %p398 = scmp.eq.s32.totalorder %s37, 0
      %p399 = por %p397, %p398
      %p400 = scmp.ne.s32.totalorder %s388, %s389
      %p401 = scmp.eq.s32.totalorder %s38, 1
      %p402 = por %p400, %p401
      %p404 = scmp.ne.s32.totalorder %s389, %s403
      %p405 = scmp.eq.s32.totalorder %s38, 0
      %p406 = por %p404, %p405
      %s408 = sadd.s32 %s407, 1
      %p411 = scmp.eq.s32.totalorder %s32, 1
      %p412 = scmp.ne.s32.totalorder %s407, %s409
      %p413 = scmp.eq.s32.totalorder %s32, 0
      %p414 = por %p412, %p413
      %p415 = scmp.ne.s32.totalorder %s407, %s409
      %p416 = scmp.eq.s32.totalorder %s37, 1
      %p417 = por %p415, %p416
      %p418 = scmp.ne.s32.totalorder %s409, %s410
      %p419 = scmp.eq.s32.totalorder %s37, 0
      %p420 = por %p418, %p419
      %p421 = scmp.ne.s32.totalorder %s409, %s410
      %p422 = scmp.eq.s32.totalorder %s38, 1
      %p423 = por %p421, %p422
      %p425 = scmp.ne.s32.totalorder %s410, %s424
      %p426 = scmp.eq.s32.totalorder %s38, 0
      %p427 = por %p425, %p426
      %s428 = ssub.s32 %s32, %s39
      %p429 = scmp.eq.s32.totalorder %s428, 0
      %s431 = sadd.s32 %s430, 1
      %s432 = scalar_select %p429, %s430, %s431
      %p435 = pneg %p429
      %p436 = scmp.eq.s32.totalorder %s32, 1
      %p437 = por %p435, %p436
      %p438 = scmp.ne.s32.totalorder %s430, %s433
      %p439 = scmp.eq.s32.totalorder %s32, 0
      %p440 = por %p438, %p439
      %p441 = scmp.ne.s32.totalorder %s430, %s433
      %p442 = scmp.eq.s32.totalorder %s37, 1
      %p443 = por %p441, %p442
      %p444 = scmp.ne.s32.totalorder %s433, %s434
      %p445 = scmp.eq.s32.totalorder %s37, 0
      %p446 = por %p444, %p445
      %p447 = scmp.ne.s32.totalorder %s433, %s434
      %p448 = scmp.eq.s32.totalorder %s38, 1
      %p449 = por %p447, %p448
      %p451 = scmp.ne.s32.totalorder %s434, %s450
      %p452 = scmp.eq.s32.totalorder %s38, 0
      %p453 = por %p451, %p452
      %s454 = ssub.s32 %s32, %s39
      %p455 = scmp.eq.s32.totalorder %s454, 0
      %s457 = sadd.s32 %s456, 1
      %s458 = scalar_select %p455, %s456, %s457
      %p461 = pneg %p455
      %p462 = scmp.eq.s32.totalorder %s32, 1
      %p463 = por %p461, %p462
      %p464 = scmp.ne.s32.totalorder %s456, %s459
      %p465 = scmp.eq.s32.totalorder %s32, 0
      %p466 = por %p464, %p465
      %p467 = scmp.ne.s32.totalorder %s456, %s459
      %p468 = scmp.eq.s32.totalorder %s37, 1
      %p469 = por %p467, %p468
      %p470 = scmp.ne.s32.totalorder %s459, %s460
      %p471 = scmp.eq.s32.totalorder %s37, 0
      %p472 = por %p470, %p471
      %p473 = scmp.ne.s32.totalorder %s459, %s460
      %p474 = scmp.eq.s32.totalorder %s38, 1
      %p475 = por %p473, %p474
      %p477 = scmp.ne.s32.totalorder %s460, %s476
      %p478 = scmp.eq.s32.totalorder %s38, 0
      %p479 = por %p477, %p478
      %p480 = scmp.le.s32.totalorder 1, %s32
      %p481 = scmp.lt.s32.totalorder %s32, 3
      %p482 = pnand %p480, %p481
      %p483 = pneg %p482
      // Predicated region
      $region9: #{coca_text_encoder.1} parent=5 // pred_check
        _
      $region10: #{coca_text_encoder.1} parent=5 // pred_check_branch
        %485 = sbr.rel (%p482) target = $region12
      $region11: #{coca_text_encoder.1} parent=5 // pred_region
        %s486 = ssub.s32 %s32, 1
        // Predicated region
        $region13: #{coca_text_encoder.1} parent=11 // pred_check
          %p487 = pneg %p105
        $region14: #{coca_text_encoder.1} parent=11 // pred_check_branch
          %489 = sbr.rel (%p487) target = $region16
        $region15: #{coca_text_encoder.1} parent=11 // pred_region
          _
        $region16: #{coca_text_encoder.1} parent=11 // pred_fallthru
          _
        // Predicated region
        $region17: #{coca_text_encoder.1} parent=11 // pred_check
          %p490 = pneg %p126
        $region18: #{coca_text_encoder.1} parent=11 // pred_check_branch
          %492 = sbr.rel (%p490) target = $region20
        $region19: #{coca_text_encoder.1} parent=11 // pred_region
          _
        $region20: #{coca_text_encoder.1} parent=11 // pred_fallthru
          _
        // Predicated region
        $region21: #{coca_text_encoder.1} parent=11 // pred_check
          %p493 = pneg %p147
        $region22: #{coca_text_encoder.1} parent=11 // pred_check_branch
          %495 = sbr.rel (%p493) target = $region24
        $region23: #{coca_text_encoder.1} parent=11 // pred_region
          _
        $region24: #{coca_text_encoder.1} parent=11 // pred_fallthru
          _
        // Predicated region
        $region25: #{coca_text_encoder.1} parent=11 // pred_check
          %p496 = pneg %p168
        $region26: #{coca_text_encoder.1} parent=11 // pred_check_branch
          %498 = sbr.rel (%p496) target = $region28
        $region27: #{coca_text_encoder.1} parent=11 // pred_region
          _
        $region28: #{coca_text_encoder.1} parent=11 // pred_fallthru
          _
        // Predicated region
        $region29: #{coca_text_encoder.1} parent=11 // pred_check
          %p499 = pneg %p189
        $region30: #{coca_text_encoder.1} parent=11 // pred_check_branch
          %501 = sbr.rel (%p499) target = $region32
        $region31: #{coca_text_encoder.1} parent=11 // pred_region
          _
        $region32: #{coca_text_encoder.1} parent=11 // pred_fallthru
          _
        // Predicated region
        $region33: #{coca_text_encoder.1} parent=11 // pred_check
          %p502 = pneg %p210
        $region34: #{coca_text_encoder.1} parent=11 // pred_check_branch
          %504 = sbr.rel (%p502) target = $region36
        $region35: #{coca_text_encoder.1} parent=11 // pred_region
          _
        $region36: #{coca_text_encoder.1} parent=11 // pred_fallthru
          _
        // Predicated region
        $region37: #{coca_text_encoder.1} parent=11 // pred_check
          %p505 = pneg %p231
        $region38: #{coca_text_encoder.1} parent=11 // pred_check_branch
          %507 = sbr.rel (%p505) target = $region40
        $region39: #{coca_text_encoder.1} parent=11 // pred_region
          _
        $region40: #{coca_text_encoder.1} parent=11 // pred_fallthru
          _
        // Predicated region
        $region41: #{coca_text_encoder.1} parent=11 // pred_check
          %p508 = pneg %p252
        $region42: #{coca_text_encoder.1} parent=11 // pred_check_branch
          %510 = sbr.rel (%p508) target = $region44
        $region43: #{coca_text_encoder.1} parent=11 // pred_region
          _
        $region44: #{coca_text_encoder.1} parent=11 // pred_fallthru
          _
        // Predicated region
        $region45: #{coca_text_encoder.1} parent=11 // pred_check
          %p511 = pneg %p273
        $region46: #{coca_text_encoder.1} parent=11 // pred_check_branch
          %513 = sbr.rel (%p511) target = $region48
        $region47: #{coca_text_encoder.1} parent=11 // pred_region
          _
        $region48: #{coca_text_encoder.1} parent=11 // pred_fallthru
          _
        // Predicated region
        $region49: #{coca_text_encoder.1} parent=11 // pred_check
          %p514 = pneg %p294
        $region50: #{coca_text_encoder.1} parent=11 // pred_check_branch
          %516 = sbr.rel (%p514) target = $region52
        $region51: #{coca_text_encoder.1} parent=11 // pred_region
          _
        $region52: #{coca_text_encoder.1} parent=11 // pred_fallthru
          _
        // Predicated region
        $region53: #{coca_text_encoder.1} parent=11 // pred_check
          %p517 = pneg %p315
        $region54: #{coca_text_encoder.1} parent=11 // pred_check_branch
          %519 = sbr.rel (%p517) target = $region56
        $region55: #{coca_text_encoder.1} parent=11 // pred_region
          _
        $region56: #{coca_text_encoder.1} parent=11 // pred_fallthru
          _
        // Predicated region
        $region57: #{coca_text_encoder.1} parent=11 // pred_check
          %p520 = pneg %p336
        $region58: #{coca_text_encoder.1} parent=11 // pred_check_branch
          %522 = sbr.rel (%p520) target = $region60
        $region59: #{coca_text_encoder.1} parent=11 // pred_region
          _
        $region60: #{coca_text_encoder.1} parent=11 // pred_fallthru
          _
        // Predicated region
        $region61: #{coca_text_encoder.1} parent=11 // pred_check
          %p523 = pneg %p357
        $region62: #{coca_text_encoder.1} parent=11 // pred_check_branch
          %525 = sbr.rel (%p523) target = $region64
        $region63: #{coca_text_encoder.1} parent=11 // pred_region
          _
        $region64: #{coca_text_encoder.1} parent=11 // pred_fallthru
          _
        // Predicated region
        $region65: #{coca_text_encoder.1} parent=11 // pred_check
          %p526 = pneg %p378
        $region66: #{coca_text_encoder.1} parent=11 // pred_check_branch
          %528 = sbr.rel (%p526) target = $region68
        $region67: #{coca_text_encoder.1} parent=11 // pred_region
          _
        $region68: #{coca_text_encoder.1} parent=11 // pred_fallthru
          _
        // Predicated region
        $region69: #{coca_text_encoder.1} parent=11 // pred_check
          %p529 = pneg %p399
        $region70: #{coca_text_encoder.1} parent=11 // pred_check_branch
          %531 = sbr.rel (%p529) target = $region72
        $region71: #{coca_text_encoder.1} parent=11 // pred_region
          _
        $region72: #{coca_text_encoder.1} parent=11 // pred_fallthru
          _
        // Predicated region
        $region73: #{coca_text_encoder.1} parent=11 // pred_check
          %p532 = pneg %p420
        $region74: #{coca_text_encoder.1} parent=11 // pred_check_branch
          %534 = sbr.rel (%p532) target = $region76
        $region75: #{coca_text_encoder.1} parent=11 // pred_region
          _
        $region76: #{coca_text_encoder.1} parent=11 // pred_fallthru
          _
      $region12: #{coca_text_encoder.1} parent=5 // pred_fallthru
        _
      %p535 = scmp.lt.s32.totalorder %s32, 2
      // Predicated region
      $region77: #{coca_text_encoder.1} parent=5 // pred_check
        %p536 = pneg %p535
      $region78: #{coca_text_encoder.1} parent=5 // pred_check_branch
        %538 = sbr.rel (%p536) target = $region80
      $region79: #{coca_text_encoder.1} parent=5 // pred_region
        // Predicated region
        $region81: #{coca_text_encoder.1} parent=79 // pred_check
          %p539 = pneg %p52
        $region82: #{coca_text_encoder.1} parent=79 // pred_check_branch
          %541 = sbr.rel (%p539) target = $region84
        $region83: #{coca_text_encoder.1} parent=79 // pred_region
          %p542 = scmp.lt.s32.totalorder %s32, 1
          %s543 = scalar_select %p542, %s32, 1
          %s544 = smul.addr %s543, 2
          %s545 = smul.addr %s544, 8
          %s546 = scalar_lea.vmem %s0, %s545
        $region84: #{coca_text_encoder.1} parent=79 // pred_fallthru
          _
        // Predicated region
        $region85: #{coca_text_encoder.1} parent=79 // pred_check
          %p547 = pneg %p78
        $region86: #{coca_text_encoder.1} parent=79 // pred_check_branch
          %549 = sbr.rel (%p547) target = $region88
        $region87: #{coca_text_encoder.1} parent=79 // pred_region
          %p550 = scmp.lt.s32.totalorder %s32, 1
          %s551 = scalar_select %p550, %s32, 1
          %s552 = scalar_lea.vmem %s1, %s551
        $region88: #{coca_text_encoder.1} parent=79 // pred_fallthru
          _
      $region80: #{coca_text_encoder.1} parent=5 // pred_fallthru
        _
      %p553 = scmp.le.s32.totalorder 1, %s32
      %p554 = scmp.lt.s32.totalorder %s32, 3
      %p555 = pnand %p553, %p554
      %p556 = pneg %p555
      // Predicated region
      $region89: #{coca_text_encoder.1} parent=5 // pred_check
        _
      $region90: #{coca_text_encoder.1} parent=5 // pred_check_branch
        %558 = sbr.rel (%p555) target = $region92
      $region91: #{coca_text_encoder.1} parent=5 // pred_region
        %s559 = ssub.s32 %s32, 1
        %p560 = scmp.lt.s32.totalorder %s37, 1
        %s561 = scalar_select %p560, %s37, 1
        %s562 = smul.addr %s561, 2
        %s563 = smul.addr %s562, 8
        %s564 = scalar_lea.vmem %s0, %s563
        %p565 = pneg %p58
        %p566 = pneg %p55
        %p567 = scmp.lt.s32.totalorder %s37, 1
        %s568 = scalar_select %p567, %s37, 1
        %s569 = scalar_lea.vmem %s1, %s568
        %p570 = pneg %p84
        %p571 = pneg %p81
        %p572 = pneg %p105
        %p573 = pneg %p102
        %p574 = pneg %p126
        %p575 = pneg %p123
        %p576 = pneg %p147
        %p577 = pneg %p144
        %p578 = pneg %p168
        %p579 = pneg %p165
        %p580 = pneg %p189
        %p581 = pneg %p186
        %p582 = pneg %p210
        %p583 = pneg %p207
        %p584 = pneg %p231
        %p585 = pneg %p228
        %p586 = pneg %p252
        %p587 = pneg %p249
        %p588 = pneg %p273
        %p589 = pneg %p270
        %p590 = pneg %p294
        %p591 = pneg %p291
        %p592 = pneg %p315
        %p593 = pneg %p312
        %p594 = pneg %p336
        %p595 = pneg %p333
        %p596 = pneg %p357
        %p597 = pneg %p354
        %p598 = pneg %p378
        %p599 = pneg %p375
        %p600 = pneg %p399
        %p601 = pneg %p396
        %p602 = pneg %p420
        %p603 = pneg %p417
        %p604 = pneg %p446
        %p605 = pneg %p443
        %s606 = sand.u32 %s433, 1
        %s607 = scalar_lea.sflag [#allocation3], %s606
        %s608 = sand.u32 %s433, 1
        %s609 = smul.addr %s608, 8
        %s610 = scalar_lea.vmem [#allocation2], %s609
        %p611 = pneg %p472
        %p612 = pneg %p469
        %s613 = sand.u32 %s459, 1
        %s614 = scalar_lea.sflag [#allocation5], %s613
        %s615 = sand.u32 %s459, 1
        %s616 = scalar_lea.vmem [#allocation4], %s615
        %p617 = scmp.lt.s32.totalorder %s37, 1
        %s618 = scalar_select %p617, %s37, 1
        %s619 = smul.addr %s618, 2
        %s620 = smul.addr %s619, 8
        %s621 = scalar_lea.vmem %s0, %s620
        %p622 = scmp.lt.s32.totalorder %s37, 1
        %s623 = scalar_select %p622, %s37, 1
        %s624 = scalar_lea.vmem %s1, %s623
        %v625 = vld [vmem:[%s621] sm:$0xff]
        %v626 = vld [vmem:[%s621 + $0x8] sm:$0x1]
        %v627 = vld [vmem:[%s2] sm:$0xff]
        %v628 = vld [vmem:[%s2 + $0x8] sm:$0x1]
        %v629 = vadd.f32 %v625, %v627
        %v630 = vadd.f32 %v626, %v628
        %v631 = vlaneseq
        %v632 = vshrl.u32 %v631, 7
        %v633 = vadd.s32 %v632, 8
        %v634 = vlaneseq
        %v635 = vand.u32 %v634, 127
        %vm636 = vcmp.le.s32.totalorder %v635, %v632
        %vm637 = vcmp.le.s32.totalorder %v635, %v633
        %v638 = vld [vmem:[%s624] sm:$0x1]
        %vm639 = vcmp.gt.f32.partialorder %v638, 0.5
        %vm640 = vcmp.eq.s32.totalorder %v632, 8
        %vm641 = vcmp.eq.s32.totalorder %v633, 8
        %vm642 = vmxor %vm640, 1
        %vm643 = vmxor %vm641, 1
        %v644 = vsel %vm639, 1, 0
        %v645 = vperm.slane %v644, 0
        %vm646 = vcmp.eq.s32.totalorder %v645, 1
        %vm647 = vmor %vm642, %vm646
        %vm648 = vmor %vm643, %vm646
        %vm649 = vmand %vm636, %vm647
        %vm650 = vmand %vm637, %vm648
        %v651 = vsel %vm649, 0.0, -1e+30
        %v652 = vsel %vm650, 0.0, -1e+30
        %v653 = vld [vmem:[%s3] sm:$0x1]
        %v654 = vld [vmem:[%s4] sm:$0x1]
        %vm655 = vcmask 261120
        %v656 = vsel %vm655, %v629, 0.0
        %657 = vadd.xlane.f32.xlu0 %v656
        %v658 = vpop.xlane.xlu0 %657
        %vm659 = vcmask 253952
        %v660 = vsel %vm659, %v630, 0.0
        %661 = vadd.xlane.f32.xlu0 %v660
        %v662 = vpop.xlane.xlu0 %661
        %v663 = vrcp.pop 32.0
        %v664 = vmul.f32 32.0, %v663
        %v665 = vsub.f32 1.0, %v664
        %v666 = vmul.f32 %v663, %v665
        %v667 = vadd.f32 %v663, %v666
        %vm668 = vweird.f32 %v663
        %v669 = vsel %vm668, %v663, %v667
        %v670 = vmul.f32 %v658, %v669
        %v671 = vmul.f32 %v662, %v669
        %v672 = vsub.f32 %v629, %v670
        %v673 = vsub.f32 %v630, %v671
        %v674 = vmul.f32 %v672, %v672
        %v675 = vmul.f32 %v673, %v673
        %v676 = vsel %vm655, %v674, 0.0
        %677 = vadd.xlane.f32.xlu0 %v676
        %v678 = vpop.xlane.xlu0 %677
        %v679 = vsel %vm659, %v675, 0.0
        %680 = vadd.xlane.f32.xlu0 %v679
        %v681 = vpop.xlane.xlu0 %680
        %v682 = vmul.f32 %v678, %v669
        %v683 = vmul.f32 %v681, %v669
        %v684 = vadd.f32 %v682, 1e-05
        %v685 = vadd.f32 %v683, 1e-05
        %v686 = vrsqrt.pop %v684
        %v687 = vmul.f32 %v686, %v684
        %v688 = vmul.f32 %v687, %v686
        %v689 = vmul.f32 0.5, %v688
        %v690 = vsub.f32 1.5, %v689
        %v691 = vmul.f32 %v686, %v690
        %vm692 = vweird.f32 %v684
        %vm693 = vweird.f32 %v686
        %vm694 = vmor %vm692, %vm693
        %v695 = vsel %vm694, %v686, %v691
        %v696 = vrsqrt.pop %v685
        %v697 = vmul.f32 %v696, %v685
        %v698 = vmul.f32 %v697, %v696
        %v699 = vmul.f32 0.5, %v698
        %v700 = vsub.f32 1.5, %v699
        %v701 = vmul.f32 %v696, %v700
        %vm702 = vweird.f32 %v685
        %vm703 = vweird.f32 %v696
        %vm704 = vmor %vm702, %vm703
        %v705 = vsel %vm704, %v696, %v701
        %v706 = vmul.f32 %v672, %v695
        %v707 = vmul.f32 %v673, %v705
        %v709 = vperm.slane %v653, 0
        %v711 = vmul.f32 %v706, %v709
        %v712 = vmul.f32 %v707, %v709
        %v714 = vperm.slane %v654, 0
        %v716 = vadd.f32 %v711, %v714
        %v717 = vadd.f32 %v712, %v714
        %v718 = vld [vmem:[%s5] sm:$0xff]
        %v719 = vld [vmem:[%s5 + $0x8] sm:$0xff]
        %v720 = vld [vmem:[%s5 + $0x10] sm:$0xff]
        %v721 = vld [vmem:[%s5 + $0x18] sm:$0xff]
        %v722 = vld [vmem:[%s6] sm:$0x1]
        %v724 = vperm.slane %v722, 0
        %v727 = vsel %vm655, %v716, 0
        %v730 = vsel %vm655, %v717, 0
        %732 = vmatpush.msra.mxu0 0.0
        %733 = vmatpush.msra.mxu0 0.0
        %734 = vmatpush.msra.mxu0 0.0
        %735 = vmatpush.msra.mxu0 0.0
        %736 = vmatpush.msra.mxu0 0.0
        %737 = vmatpush.msra.mxu0 0.0
        %738 = vmatpush.msra.mxu0 0.0
        %739 = vmatpush.msra.mxu0 0.0
        %740 = vmatpush.msra.mxu0 0.0
        %741 = vmatpush.msra.mxu0 0.0
        %742 = vmatpush.msra.mxu0 0.0
        %743 = vmatpush.msra.mxu0 0.0
        %744 = vmatpush.msra.mxu0 %v721
        %745 = vmatpush.msra.mxu0 %v720
        %746 = vmatpush.msra.mxu0 %v719
        %747 = vmatpush.msra.mxu0 %v718
        %748 = vmatmul.f32.gmra.mxu0 %v727
        %v749 = vpop.f32.mrf.mxu0
        %v750 = vadd.f32 %v724, %v749
        %751 = vmatmul.f32.gmra.mxu0 %v730
        %v752 = vpop.f32.mrf.mxu0
        %v753 = vadd.f32 %v724, %v752
        %754 = vdwg.mxu0
        %757 = vrot.lane.b32.xlu0 %v750, 120
        %v758 = vpop.permute.xlu0 %757
        %759 = vrot.lane.b32.xlu0 %v753, 120
        %v760 = vpop.permute.xlu0 %759
        %761 = vrot.lane.b32.xlu0 %v750, 112
        %v762 = vpop.permute.xlu0 %761
        %763 = vrot.lane.b32.xlu0 %v753, 112
        %v764 = vpop.permute.xlu0 %763
        %765 = vrot.lane.b32.xlu0 %v750, 104
        %v766 = vpop.permute.xlu0 %765
        %767 = vrot.lane.b32.xlu0 %v753, 104
        %v768 = vpop.permute.xlu0 %767
        %769 = vrot.lane.b32.xlu0 %v750, 96
        %v770 = vpop.permute.xlu0 %769
        %771 = vrot.lane.b32.xlu0 %v753, 96
        %v772 = vpop.permute.xlu0 %771
        %vm773 = vcmask 64512
        %v774 = vsel %vm773, %v750, 0
        %v776 = vsel %vm773, %v753, 0
        %v778 = vsel %vm773, %v770, 0
        %v780 = vsel %vm773, %v772, 0
        %782 = vmatpush.xpose.msra.mxu0 0.0
        %783 = vmatpush.xpose.msra.mxu0 0.0
        %784 = vmatpush.xpose.msra.mxu0 0.0
        %785 = vmatpush.xpose.msra.mxu0 0.0
        %786 = vmatpush.xpose.msra.mxu0 0.0
        %787 = vmatpush.xpose.msra.mxu0 0.0
        %788 = vmatpush.xpose.msra.mxu0 0.0
        %789 = vmatpush.xpose.msra.mxu0 0.0
        %790 = vmatpush.xpose.msra.mxu0 0.0
        %791 = vmatpush.xpose.msra.mxu0 0.0
        %792 = vmatpush.xpose.msra.mxu0 0.0
        %793 = vmatpush.xpose.msra.mxu0 0.0
        %794 = vmatpush.xpose.msra.mxu0 0.0
        %795 = vmatpush.xpose.msra.mxu0 0.0
        %796 = vmatpush.xpose.msra.mxu0 %v780
        %797 = vmatpush.xpose.msra.mxu0 %v778
        %798 = vmatmul.f32.gmra.mxu0 %v774
        %v799 = vpop.f32.mrf.mxu0
        %v800 = vadd.f32 0.0, %v799
        %801 = vmatmul.f32.gmra.mxu0 %v776
        %v802 = vpop.f32.mrf.mxu0
        %v803 = vadd.f32 0.0, %v802
        %804 = vdwg.mxu0
        %805 = vrot.lane.b32.xlu0 %v758, 96
        %v806 = vpop.permute.xlu0 %805
        %807 = vrot.lane.b32.xlu0 %v760, 96
        %v808 = vpop.permute.xlu0 %807
        %v809 = vsel %vm773, %v758, 0
        %v811 = vsel %vm773, %v760, 0
        %v813 = vsel %vm773, %v806, 0
        %v815 = vsel %vm773, %v808, 0
        %817 = vmatpush.xpose.msra.mxu0 0.0
        %818 = vmatpush.xpose.msra.mxu0 0.0
        %819 = vmatpush.xpose.msra.mxu0 0.0
        %820 = vmatpush.xpose.msra.mxu0 0.0
        %821 = vmatpush.xpose.msra.mxu0 0.0
        %822 = vmatpush.xpose.msra.mxu0 0.0
        %823 = vmatpush.xpose.msra.mxu0 0.0
        %824 = vmatpush.xpose.msra.mxu0 0.0
        %825 = vmatpush.xpose.msra.mxu0 0.0
        %826 = vmatpush.xpose.msra.mxu0 0.0
        %827 = vmatpush.xpose.msra.mxu0 0.0
        %828 = vmatpush.xpose.msra.mxu0 0.0
        %829 = vmatpush.xpose.msra.mxu0 0.0
        %830 = vmatpush.xpose.msra.mxu0 0.0
        %831 = vmatpush.xpose.msra.mxu0 %v815
        %832 = vmatpush.xpose.msra.mxu0 %v813
        %833 = vmatmul.f32.gmra.mxu0 %v809
        %v834 = vpop.f32.mrf.mxu0
        %v835 = vadd.f32 0.0, %v834
        %836 = vmatmul.f32.gmra.mxu0 %v811
        %v837 = vpop.f32.mrf.mxu0
        %v838 = vadd.f32 0.0, %v837
        %839 = vdwg.mxu0
        %840 = vrot.lane.b32.xlu0 %v762, 96
        %v841 = vpop.permute.xlu0 %840
        %842 = vrot.lane.b32.xlu0 %v764, 96
        %v843 = vpop.permute.xlu0 %842
        %v844 = vsel %vm773, %v762, 0
        %v846 = vsel %vm773, %v764, 0
        %v848 = vsel %vm773, %v841, 0
        %v850 = vsel %vm773, %v843, 0
        %852 = vmatpush.xpose.msra.mxu0 0.0
        %853 = vmatpush.xpose.msra.mxu0 0.0
        %854 = vmatpush.xpose.msra.mxu0 0.0
        %855 = vmatpush.xpose.msra.mxu0 0.0
        %856 = vmatpush.xpose.msra.mxu0 0.0
        %857 = vmatpush.xpose.msra.mxu0 0.0
        %858 = vmatpush.xpose.msra.mxu0 0.0
        %859 = vmatpush.xpose.msra.mxu0 0.0
        %860 = vmatpush.xpose.msra.mxu0 0.0
        %861 = vmatpush.xpose.msra.mxu0 0.0
        %862 = vmatpush.xpose.msra.mxu0 0.0
        %863 = vmatpush.xpose.msra.mxu0 0.0
        %864 = vmatpush.xpose.msra.mxu0 0.0
        %865 = vmatpush.xpose.msra.mxu0 0.0
        %866 = vmatpush.xpose.msra.mxu0 %v850
        %867 = vmatpush.xpose.msra.mxu0 %v848
        %868 = vmatmul.f32.gmra.mxu0 %v844
        %v869 = vpop.f32.mrf.mxu0
        %v870 = vadd.f32 0.0, %v869
        %871 = vmatmul.f32.gmra.mxu0 %v846
        %v872 = vpop.f32.mrf.mxu0
        %v873 = vadd.f32 0.0, %v872
        %874 = vdwg.mxu0
        %875 = vrot.lane.b32.xlu0 %v766, 96
        %v876 = vpop.permute.xlu0 %875
        %877 = vrot.lane.b32.xlu0 %v768, 96
        %v878 = vpop.permute.xlu0 %877
        %v879 = vsel %vm773, %v766, 0
        %v881 = vsel %vm773, %v768, 0
        %v883 = vsel %vm773, %v876, 0
        %v885 = vsel %vm773, %v878, 0
        %887 = vmatpush.xpose.msra.mxu0 0.0
        %888 = vmatpush.xpose.msra.mxu0 0.0
        %889 = vmatpush.xpose.msra.mxu0 0.0
        %890 = vmatpush.xpose.msra.mxu0 0.0
        %891 = vmatpush.xpose.msra.mxu0 0.0
        %892 = vmatpush.xpose.msra.mxu0 0.0
        %893 = vmatpush.xpose.msra.mxu0 0.0
        %894 = vmatpush.xpose.msra.mxu0 0.0
        %895 = vmatpush.xpose.msra.mxu0 0.0
        %896 = vmatpush.xpose.msra.mxu0 0.0
        %897 = vmatpush.xpose.msra.mxu0 0.0
        %898 = vmatpush.xpose.msra.mxu0 0.0
        %899 = vmatpush.xpose.msra.mxu0 0.0
        %900 = vmatpush.xpose.msra.mxu0 0.0
        %901 = vmatpush.xpose.msra.mxu0 %v885
        %902 = vmatpush.xpose.msra.mxu0 %v883
        %903 = vmatmul.f32.gmra.mxu0 %v879
        %v904 = vpop.f32.mrf.mxu0
        %v905 = vadd.f32 0.0, %v904
        %906 = vmatmul.f32.gmra.mxu0 %v881
        %v907 = vpop.f32.mrf.mxu0
        %v908 = vadd.f32 0.0, %v907
        %909 = vdwg.mxu0
        %v910 = vmul.f32 %v800, 0.35355338
        %v911 = vmul.f32 %v803, 0.35355338
        %v912 = vmul.f32 %v835, 0.35355338
        %v913 = vmul.f32 %v838, 0.35355338
        %v914 = vmul.f32 %v870, 0.35355338
        %v915 = vmul.f32 %v873, 0.35355338
        %v916 = vmul.f32 %v905, 0.35355338
        %v917 = vmul.f32 %v908, 0.35355338
        %v918 = vadd.f32 %v910, %v651
        %v919 = vadd.f32 %v911, %v652
        %v920 = vadd.f32 %v912, %v651
        %v921 = vadd.f32 %v913, %v652
        %v922 = vadd.f32 %v914, %v651
        %v923 = vadd.f32 %v915, %v652
        %v924 = vadd.f32 %v916, %v651
        %v925 = vadd.f32 %v917, %v652
        %vm926 = vcmask 72704
        %v927 = vsel %vm926, %v918, -inf
        %928 = vmax.xlane.f32.xlu0 %v927
        %v929 = vpop.xlane.xlu0 %928
        %vm930 = vcmask 65536
        %v931 = vsel %vm930, %v919, -inf
        %932 = vmax.xlane.f32.xlu0 %v931
        %v933 = vpop.xlane.xlu0 %932
        %v934 = vsel %vm926, %v920, -inf
        %935 = vmax.xlane.f32.xlu0 %v934
        %v936 = vpop.xlane.xlu0 %935
        %v937 = vsel %vm930, %v921, -inf
        %938 = vmax.xlane.f32.xlu0 %v937
        %v939 = vpop.xlane.xlu0 %938
        %v940 = vsel %vm926, %v922, -inf
        %941 = vmax.xlane.f32.xlu0 %v940
        %v942 = vpop.xlane.xlu0 %941
        %v943 = vsel %vm930, %v923, -inf
        %944 = vmax.xlane.f32.xlu0 %v943
        %v945 = vpop.xlane.xlu0 %944
        %v946 = vsel %vm926, %v924, -inf
        %947 = vmax.xlane.f32.xlu0 %v946
        %v948 = vpop.xlane.xlu0 %947
        %v949 = vsel %vm930, %v925, -inf
        %950 = vmax.xlane.f32.xlu0 %v949
        %v951 = vpop.xlane.xlu0 %950
        %v952 = vsub.f32 %v918, %v929
        %v953 = vsub.f32 %v919, %v933
        %v954 = vsub.f32 %v920, %v936
        %v955 = vsub.f32 %v921, %v939
        %v956 = vsub.f32 %v922, %v942
        %v957 = vsub.f32 %v923, %v945
        %v958 = vsub.f32 %v924, %v948
        %v959 = vsub.f32 %v925, %v951
        %v960 = vmul.f32 %v952, 1.442695
        %v961 = vpow.pop %v960
        %v962 = vmul.f32 %v953, 1.442695
        %v963 = vpow.pop %v962
        %v964 = vmul.f32 %v954, 1.442695
        %v965 = vpow.pop %v964
        %v966 = vmul.f32 %v955, 1.442695
        %v967 = vpow.pop %v966
        %v968 = vmul.f32 %v956, 1.442695
        %v969 = vpow.pop %v968
        %v970 = vmul.f32 %v957, 1.442695
        %v971 = vpow.pop %v970
        %v972 = vmul.f32 %v958, 1.442695
        %v973 = vpow.pop %v972
        %v974 = vmul.f32 %v959, 1.442695
        %v975 = vpow.pop %v974
        %v976 = vsel %vm926, %v961, 0.0
        %977 = vadd.xlane.f32.xlu0 %v976
        %v978 = vpop.xlane.xlu0 %977
        %v979 = vsel %vm930, %v963, 0.0
        %980 = vadd.xlane.f32.xlu0 %v979
        %v981 = vpop.xlane.xlu0 %980
        %v982 = vsel %vm926, %v965, 0.0
        %983 = vadd.xlane.f32.xlu0 %v982
        %v984 = vpop.xlane.xlu0 %983
        %v985 = vsel %vm930, %v967, 0.0
        %986 = vadd.xlane.f32.xlu0 %v985
        %v987 = vpop.xlane.xlu0 %986
        %v988 = vsel %vm926, %v969, 0.0
        %989 = vadd.xlane.f32.xlu0 %v988
        %v990 = vpop.xlane.xlu0 %989
        %v991 = vsel %vm930, %v971, 0.0
        %992 = vadd.xlane.f32.xlu0 %v991
        %v993 = vpop.xlane.xlu0 %992
        %v994 = vsel %vm926, %v973, 0.0
        %995 = vadd.xlane.f32.xlu0 %v994
        %v996 = vpop.xlane.xlu0 %995
        %v997 = vsel %vm930, %v975, 0.0
        %998 = vadd.xlane.f32.xlu0 %v997
        %v999 = vpop.xlane.xlu0 %998
        %v1000 = vrcp.pop %v978
        %v1001 = vrcp.pop %v981
        %v1002 = vrcp.pop %v984
        %v1003 = vrcp.pop %v987
        %v1004 = vrcp.pop %v990
        %v1005 = vrcp.pop %v993
        %v1006 = vrcp.pop %v996
        %v1007 = vrcp.pop %v999
        %v1008 = vmul.f32 %v961, %v1000
        %v1009 = vmul.f32 %v963, %v1001
        %v1010 = vmul.f32 %v965, %v1002
        %v1011 = vmul.f32 %v967, %v1003
        %v1012 = vmul.f32 %v969, %v1004
        %v1013 = vmul.f32 %v971, %v1005
        %v1014 = vmul.f32 %v973, %v1006
        %v1015 = vmul.f32 %v975, %v1007
        %1016 = vrot.lane.b32.xlu0 %v750, 64
        %v1017 = vpop.permute.xlu0 %1016
        %1018 = vrot.lane.b32.xlu0 %v753, 64
        %v1019 = vpop.permute.xlu0 %1018
        %v1022 = vsel %vm926, %v1008, 0
        %v1025 = vsel %vm926, %v1009, 0
        %vm1027 = vcmask 1040384
        %v1028 = vsel %vm1027, %v1019, 0
        %1030 = vmatpush.msra.mxu0 0.0
        %1031 = vmatpush.msra.mxu0 0.0
        %1032 = vmatpush.msra.mxu0 0.0
        %1033 = vmatpush.msra.mxu0 0.0
        %1034 = vmatpush.msra.mxu0 0.0
        %1035 = vmatpush.msra.mxu0 0.0
        %1036 = vmatpush.msra.mxu0 0.0
        %1037 = vmatpush.msra.mxu0 0.0
        %1038 = vmatpush.msra.mxu0 0.0
        %1039 = vmatpush.msra.mxu0 0.0
        %1040 = vmatpush.msra.mxu0 0.0
        %1041 = vmatpush.msra.mxu0 0.0
        %1042 = vmatpush.msra.mxu0 0.0
        %1043 = vmatpush.msra.mxu0 0.0
        %1044 = vmatpush.msra.mxu0 %v1028
        %1045 = vmatpush.msra.mxu0 %v1017
        %1046 = vmatmul.f32.gmra.mxu0 %v1022
        %v1047 = vpop.f32.mrf.mxu0
        %v1048 = vadd.f32 0.0, %v1047
        %1049 = vmatmul.f32.gmra.mxu0 %v1025
        %v1050 = vpop.f32.mrf.mxu0
        %v1051 = vadd.f32 0.0, %v1050
        %1052 = vdwg.mxu0
        %1053 = vrot.lane.b32.xlu0 %v758, 64
        %v1054 = vpop.permute.xlu0 %1053
        %1055 = vrot.lane.b32.xlu0 %v760, 64
        %v1056 = vpop.permute.xlu0 %1055
        %v1059 = vsel %vm926, %v1010, 0
        %v1062 = vsel %vm926, %v1011, 0
        %v1064 = vsel %vm1027, %v1056, 0
        %1066 = vmatpush.msra.mxu0 0.0
        %1067 = vmatpush.msra.mxu0 0.0
        %1068 = vmatpush.msra.mxu0 0.0
        %1069 = vmatpush.msra.mxu0 0.0
        %1070 = vmatpush.msra.mxu0 0.0
        %1071 = vmatpush.msra.mxu0 0.0
        %1072 = vmatpush.msra.mxu0 0.0
        %1073 = vmatpush.msra.mxu0 0.0
        %1074 = vmatpush.msra.mxu0 0.0
        %1075 = vmatpush.msra.mxu0 0.0
        %1076 = vmatpush.msra.mxu0 0.0
        %1077 = vmatpush.msra.mxu0 0.0
        %1078 = vmatpush.msra.mxu0 0.0
        %1079 = vmatpush.msra.mxu0 0.0
        %1080 = vmatpush.msra.mxu0 %v1064
        %1081 = vmatpush.msra.mxu0 %v1054
        %1082 = vmatmul.f32.gmra.mxu0 %v1059
        %v1083 = vpop.f32.mrf.mxu0
        %v1084 = vadd.f32 0.0, %v1083
        %1085 = vmatmul.f32.gmra.mxu0 %v1062
        %v1086 = vpop.f32.mrf.mxu0
        %v1087 = vadd.f32 0.0, %v1086
        %1088 = vdwg.mxu0
        %1089 = vrot.lane.b32.xlu0 %v762, 64
        %v1090 = vpop.permute.xlu0 %1089
        %1091 = vrot.lane.b32.xlu0 %v764, 64
        %v1092 = vpop.permute.xlu0 %1091
        %v1095 = vsel %vm926, %v1012, 0
        %v1098 = vsel %vm926, %v1013, 0
        %v1100 = vsel %vm1027, %v1092, 0
        %1102 = vmatpush.msra.mxu0 0.0
        %1103 = vmatpush.msra.mxu0 0.0
        %1104 = vmatpush.msra.mxu0 0.0
        %1105 = vmatpush.msra.mxu0 0.0
        %1106 = vmatpush.msra.mxu0 0.0
        %1107 = vmatpush.msra.mxu0 0.0
        %1108 = vmatpush.msra.mxu0 0.0
        %1109 = vmatpush.msra.mxu0 0.0
        %1110 = vmatpush.msra.mxu0 0.0
        %1111 = vmatpush.msra.mxu0 0.0
        %1112 = vmatpush.msra.mxu0 0.0
        %1113 = vmatpush.msra.mxu0 0.0
        %1114 = vmatpush.msra.mxu0 0.0
        %1115 = vmatpush.msra.mxu0 0.0
        %1116 = vmatpush.msra.mxu0 %v1100
        %1117 = vmatpush.msra.mxu0 %v1090
        %1118 = vmatmul.f32.gmra.mxu0 %v1095
        %v1119 = vpop.f32.mrf.mxu0
        %v1120 = vadd.f32 0.0, %v1119
        %1121 = vmatmul.f32.gmra.mxu0 %v1098
        %v1122 = vpop.f32.mrf.mxu0
        %v1123 = vadd.f32 0.0, %v1122
        %1124 = vdwg.mxu0
        %1125 = vrot.lane.b32.xlu0 %v766, 64
        %v1126 = vpop.permute.xlu0 %1125
        %1127 = vrot.lane.b32.xlu0 %v768, 64
        %v1128 = vpop.permute.xlu0 %1127
        %v1131 = vsel %vm926, %v1014, 0
        %v1134 = vsel %vm926, %v1015, 0
        %v1136 = vsel %vm1027, %v1128, 0
        %1138 = vmatpush.msra.mxu0 0.0
        %1139 = vmatpush.msra.mxu0 0.0
        %1140 = vmatpush.msra.mxu0 0.0
        %1141 = vmatpush.msra.mxu0 0.0
        %1142 = vmatpush.msra.mxu0 0.0
        %1143 = vmatpush.msra.mxu0 0.0
        %1144 = vmatpush.msra.mxu0 0.0
        %1145 = vmatpush.msra.mxu0 0.0
        %1146 = vmatpush.msra.mxu0 0.0
        %1147 = vmatpush.msra.mxu0 0.0
        %1148 = vmatpush.msra.mxu0 0.0
        %1149 = vmatpush.msra.mxu0 0.0
        %1150 = vmatpush.msra.mxu0 0.0
        %1151 = vmatpush.msra.mxu0 0.0
        %1152 = vmatpush.msra.mxu0 %v1136
        %1153 = vmatpush.msra.mxu0 %v1126
        %1154 = vmatmul.f32.gmra.mxu0 %v1131
        %v1155 = vpop.f32.mrf.mxu0
        %v1156 = vadd.f32 0.0, %v1155
        %1157 = vmatmul.f32.gmra.mxu0 %v1134
        %v1158 = vpop.f32.mrf.mxu0
        %v1159 = vadd.f32 0.0, %v1158
        %1160 = vdwg.mxu0
        %v1161 = vld [vmem:[%s7] sm:$0xff]
        %v1162 = vld [vmem:[%s7 + $0x8] sm:$0xff]
        %v1163 = vld [vmem:[%s7 + $0x10] sm:$0xff]
        %v1164 = vld [vmem:[%s7 + $0x18] sm:$0xff]
        %v1166 = vsel %vm773, %v1048, 0
        %v1169 = vsel %vm773, %v1051, 0
        %1171 = vmatpush.msra.mxu0 0.0
        %1172 = vmatpush.msra.mxu0 0.0
        %1173 = vmatpush.msra.mxu0 0.0
        %1174 = vmatpush.msra.mxu0 0.0
        %1175 = vmatpush.msra.mxu0 0.0
        %1176 = vmatpush.msra.mxu0 0.0
        %1177 = vmatpush.msra.mxu0 0.0
        %1178 = vmatpush.msra.mxu0 0.0
        %1179 = vmatpush.msra.mxu0 0.0
        %1180 = vmatpush.msra.mxu0 0.0
        %1181 = vmatpush.msra.mxu0 0.0
        %1182 = vmatpush.msra.mxu0 0.0
        %1183 = vmatpush.msra.mxu0 0.0
        %1184 = vmatpush.msra.mxu0 0.0
        %1185 = vmatpush.msra.mxu0 0.0
        %1186 = vmatpush.msra.mxu0 %v1161
        %1187 = vmatmul.f32.gmra.mxu0 %v1166
        %v1188 = vpop.f32.mrf.mxu0
        %v1189 = vadd.f32 0.0, %v1188
        %1190 = vmatmul.f32.gmra.mxu0 %v1169
        %v1191 = vpop.f32.mrf.mxu0
        %v1192 = vadd.f32 0.0, %v1191
        %1193 = vdwg.mxu0
        %v1195 = vsel %vm773, %v1084, 0
        %v1198 = vsel %vm773, %v1087, 0
        %1200 = vmatpush.msra.mxu0 0.0
        %1201 = vmatpush.msra.mxu0 0.0
        %1202 = vmatpush.msra.mxu0 0.0
        %1203 = vmatpush.msra.mxu0 0.0
        %1204 = vmatpush.msra.mxu0 0.0
        %1205 = vmatpush.msra.mxu0 0.0
        %1206 = vmatpush.msra.mxu0 0.0
        %1207 = vmatpush.msra.mxu0 0.0
        %1208 = vmatpush.msra.mxu0 0.0
        %1209 = vmatpush.msra.mxu0 0.0
        %1210 = vmatpush.msra.mxu0 0.0
        %1211 = vmatpush.msra.mxu0 0.0
        %1212 = vmatpush.msra.mxu0 0.0
        %1213 = vmatpush.msra.mxu0 0.0
        %1214 = vmatpush.msra.mxu0 0.0
        %1215 = vmatpush.msra.mxu0 %v1162
        %1216 = vmatmul.f32.gmra.mxu0 %v1195
        %v1217 = vpop.f32.mrf.mxu0
        %v1218 = vadd.f32 0.0, %v1217
        %1219 = vmatmul.f32.gmra.mxu0 %v1198
        %v1220 = vpop.f32.mrf.mxu0
        %v1221 = vadd.f32 0.0, %v1220
        %1222 = vdwg.mxu0
        %v1224 = vsel %vm773, %v1120, 0
        %v1227 = vsel %vm773, %v1123, 0
        %1229 = vmatpush.msra.mxu0 0.0
        %1230 = vmatpush.msra.mxu0 0.0
        %1231 = vmatpush.msra.mxu0 0.0
        %1232 = vmatpush.msra.mxu0 0.0
        %1233 = vmatpush.msra.mxu0 0.0
        %1234 = vmatpush.msra.mxu0 0.0
        %1235 = vmatpush.msra.mxu0 0.0
        %1236 = vmatpush.msra.mxu0 0.0
        %1237 = vmatpush.msra.mxu0 0.0
        %1238 = vmatpush.msra.mxu0 0.0
        %1239 = vmatpush.msra.mxu0 0.0
        %1240 = vmatpush.msra.mxu0 0.0
        %1241 = vmatpush.msra.mxu0 0.0
        %1242 = vmatpush.msra.mxu0 0.0
        %1243 = vmatpush.msra.mxu0 0.0
        %1244 = vmatpush.msra.mxu0 %v1163
        %1245 = vmatmul.f32.gmra.mxu0 %v1224
        %v1246 = vpop.f32.mrf.mxu0
        %v1247 = vadd.f32 0.0, %v1246
        %1248 = vmatmul.f32.gmra.mxu0 %v1227
        %v1249 = vpop.f32.mrf.mxu0
        %v1250 = vadd.f32 0.0, %v1249
        %1251 = vdwg.mxu0
        %v1253 = vsel %vm773, %v1156, 0
        %v1256 = vsel %vm773, %v1159, 0
        %1258 = vmatpush.msra.mxu0 0.0
        %1259 = vmatpush.msra.mxu0 0.0
        %1260 = vmatpush.msra.mxu0 0.0
        %1261 = vmatpush.msra.mxu0 0.0
        %1262 = vmatpush.msra.mxu0 0.0
        %1263 = vmatpush.msra.mxu0 0.0
        %1264 = vmatpush.msra.mxu0 0.0
        %1265 = vmatpush.msra.mxu0 0.0
        %1266 = vmatpush.msra.mxu0 0.0
        %1267 = vmatpush.msra.mxu0 0.0
        %1268 = vmatpush.msra.mxu0 0.0
        %1269 = vmatpush.msra.mxu0 0.0
        %1270 = vmatpush.msra.mxu0 0.0
        %1271 = vmatpush.msra.mxu0 0.0
        %1272 = vmatpush.msra.mxu0 0.0
        %1273 = vmatpush.msra.mxu0 %v1164
        %1274 = vmatmul.f32.gmra.mxu0 %v1253
        %v1275 = vpop.f32.mrf.mxu0
        %v1276 = vadd.f32 0.0, %v1275
        %1277 = vmatmul.f32.gmra.mxu0 %v1256
        %v1278 = vpop.f32.mrf.mxu0
        %v1279 = vadd.f32 0.0, %v1278
        %1280 = vdwg.mxu0
        %v1281 = vsel %vm655, %v1189, 0.0
        %v1282 = vsel %vm655, %v1218, 0.0
        %v1283 = vadd.f32 %v1281, %v1282
        %v1284 = vsel %vm655, %v1247, 0.0
        %v1285 = vadd.f32 %v1283, %v1284
        %v1286 = vsel %vm655, %v1276, 0.0
        %v1287 = vadd.f32 %v1285, %v1286
        %v1288 = vsel %vm659, %v1192, 0.0
        %v1289 = vsel %vm659, %v1221, 0.0
        %v1290 = vadd.f32 %v1288, %v1289
        %v1291 = vsel %vm659, %v1250, 0.0
        %v1292 = vadd.f32 %v1290, %v1291
        %v1293 = vsel %vm659, %v1279, 0.0
        %v1294 = vadd.f32 %v1292, %v1293
        %v1295 = vld [vmem:[%s8] sm:$0x1]
        %v1297 = vperm.slane %v1295, 0
        %v1299 = vadd.f32 %v1287, %v1297
        %v1300 = vadd.f32 %v1294, %v1297
        %v1301 = vadd.f32 %v629, %v1299
        %v1302 = vadd.f32 %v630, %v1300
        %v1303 = vld [vmem:[%s9] sm:$0x1]
        %v1304 = vld [vmem:[%s10] sm:$0x1]
        %v1305 = vsel %vm655, %v1301, 0.0
        %1306 = vadd.xlane.f32.xlu0 %v1305
        %v1307 = vpop.xlane.xlu0 %1306
        %v1308 = vsel %vm659, %v1302, 0.0
        %1309 = vadd.xlane.f32.xlu0 %v1308
        %v1310 = vpop.xlane.xlu0 %1309
        %v1311 = vmul.f32 %v1307, %v669
        %v1312 = vmul.f32 %v1310, %v669
        %v1313 = vsub.f32 %v1301, %v1311
        %v1314 = vsub.f32 %v1302, %v1312
        %v1315 = vmul.f32 %v1313, %v1313
        %v1316 = vmul.f32 %v1314, %v1314
        %v1317 = vsel %vm655, %v1315, 0.0
        %1318 = vadd.xlane.f32.xlu0 %v1317
        %v1319 = vpop.xlane.xlu0 %1318
        %v1320 = vsel %vm659, %v1316, 0.0
        %1321 = vadd.xlane.f32.xlu0 %v1320
        %v1322 = vpop.xlane.xlu0 %1321
        %v1323 = vmul.f32 %v1319, %v669
        %v1324 = vmul.f32 %v1322, %v669
        %v1325 = vadd.f32 %v1323, 1e-05
        %v1326 = vadd.f32 %v1324, 1e-05
        %v1327 = vrsqrt.pop %v1325
        %v1328 = vmul.f32 %v1327, %v1325
        %v1329 = vmul.f32 %v1328, %v1327
        %v1330 = vmul.f32 0.5, %v1329
        %v1331 = vsub.f32 1.5, %v1330
        %v1332 = vmul.f32 %v1327, %v1331
        %vm1333 = vweird.f32 %v1325
        %vm1334 = vweird.f32 %v1327
        %vm1335 = vmor %vm1333, %vm1334
        %v1336 = vsel %vm1335, %v1327, %v1332
        %v1337 = vrsqrt.pop %v1326
        %v1338 = vmul.f32 %v1337, %v1326
        %v1339 = vmul.f32 %v1338, %v1337
        %v1340 = vmul.f32 0.5, %v1339
        %v1341 = vsub.f32 1.5, %v1340
        %v1342 = vmul.f32 %v1337, %v1341
        %vm1343 = vweird.f32 %v1326
        %vm1344 = vweird.f32 %v1337
        %vm1345 = vmor %vm1343, %vm1344
        %v1346 = vsel %vm1345, %v1337, %v1342
        %v1347 = vmul.f32 %v1313, %v1336
        %v1348 = vmul.f32 %v1314, %v1346
        %v1350 = vperm.slane %v1303, 0
        %v1352 = vmul.f32 %v1347, %v1350
        %v1353 = vmul.f32 %v1348, %v1350
        %v1355 = vperm.slane %v1304, 0
        %v1357 = vadd.f32 %v1352, %v1355
        %v1358 = vadd.f32 %v1353, %v1355
        %v1359 = vld [vmem:[%s11] sm:$0xff]
        %v1360 = vld [vmem:[%s11 + $0x8] sm:$0xff]
        %v1361 = vld [vmem:[%s11 + $0x10] sm:$0xff]
        %v1362 = vld [vmem:[%s11 + $0x18] sm:$0xff]
        %v1363 = vld [vmem:[%s12] sm:$0x1]
        %v1365 = vperm.slane %v1363, 0
        %v1368 = vsel %vm655, %v1357, 0
        %v1371 = vsel %vm655, %v1358, 0
        %1373 = vmatpush.msra.mxu0 0.0
        %1374 = vmatpush.msra.mxu0 0.0
        %1375 = vmatpush.msra.mxu0 0.0
        %1376 = vmatpush.msra.mxu0 0.0
        %1377 = vmatpush.msra.mxu0 0.0
        %1378 = vmatpush.msra.mxu0 0.0
        %1379 = vmatpush.msra.mxu0 0.0
        %1380 = vmatpush.msra.mxu0 0.0
        %1381 = vmatpush.msra.mxu0 0.0
        %1382 = vmatpush.msra.mxu0 0.0
        %1383 = vmatpush.msra.mxu0 0.0
        %1384 = vmatpush.msra.mxu0 0.0
        %1385 = vmatpush.msra.mxu0 %v1362
        %1386 = vmatpush.msra.mxu0 %v1361
        %1387 = vmatpush.msra.mxu0 %v1360
        %1388 = vmatpush.msra.mxu0 %v1359
        %1389 = vmatmul.f32.gmra.mxu0 %v1368
        %v1390 = vpop.f32.mrf.mxu0
        %v1391 = vadd.f32 %v1365, %v1390
        %1392 = vmatmul.f32.gmra.mxu0 %v1371
        %v1393 = vpop.f32.mrf.mxu0
        %v1394 = vadd.f32 %v1365, %v1393
        %1395 = vdwg.mxu0
        %v1396 = vmul.f32 %v1391, 0.5
        %v1397 = vmul.f32 %v1394, 0.5
        %v1398 = vmul.f32 %v1391, 0.044715
        %v1399 = vmul.f32 %v1394, 0.044715
        %v1400 = vmul.f32 %v1398, %v1391
        %v1401 = vmul.f32 %v1399, %v1394
        %v1402 = vmul.f32 %v1400, %v1391
        %v1403 = vmul.f32 %v1401, %v1394
        %v1404 = vadd.f32 %v1391, %v1402
        %v1405 = vadd.f32 %v1394, %v1403
        %v1406 = vmul.f32 %v1404, 0.7978846
        %v1407 = vmul.f32 %v1405, 0.7978846
        %v1408 = vtanh.pop %v1406
        %v1409 = vtanh.pop %v1407
        %v1410 = vadd.f32 %v1408, 1.0
        %v1411 = vadd.f32 %v1409, 1.0
        %v1412 = vmul.f32 %v1396, %v1410
        %v1413 = vmul.f32 %v1397, %v1411
        %v1414 = vld [vmem:[%s13] sm:$0xff]
        %v1415 = vld [vmem:[%s13 + $0x8] sm:$0xff]
        %v1416 = vld [vmem:[%s13 + $0x10] sm:$0xff]
        %v1417 = vld [vmem:[%s13 + $0x18] sm:$0xff]
        %v1418 = vld [vmem:[%s13 + $0x20] sm:$0xff]
        %v1419 = vld [vmem:[%s13 + $0x28] sm:$0xff]
        %v1420 = vld [vmem:[%s13 + $0x30] sm:$0xff]
        %v1421 = vld [vmem:[%s13 + $0x38] sm:$0xff]
        %v1422 = vld [vmem:[%s13 + $0x40] sm:$0xff]
        %v1423 = vld [vmem:[%s13 + $0x48] sm:$0xff]
        %v1424 = vld [vmem:[%s13 + $0x50] sm:$0xff]
        %v1425 = vld [vmem:[%s13 + $0x58] sm:$0xff]
        %v1426 = vld [vmem:[%s13 + $0x60] sm:$0xff]
        %v1427 = vld [vmem:[%s13 + $0x68] sm:$0xff]
        %v1428 = vld [vmem:[%s13 + $0x70] sm:$0xff]
        %v1429 = vld [vmem:[%s13 + $0x78] sm:$0xff]
        %v1430 = vld [vmem:[%s14] sm:$0x1]
        %v1432 = vperm.slane %v1430, 0
        %1434 = vmatpush.msra.mxu0 %v1429
        %1435 = vmatpush.msra.mxu0 %v1428
        %1436 = vmatpush.msra.mxu0 %v1427
        %1437 = vmatpush.msra.mxu0 %v1426
        %1438 = vmatpush.msra.mxu0 %v1425
        %1439 = vmatpush.msra.mxu0 %v1424
        %1440 = vmatpush.msra.mxu0 %v1423
        %1441 = vmatpush.msra.mxu0 %v1422
        %1442 = vmatpush.msra.mxu0 %v1421
        %1443 = vmatpush.msra.mxu0 %v1420
        %1444 = vmatpush.msra.mxu0 %v1419
        %1445 = vmatpush.msra.mxu0 %v1418
        %1446 = vmatpush.msra.mxu0 %v1417
        %1447 = vmatpush.msra.mxu0 %v1416
        %1448 = vmatpush.msra.mxu0 %v1415
        %1449 = vmatpush.msra.mxu0 %v1414
        %1450 = vmatmul.f32.gmra.mxu0 %v1412
        %v1451 = vpop.f32.mrf.mxu0
        %v1452 = vadd.f32 %v1432, %v1451
        %1453 = vmatmul.f32.gmra.mxu0 %v1413
        %v1454 = vpop.f32.mrf.mxu0
        %v1455 = vadd.f32 %v1432, %v1454
        %1456 = vdwg.mxu0
        %v1457 = vadd.f32 %v1301, %v1452
        %v1458 = vadd.f32 %v1302, %v1455
        %s1459 = scalar_lea.vmem %s3, 1
        %v1460 = vld [vmem:[%s1459] sm:$0x1]
        %s1461 = scalar_lea.vmem %s4, 1
        %v1462 = vld [vmem:[%s1461] sm:$0x1]
        %v1463 = vsel %vm655, %v1457, 0.0
        %1464 = vadd.xlane.f32.xlu0 %v1463
        %v1465 = vpop.xlane.xlu0 %1464
        %v1466 = vsel %vm659, %v1458, 0.0
        %1467 = vadd.xlane.f32.xlu0 %v1466
        %v1468 = vpop.xlane.xlu0 %1467
        %v1469 = vmul.f32 %v1465, %v669
        %v1470 = vmul.f32 %v1468, %v669
        %v1471 = vsub.f32 %v1457, %v1469
        %v1472 = vsub.f32 %v1458, %v1470
        %v1473 = vmul.f32 %v1471, %v1471
        %v1474 = vmul.f32 %v1472, %v1472
        %v1475 = vsel %vm655, %v1473, 0.0
        %1476 = vadd.xlane.f32.xlu0 %v1475
        %v1477 = vpop.xlane.xlu0 %1476
        %v1478 = vsel %vm659, %v1474, 0.0
        %1479 = vadd.xlane.f32.xlu0 %v1478
        %v1480 = vpop.xlane.xlu0 %1479
        %v1481 = vmul.f32 %v1477, %v669
        %v1482 = vmul.f32 %v1480, %v669
        %v1483 = vadd.f32 %v1481, 1e-05
        %v1484 = vadd.f32 %v1482, 1e-05
        %v1485 = vrsqrt.pop %v1483
        %v1486 = vmul.f32 %v1485, %v1483
        %v1487 = vmul.f32 %v1486, %v1485
        %v1488 = vmul.f32 0.5, %v1487
        %v1489 = vsub.f32 1.5, %v1488
        %v1490 = vmul.f32 %v1485, %v1489
        %vm1491 = vweird.f32 %v1483
        %vm1492 = vweird.f32 %v1485
        %vm1493 = vmor %vm1491, %vm1492
        %v1494 = vsel %vm1493, %v1485, %v1490
        %v1495 = vrsqrt.pop %v1484
        %v1496 = vmul.f32 %v1495, %v1484
        %v1497 = vmul.f32 %v1496, %v1495
        %v1498 = vmul.f32 0.5, %v1497
        %v1499 = vsub.f32 1.5, %v1498
        %v1500 = vmul.f32 %v1495, %v1499
        %vm1501 = vweird.f32 %v1484
        %vm1502 = vweird.f32 %v1495
        %vm1503 = vmor %vm1501, %vm1502
        %v1504 = vsel %vm1503, %v1495, %v1500
        %v1505 = vmul.f32 %v1471, %v1494
        %v1506 = vmul.f32 %v1472, %v1504
        %v1508 = vperm.slane %v1460, 0
        %v1510 = vmul.f32 %v1505, %v1508
        %v1511 = vmul.f32 %v1506, %v1508
        %v1513 = vperm.slane %v1462, 0
        %v1515 = vadd.f32 %v1510, %v1513
        %v1516 = vadd.f32 %v1511, %v1513
        %s1517 = scalar_lea.vmem %s5, 32
        %v1518 = vld [vmem:[%s1517] sm:$0xff]
        %v1519 = vld [vmem:[%s1517 + $0x8] sm:$0xff]
        %v1520 = vld [vmem:[%s1517 + $0x10] sm:$0xff]
        %v1521 = vld [vmem:[%s1517 + $0x18] sm:$0xff]
        %s1522 = scalar_lea.vmem %s6, 1
        %v1523 = vld [vmem:[%s1522] sm:$0x1]
        %v1525 = vperm.slane %v1523, 0
        %v1528 = vsel %vm655, %v1515, 0
        %v1531 = vsel %vm655, %v1516, 0
        %1533 = vmatpush.msra.mxu0 0.0
        %1534 = vmatpush.msra.mxu0 0.0
        %1535 = vmatpush.msra.mxu0 0.0
        %1536 = vmatpush.msra.mxu0 0.0
        %1537 = vmatpush.msra.mxu0 0.0
        %1538 = vmatpush.msra.mxu0 0.0
        %1539 = vmatpush.msra.mxu0 0.0
        %1540 = vmatpush.msra.mxu0 0.0
        %1541 = vmatpush.msra.mxu0 0.0
        %1542 = vmatpush.msra.mxu0 0.0
        %1543 = vmatpush.msra.mxu0 0.0
        %1544 = vmatpush.msra.mxu0 0.0
        %1545 = vmatpush.msra.mxu0 %v1521
        %1546 = vmatpush.msra.mxu0 %v1520
        %1547 = vmatpush.msra.mxu0 %v1519
        %1548 = vmatpush.msra.mxu0 %v1518
        %1549 = vmatmul.f32.gmra.mxu0 %v1528
        %v1550 = vpop.f32.mrf.mxu0
        %v1551 = vadd.f32 %v1525, %v1550
        %1552 = vmatmul.f32.gmra.mxu0 %v1531
        %v1553 = vpop.f32.mrf.mxu0
        %v1554 = vadd.f32 %v1525, %v1553
        %1555 = vdwg.mxu0
        %1558 = vrot.lane.b32.xlu0 %v1551, 120
        %v1559 = vpop.permute.xlu0 %1558
        %1560 = vrot.lane.b32.xlu0 %v1554, 120
        %v1561 = vpop.permute.xlu0 %1560
        %1562 = vrot.lane.b32.xlu0 %v1551, 112
        %v1563 = vpop.permute.xlu0 %1562
        %1564 = vrot.lane.b32.xlu0 %v1554, 112
        %v1565 = vpop.permute.xlu0 %1564
        %1566 = vrot.lane.b32.xlu0 %v1551, 104
        %v1567 = vpop.permute.xlu0 %1566
        %1568 = vrot.lane.b32.xlu0 %v1554, 104
        %v1569 = vpop.permute.xlu0 %1568
        %1570 = vrot.lane.b32.xlu0 %v1551, 96
        %v1571 = vpop.permute.xlu0 %1570
        %1572 = vrot.lane.b32.xlu0 %v1554, 96
        %v1573 = vpop.permute.xlu0 %1572
        %v1574 = vsel %vm773, %v1551, 0
        %v1576 = vsel %vm773, %v1554, 0
        %v1578 = vsel %vm773, %v1571, 0
        %v1580 = vsel %vm773, %v1573, 0
        %1582 = vmatpush.xpose.msra.mxu0 0.0
        %1583 = vmatpush.xpose.msra.mxu0 0.0
        %1584 = vmatpush.xpose.msra.mxu0 0.0
        %1585 = vmatpush.xpose.msra.mxu0 0.0
        %1586 = vmatpush.xpose.msra.mxu0 0.0
        %1587 = vmatpush.xpose.msra.mxu0 0.0
        %1588 = vmatpush.xpose.msra.mxu0 0.0
        %1589 = vmatpush.xpose.msra.mxu0 0.0
        %1590 = vmatpush.xpose.msra.mxu0 0.0
        %1591 = vmatpush.xpose.msra.mxu0 0.0
        %1592 = vmatpush.xpose.msra.mxu0 0.0
        %1593 = vmatpush.xpose.msra.mxu0 0.0
        %1594 = vmatpush.xpose.msra.mxu0 0.0
        %1595 = vmatpush.xpose.msra.mxu0 0.0
        %1596 = vmatpush.xpose.msra.mxu0 %v1580
        %1597 = vmatpush.xpose.msra.mxu0 %v1578
        %1598 = vmatmul.f32.gmra.mxu0 %v1574
        %v1599 = vpop.f32.mrf.mxu0
        %v1600 = vadd.f32 0.0, %v1599
        %1601 = vmatmul.f32.gmra.mxu0 %v1576
        %v1602 = vpop.f32.mrf.mxu0
        %v1603 = vadd.f32 0.0, %v1602
        %1604 = vdwg.mxu0
        %1605 = vrot.lane.b32.xlu0 %v1559, 96
        %v1606 = vpop.permute.xlu0 %1605
        %1607 = vrot.lane.b32.xlu0 %v1561, 96
        %v1608 = vpop.permute.xlu0 %1607
        %v1609 = vsel %vm773, %v1559, 0
        %v1611 = vsel %vm773, %v1561, 0
        %v1613 = vsel %vm773, %v1606, 0
        %v1615 = vsel %vm773, %v1608, 0
        %1617 = vmatpush.xpose.msra.mxu0 0.0
        %1618 = vmatpush.xpose.msra.mxu0 0.0
        %1619 = vmatpush.xpose.msra.mxu0 0.0
        %1620 = vmatpush.xpose.msra.mxu0 0.0
        %1621 = vmatpush.xpose.msra.mxu0 0.0
        %1622 = vmatpush.xpose.msra.mxu0 0.0
        %1623 = vmatpush.xpose.msra.mxu0 0.0
        %1624 = vmatpush.xpose.msra.mxu0 0.0
        %1625 = vmatpush.xpose.msra.mxu0 0.0
        %1626 = vmatpush.xpose.msra.mxu0 0.0
        %1627 = vmatpush.xpose.msra.mxu0 0.0
        %1628 = vmatpush.xpose.msra.mxu0 0.0
        %1629 = vmatpush.xpose.msra.mxu0 0.0
        %1630 = vmatpush.xpose.msra.mxu0 0.0
        %1631 = vmatpush.xpose.msra.mxu0 %v1615
        %1632 = vmatpush.xpose.msra.mxu0 %v1613
        %1633 = vmatmul.f32.gmra.mxu0 %v1609
        %v1634 = vpop.f32.mrf.mxu0
        %v1635 = vadd.f32 0.0, %v1634
        %1636 = vmatmul.f32.gmra.mxu0 %v1611
        %v1637 = vpop.f32.mrf.mxu0
        %v1638 = vadd.f32 0.0, %v1637
        %1639 = vdwg.mxu0
        %1640 = vrot.lane.b32.xlu0 %v1563, 96
        %v1641 = vpop.permute.xlu0 %1640
        %1642 = vrot.lane.b32.xlu0 %v1565, 96
        %v1643 = vpop.permute.xlu0 %1642
        %v1644 = vsel %vm773, %v1563, 0
        %v1646 = vsel %vm773, %v1565, 0
        %v1648 = vsel %vm773, %v1641, 0
        %v1650 = vsel %vm773, %v1643, 0
        %1652 = vmatpush.xpose.msra.mxu0 0.0
        %1653 = vmatpush.xpose.msra.mxu0 0.0
        %1654 = vmatpush.xpose.msra.mxu0 0.0
        %1655 = vmatpush.xpose.msra.mxu0 0.0
        %1656 = vmatpush.xpose.msra.mxu0 0.0
        %1657 = vmatpush.xpose.msra.mxu0 0.0
        %1658 = vmatpush.xpose.msra.mxu0 0.0
        %1659 = vmatpush.xpose.msra.mxu0 0.0
        %1660 = vmatpush.xpose.msra.mxu0 0.0
        %1661 = vmatpush.xpose.msra.mxu0 0.0
        %1662 = vmatpush.xpose.msra.mxu0 0.0
        %1663 = vmatpush.xpose.msra.mxu0 0.0
        %1664 = vmatpush.xpose.msra.mxu0 0.0
        %1665 = vmatpush.xpose.msra.mxu0 0.0
        %1666 = vmatpush.xpose.msra.mxu0 %v1650
        %1667 = vmatpush.xpose.msra.mxu0 %v1648
        %1668 = vmatmul.f32.gmra.mxu0 %v1644
        %v1669 = vpop.f32.mrf.mxu0
        %v1670 = vadd.f32 0.0, %v1669
        %1671 = vmatmul.f32.gmra.mxu0 %v1646
        %v1672 = vpop.f32.mrf.mxu0
        %v1673 = vadd.f32 0.0, %v1672
        %1674 = vdwg.mxu0
        %1675 = vrot.lane.b32.xlu0 %v1567, 96
        %v1676 = vpop.permute.xlu0 %1675
        %1677 = vrot.lane.b32.xlu0 %v1569, 96
        %v1678 = vpop.permute.xlu0 %1677
        %v1679 = vsel %vm773, %v1567, 0
        %v1681 = vsel %vm773, %v1569, 0
        %v1683 = vsel %vm773, %v1676, 0
        %v1685 = vsel %vm773, %v1678, 0
        %1687 = vmatpush.xpose.msra.mxu0 0.0
        %1688 = vmatpush.xpose.msra.mxu0 0.0
        %1689 = vmatpush.xpose.msra.mxu0 0.0
        %1690 = vmatpush.xpose.msra.mxu0 0.0
        %1691 = vmatpush.xpose.msra.mxu0 0.0
        %1692 = vmatpush.xpose.msra.mxu0 0.0
        %1693 = vmatpush.xpose.msra.mxu0 0.0
        %1694 = vmatpush.xpose.msra.mxu0 0.0
        %1695 = vmatpush.xpose.msra.mxu0 0.0
        %1696 = vmatpush.xpose.msra.mxu0 0.0
        %1697 = vmatpush.xpose.msra.mxu0 0.0
        %1698 = vmatpush.xpose.msra.mxu0 0.0
        %1699 = vmatpush.xpose.msra.mxu0 0.0
        %1700 = vmatpush.xpose.msra.mxu0 0.0
        %1701 = vmatpush.xpose.msra.mxu0 %v1685
        %1702 = vmatpush.xpose.msra.mxu0 %v1683
        %1703 = vmatmul.f32.gmra.mxu0 %v1679
        %v1704 = vpop.f32.mrf.mxu0
        %v1705 = vadd.f32 0.0, %v1704
        %1706 = vmatmul.f32.gmra.mxu0 %v1681
        %v1707 = vpop.f32.mrf.mxu0
        %v1708 = vadd.f32 0.0, %v1707
        %1709 = vdwg.mxu0
        %v1710 = vmul.f32 %v1600, 0.35355338
        %v1711 = vmul.f32 %v1603, 0.35355338
        %v1712 = vmul.f32 %v1635, 0.35355338
        %v1713 = vmul.f32 %v1638, 0.35355338
        %v1714 = vmul.f32 %v1670, 0.35355338
        %v1715 = vmul.f32 %v1673, 0.35355338
        %v1716 = vmul.f32 %v1705, 0.35355338
        %v1717 = vmul.f32 %v1708, 0.35355338
        %v1718 = vadd.f32 %v1710, %v651
        %v1719 = vadd.f32 %v1711, %v652
        %v1720 = vadd.f32 %v1712, %v651
        %v1721 = vadd.f32 %v1713, %v652
        %v1722 = vadd.f32 %v1714, %v651
        %v1723 = vadd.f32 %v1715, %v652
        %v1724 = vadd.f32 %v1716, %v651
        %v1725 = vadd.f32 %v1717, %v652
        %v1726 = vsel %vm926, %v1718, -inf
        %1727 = vmax.xlane.f32.xlu0 %v1726
        %v1728 = vpop.xlane.xlu0 %1727
        %v1729 = vsel %vm930, %v1719, -inf
        %1730 = vmax.xlane.f32.xlu0 %v1729
        %v1731 = vpop.xlane.xlu0 %1730
        %v1732 = vsel %vm926, %v1720, -inf
        %1733 = vmax.xlane.f32.xlu0 %v1732
        %v1734 = vpop.xlane.xlu0 %1733
        %v1735 = vsel %vm930, %v1721, -inf
        %1736 = vmax.xlane.f32.xlu0 %v1735
        %v1737 = vpop.xlane.xlu0 %1736
        %v1738 = vsel %vm926, %v1722, -inf
        %1739 = vmax.xlane.f32.xlu0 %v1738
        %v1740 = vpop.xlane.xlu0 %1739
        %v1741 = vsel %vm930, %v1723, -inf
        %1742 = vmax.xlane.f32.xlu0 %v1741
        %v1743 = vpop.xlane.xlu0 %1742
        %v1744 = vsel %vm926, %v1724, -inf
        %1745 = vmax.xlane.f32.xlu0 %v1744
        %v1746 = vpop.xlane.xlu0 %1745
        %v1747 = vsel %vm930, %v1725, -inf
        %1748 = vmax.xlane.f32.xlu0 %v1747
        %v1749 = vpop.xlane.xlu0 %1748
        %v1750 = vsub.f32 %v1718, %v1728
        %v1751 = vsub.f32 %v1719, %v1731
        %v1752 = vsub.f32 %v1720, %v1734
        %v1753 = vsub.f32 %v1721, %v1737
        %v1754 = vsub.f32 %v1722, %v1740
        %v1755 = vsub.f32 %v1723, %v1743
        %v1756 = vsub.f32 %v1724, %v1746
        %v1757 = vsub.f32 %v1725, %v1749
        %v1758 = vmul.f32 %v1750, 1.442695
        %v1759 = vpow.pop %v1758
        %v1760 = vmul.f32 %v1751, 1.442695
        %v1761 = vpow.pop %v1760
        %v1762 = vmul.f32 %v1752, 1.442695
        %v1763 = vpow.pop %v1762
        %v1764 = vmul.f32 %v1753, 1.442695
        %v1765 = vpow.pop %v1764
        %v1766 = vmul.f32 %v1754, 1.442695
        %v1767 = vpow.pop %v1766
        %v1768 = vmul.f32 %v1755, 1.442695
        %v1769 = vpow.pop %v1768
        %v1770 = vmul.f32 %v1756, 1.442695
        %v1771 = vpow.pop %v1770
        %v1772 = vmul.f32 %v1757, 1.442695
        %v1773 = vpow.pop %v1772
        %v1774 = vsel %vm926, %v1759, 0.0
        %1775 = vadd.xlane.f32.xlu0 %v1774
        %v1776 = vpop.xlane.xlu0 %1775
        %v1777 = vsel %vm930, %v1761, 0.0
        %1778 = vadd.xlane.f32.xlu0 %v1777
        %v1779 = vpop.xlane.xlu0 %1778
        %v1780 = vsel %vm926, %v1763, 0.0
        %1781 = vadd.xlane.f32.xlu0 %v1780
        %v1782 = vpop.xlane.xlu0 %1781
        %v1783 = vsel %vm930, %v1765, 0.0
        %1784 = vadd.xlane.f32.xlu0 %v1783
        %v1785 = vpop.xlane.xlu0 %1784
        %v1786 = vsel %vm926, %v1767, 0.0
        %1787 = vadd.xlane.f32.xlu0 %v1786
        %v1788 = vpop.xlane.xlu0 %1787
        %v1789 = vsel %vm930, %v1769, 0.0
        %1790 = vadd.xlane.f32.xlu0 %v1789
        %v1791 = vpop.xlane.xlu0 %1790
        %v1792 = vsel %vm926, %v1771, 0.0
        %1793 = vadd.xlane.f32.xlu0 %v1792
        %v1794 = vpop.xlane.xlu0 %1793
        %v1795 = vsel %vm930, %v1773, 0.0
        %1796 = vadd.xlane.f32.xlu0 %v1795
        %v1797 = vpop.xlane.xlu0 %1796
        %v1798 = vrcp.pop %v1776
        %v1799 = vrcp.pop %v1779
        %v1800 = vrcp.pop %v1782
        %v1801 = vrcp.pop %v1785
        %v1802 = vrcp.pop %v1788
        %v1803 = vrcp.pop %v1791
        %v1804 = vrcp.pop %v1794
        %v1805 = vrcp.pop %v1797
        %v1806 = vmul.f32 %v1759, %v1798
        %v1807 = vmul.f32 %v1761, %v1799
        %v1808 = vmul.f32 %v1763, %v1800
        %v1809 = vmul.f32 %v1765, %v1801
        %v1810 = vmul.f32 %v1767, %v1802
        %v1811 = vmul.f32 %v1769, %v1803
        %v1812 = vmul.f32 %v1771, %v1804
        %v1813 = vmul.f32 %v1773, %v1805
        %1814 = vrot.lane.b32.xlu0 %v1551, 64
        %v1815 = vpop.permute.xlu0 %1814
        %1816 = vrot.lane.b32.xlu0 %v1554, 64
        %v1817 = vpop.permute.xlu0 %1816
        %v1820 = vsel %vm926, %v1806, 0
        %v1823 = vsel %vm926, %v1807, 0
        %v1825 = vsel %vm1027, %v1817, 0
        %1827 = vmatpush.msra.mxu0 0.0
        %1828 = vmatpush.msra.mxu0 0.0
        %1829 = vmatpush.msra.mxu0 0.0
        %1830 = vmatpush.msra.mxu0 0.0
        %1831 = vmatpush.msra.mxu0 0.0
        %1832 = vmatpush.msra.mxu0 0.0
        %1833 = vmatpush.msra.mxu0 0.0
        %1834 = vmatpush.msra.mxu0 0.0
        %1835 = vmatpush.msra.mxu0 0.0
        %1836 = vmatpush.msra.mxu0 0.0
        %1837 = vmatpush.msra.mxu0 0.0
        %1838 = vmatpush.msra.mxu0 0.0
        %1839 = vmatpush.msra.mxu0 0.0
        %1840 = vmatpush.msra.mxu0 0.0
        %1841 = vmatpush.msra.mxu0 %v1825
        %1842 = vmatpush.msra.mxu0 %v1815
        %1843 = vmatmul.f32.gmra.mxu0 %v1820
        %v1844 = vpop.f32.mrf.mxu0
        %v1845 = vadd.f32 0.0, %v1844
        %1846 = vmatmul.f32.gmra.mxu0 %v1823
        %v1847 = vpop.f32.mrf.mxu0
        %v1848 = vadd.f32 0.0, %v1847
        %1849 = vdwg.mxu0
        %1850 = vrot.lane.b32.xlu0 %v1559, 64
        %v1851 = vpop.permute.xlu0 %1850
        %1852 = vrot.lane.b32.xlu0 %v1561, 64
        %v1853 = vpop.permute.xlu0 %1852
        %v1856 = vsel %vm926, %v1808, 0
        %v1859 = vsel %vm926, %v1809, 0
        %v1861 = vsel %vm1027, %v1853, 0
        %1863 = vmatpush.msra.mxu0 0.0
        %1864 = vmatpush.msra.mxu0 0.0
        %1865 = vmatpush.msra.mxu0 0.0
        %1866 = vmatpush.msra.mxu0 0.0
        %1867 = vmatpush.msra.mxu0 0.0
        %1868 = vmatpush.msra.mxu0 0.0
        %1869 = vmatpush.msra.mxu0 0.0
        %1870 = vmatpush.msra.mxu0 0.0
        %1871 = vmatpush.msra.mxu0 0.0
        %1872 = vmatpush.msra.mxu0 0.0
        %1873 = vmatpush.msra.mxu0 0.0
        %1874 = vmatpush.msra.mxu0 0.0
        %1875 = vmatpush.msra.mxu0 0.0
        %1876 = vmatpush.msra.mxu0 0.0
        %1877 = vmatpush.msra.mxu0 %v1861
        %1878 = vmatpush.msra.mxu0 %v1851
        %1879 = vmatmul.f32.gmra.mxu0 %v1856
        %v1880 = vpop.f32.mrf.mxu0
        %v1881 = vadd.f32 0.0, %v1880
        %1882 = vmatmul.f32.gmra.mxu0 %v1859
        %v1883 = vpop.f32.mrf.mxu0
        %v1884 = vadd.f32 0.0, %v1883
        %1885 = vdwg.mxu0
        %1886 = vrot.lane.b32.xlu0 %v1563, 64
        %v1887 = vpop.permute.xlu0 %1886
        %1888 = vrot.lane.b32.xlu0 %v1565, 64
        %v1889 = vpop.permute.xlu0 %1888
        %v1892 = vsel %vm926, %v1810, 0
        %v1895 = vsel %vm926, %v1811, 0
        %v1897 = vsel %vm1027, %v1889, 0
        %1899 = vmatpush.msra.mxu0 0.0
        %1900 = vmatpush.msra.mxu0 0.0
        %1901 = vmatpush.msra.mxu0 0.0
        %1902 = vmatpush.msra.mxu0 0.0
        %1903 = vmatpush.msra.mxu0 0.0
        %1904 = vmatpush.msra.mxu0 0.0
        %1905 = vmatpush.msra.mxu0 0.0
        %1906 = vmatpush.msra.mxu0 0.0
        %1907 = vmatpush.msra.mxu0 0.0
        %1908 = vmatpush.msra.mxu0 0.0
        %1909 = vmatpush.msra.mxu0 0.0
        %1910 = vmatpush.msra.mxu0 0.0
        %1911 = vmatpush.msra.mxu0 0.0
        %1912 = vmatpush.msra.mxu0 0.0
        %1913 = vmatpush.msra.mxu0 %v1897
        %1914 = vmatpush.msra.mxu0 %v1887
        %1915 = vmatmul.f32.gmra.mxu0 %v1892
        %v1916 = vpop.f32.mrf.mxu0
        %v1917 = vadd.f32 0.0, %v1916
        %1918 = vmatmul.f32.gmra.mxu0 %v1895
        %v1919 = vpop.f32.mrf.mxu0
        %v1920 = vadd.f32 0.0, %v1919
        %1921 = vdwg.mxu0
        %1922 = vrot.lane.b32.xlu0 %v1567, 64
        %v1923 = vpop.permute.xlu0 %1922
        %1924 = vrot.lane.b32.xlu0 %v1569, 64
        %v1925 = vpop.permute.xlu0 %1924
        %v1928 = vsel %vm926, %v1812, 0
        %v1931 = vsel %vm926, %v1813, 0
        %v1933 = vsel %vm1027, %v1925, 0
        %1935 = vmatpush.msra.mxu0 0.0
        %1936 = vmatpush.msra.mxu0 0.0
        %1937 = vmatpush.msra.mxu0 0.0
        %1938 = vmatpush.msra.mxu0 0.0
        %1939 = vmatpush.msra.mxu0 0.0
        %1940 = vmatpush.msra.mxu0 0.0
        %1941 = vmatpush.msra.mxu0 0.0
        %1942 = vmatpush.msra.mxu0 0.0
        %1943 = vmatpush.msra.mxu0 0.0
        %1944 = vmatpush.msra.mxu0 0.0
        %1945 = vmatpush.msra.mxu0 0.0
        %1946 = vmatpush.msra.mxu0 0.0
        %1947 = vmatpush.msra.mxu0 0.0
        %1948 = vmatpush.msra.mxu0 0.0
        %1949 = vmatpush.msra.mxu0 %v1933
        %1950 = vmatpush.msra.mxu0 %v1923
        %1951 = vmatmul.f32.gmra.mxu0 %v1928
        %v1952 = vpop.f32.mrf.mxu0
        %v1953 = vadd.f32 0.0, %v1952
        %1954 = vmatmul.f32.gmra.mxu0 %v1931
        %v1955 = vpop.f32.mrf.mxu0
        %v1956 = vadd.f32 0.0, %v1955
        %1957 = vdwg.mxu0
        %s1958 = scalar_lea.vmem %s7, 32
        %v1959 = vld [vmem:[%s1958] sm:$0xff]
        %v1960 = vld [vmem:[%s1958 + $0x8] sm:$0xff]
        %v1961 = vld [vmem:[%s1958 + $0x10] sm:$0xff]
        %v1962 = vld [vmem:[%s1958 + $0x18] sm:$0xff]
        %v1964 = vsel %vm773, %v1845, 0
        %v1967 = vsel %vm773, %v1848, 0
        %1969 = vmatpush.msra.mxu0 0.0
        %1970 = vmatpush.msra.mxu0 0.0
        %1971 = vmatpush.msra.mxu0 0.0
        %1972 = vmatpush.msra.mxu0 0.0
        %1973 = vmatpush.msra.mxu0 0.0
        %1974 = vmatpush.msra.mxu0 0.0
        %1975 = vmatpush.msra.mxu0 0.0
        %1976 = vmatpush.msra.mxu0 0.0
        %1977 = vmatpush.msra.mxu0 0.0
        %1978 = vmatpush.msra.mxu0 0.0
        %1979 = vmatpush.msra.mxu0 0.0
        %1980 = vmatpush.msra.mxu0 0.0
        %1981 = vmatpush.msra.mxu0 0.0
        %1982 = vmatpush.msra.mxu0 0.0
        %1983 = vmatpush.msra.mxu0 0.0
        %1984 = vmatpush.msra.mxu0 %v1959
        %1985 = vmatmul.f32.gmra.mxu0 %v1964
        %v1986 = vpop.f32.mrf.mxu0
        %v1987 = vadd.f32 0.0, %v1986
        %1988 = vmatmul.f32.gmra.mxu0 %v1967
        %v1989 = vpop.f32.mrf.mxu0
        %v1990 = vadd.f32 0.0, %v1989
        %1991 = vdwg.mxu0
        %v1993 = vsel %vm773, %v1881, 0
        %v1996 = vsel %vm773, %v1884, 0
        %1998 = vmatpush.msra.mxu0 0.0
        %1999 = vmatpush.msra.mxu0 0.0
        %2000 = vmatpush.msra.mxu0 0.0
        %2001 = vmatpush.msra.mxu0 0.0
        %2002 = vmatpush.msra.mxu0 0.0
        %2003 = vmatpush.msra.mxu0 0.0
        %2004 = vmatpush.msra.mxu0 0.0
        %2005 = vmatpush.msra.mxu0 0.0
        %2006 = vmatpush.msra.mxu0 0.0
        %2007 = vmatpush.msra.mxu0 0.0
        %2008 = vmatpush.msra.mxu0 0.0
        %2009 = vmatpush.msra.mxu0 0.0
        %2010 = vmatpush.msra.mxu0 0.0
        %2011 = vmatpush.msra.mxu0 0.0
        %2012 = vmatpush.msra.mxu0 0.0
        %2013 = vmatpush.msra.mxu0 %v1960
        %2014 = vmatmul.f32.gmra.mxu0 %v1993
        %v2015 = vpop.f32.mrf.mxu0
        %v2016 = vadd.f32 0.0, %v2015
        %2017 = vmatmul.f32.gmra.mxu0 %v1996
        %v2018 = vpop.f32.mrf.mxu0
        %v2019 = vadd.f32 0.0, %v2018
        %2020 = vdwg.mxu0
        %v2022 = vsel %vm773, %v1917, 0
        %v2025 = vsel %vm773, %v1920, 0
        %2027 = vmatpush.msra.mxu0 0.0
        %2028 = vmatpush.msra.mxu0 0.0
        %2029 = vmatpush.msra.mxu0 0.0
        %2030 = vmatpush.msra.mxu0 0.0
        %2031 = vmatpush.msra.mxu0 0.0
        %2032 = vmatpush.msra.mxu0 0.0
        %2033 = vmatpush.msra.mxu0 0.0
        %2034 = vmatpush.msra.mxu0 0.0
        %2035 = vmatpush.msra.mxu0 0.0
        %2036 = vmatpush.msra.mxu0 0.0
        %2037 = vmatpush.msra.mxu0 0.0
        %2038 = vmatpush.msra.mxu0 0.0
        %2039 = vmatpush.msra.mxu0 0.0
        %2040 = vmatpush.msra.mxu0 0.0
        %2041 = vmatpush.msra.mxu0 0.0
        %2042 = vmatpush.msra.mxu0 %v1961
        %2043 = vmatmul.f32.gmra.mxu0 %v2022
        %v2044 = vpop.f32.mrf.mxu0
        %v2045 = vadd.f32 0.0, %v2044
        %2046 = vmatmul.f32.gmra.mxu0 %v2025
        %v2047 = vpop.f32.mrf.mxu0
        %v2048 = vadd.f32 0.0, %v2047
        %2049 = vdwg.mxu0
        %v2051 = vsel %vm773, %v1953, 0
        %v2054 = vsel %vm773, %v1956, 0
        %2056 = vmatpush.msra.mxu0 0.0
        %2057 = vmatpush.msra.mxu0 0.0
        %2058 = vmatpush.msra.mxu0 0.0
        %2059 = vmatpush.msra.mxu0 0.0
        %2060 = vmatpush.msra.mxu0 0.0
        %2061 = vmatpush.msra.mxu0 0.0
        %2062 = vmatpush.msra.mxu0 0.0
        %2063 = vmatpush.msra.mxu0 0.0
        %2064 = vmatpush.msra.mxu0 0.0
        %2065 = vmatpush.msra.mxu0 0.0
        %2066 = vmatpush.msra.mxu0 0.0
        %2067 = vmatpush.msra.mxu0 0.0
        %2068 = vmatpush.msra.mxu0 0.0
        %2069 = vmatpush.msra.mxu0 0.0
        %2070 = vmatpush.msra.mxu0 0.0
        %2071 = vmatpush.msra.mxu0 %v1962
        %2072 = vmatmul.f32.gmra.mxu0 %v2051
        %v2073 = vpop.f32.mrf.mxu0
        %v2074 = vadd.f32 0.0, %v2073
        %2075 = vmatmul.f32.gmra.mxu0 %v2054
        %v2076 = vpop.f32.mrf.mxu0
        %v2077 = vadd.f32 0.0, %v2076
        %2078 = vdwg.mxu0
        %v2079 = vsel %vm655, %v1987, 0.0
        %v2080 = vsel %vm655, %v2016, 0.0
        %v2081 = vadd.f32 %v2079, %v2080
        %v2082 = vsel %vm655, %v2045, 0.0
        %v2083 = vadd.f32 %v2081, %v2082
        %v2084 = vsel %vm655, %v2074, 0.0
        %v2085 = vadd.f32 %v2083, %v2084
        %v2086 = vsel %vm659, %v1990, 0.0
        %v2087 = vsel %vm659, %v2019, 0.0
        %v2088 = vadd.f32 %v2086, %v2087
        %v2089 = vsel %vm659, %v2048, 0.0
        %v2090 = vadd.f32 %v2088, %v2089
        %v2091 = vsel %vm659, %v2077, 0.0
        %v2092 = vadd.f32 %v2090, %v2091
        %s2093 = scalar_lea.vmem %s8, 1
        %v2094 = vld [vmem:[%s2093] sm:$0x1]
        %v2096 = vperm.slane %v2094, 0
        %v2098 = vadd.f32 %v2085, %v2096
        %v2099 = vadd.f32 %v2092, %v2096
        %v2100 = vadd.f32 %v1457, %v2098
        %v2101 = vadd.f32 %v1458, %v2099
        %s2102 = scalar_lea.vmem %s9, 1
        %v2103 = vld [vmem:[%s2102] sm:$0x1]
        %s2104 = scalar_lea.vmem %s10, 1
        %v2105 = vld [vmem:[%s2104] sm:$0x1]
        %v2106 = vsel %vm655, %v2100, 0.0
        %2107 = vadd.xlane.f32.xlu0 %v2106
        %v2108 = vpop.xlane.xlu0 %2107
        %v2109 = vsel %vm659, %v2101, 0.0
        %2110 = vadd.xlane.f32.xlu0 %v2109
        %v2111 = vpop.xlane.xlu0 %2110
        %v2112 = vmul.f32 %v2108, %v669
        %v2113 = vmul.f32 %v2111, %v669
        %v2114 = vsub.f32 %v2100, %v2112
        %v2115 = vsub.f32 %v2101, %v2113
        %v2116 = vmul.f32 %v2114, %v2114
        %v2117 = vmul.f32 %v2115, %v2115
        %v2118 = vsel %vm655, %v2116, 0.0
        %2119 = vadd.xlane.f32.xlu0 %v2118
        %v2120 = vpop.xlane.xlu0 %2119
        %v2121 = vsel %vm659, %v2117, 0.0
        %2122 = vadd.xlane.f32.xlu0 %v2121
        %v2123 = vpop.xlane.xlu0 %2122
        %v2124 = vmul.f32 %v2120, %v669
        %v2125 = vmul.f32 %v2123, %v669
        %v2126 = vadd.f32 %v2124, 1e-05
        %v2127 = vadd.f32 %v2125, 1e-05
        %v2128 = vrsqrt.pop %v2126
        %v2129 = vmul.f32 %v2128, %v2126
        %v2130 = vmul.f32 %v2129, %v2128
        %v2131 = vmul.f32 0.5, %v2130
        %v2132 = vsub.f32 1.5, %v2131
        %v2133 = vmul.f32 %v2128, %v2132
        %vm2134 = vweird.f32 %v2126
        %vm2135 = vweird.f32 %v2128
        %vm2136 = vmor %vm2134, %vm2135
        %v2137 = vsel %vm2136, %v2128, %v2133
        %v2138 = vrsqrt.pop %v2127
        %v2139 = vmul.f32 %v2138, %v2127
        %v2140 = vmul.f32 %v2139, %v2138
        %v2141 = vmul.f32 0.5, %v2140
        %v2142 = vsub.f32 1.5, %v2141
        %v2143 = vmul.f32 %v2138, %v2142
        %vm2144 = vweird.f32 %v2127
        %vm2145 = vweird.f32 %v2138
        %vm2146 = vmor %vm2144, %vm2145
        %v2147 = vsel %vm2146, %v2138, %v2143
        %v2148 = vmul.f32 %v2114, %v2137
        %v2149 = vmul.f32 %v2115, %v2147
        %v2151 = vperm.slane %v2103, 0
        %v2153 = vmul.f32 %v2148, %v2151
        %v2154 = vmul.f32 %v2149, %v2151
        %v2156 = vperm.slane %v2105, 0
        %v2158 = vadd.f32 %v2153, %v2156
        %v2159 = vadd.f32 %v2154, %v2156
        %s2160 = scalar_lea.vmem %s11, 32
        %v2161 = vld [vmem:[%s2160] sm:$0xff]
        %v2162 = vld [vmem:[%s2160 + $0x8] sm:$0xff]
        %v2163 = vld [vmem:[%s2160 + $0x10] sm:$0xff]
        %v2164 = vld [vmem:[%s2160 + $0x18] sm:$0xff]
        %s2165 = scalar_lea.vmem %s12, 1
        %v2166 = vld [vmem:[%s2165] sm:$0x1]
        %v2168 = vperm.slane %v2166, 0
        %v2171 = vsel %vm655, %v2158, 0
        %v2174 = vsel %vm655, %v2159, 0
        %2176 = vmatpush.msra.mxu0 0.0
        %2177 = vmatpush.msra.mxu0 0.0
        %2178 = vmatpush.msra.mxu0 0.0
        %2179 = vmatpush.msra.mxu0 0.0
        %2180 = vmatpush.msra.mxu0 0.0
        %2181 = vmatpush.msra.mxu0 0.0
        %2182 = vmatpush.msra.mxu0 0.0
        %2183 = vmatpush.msra.mxu0 0.0
        %2184 = vmatpush.msra.mxu0 0.0
        %2185 = vmatpush.msra.mxu0 0.0
        %2186 = vmatpush.msra.mxu0 0.0
        %2187 = vmatpush.msra.mxu0 0.0
        %2188 = vmatpush.msra.mxu0 %v2164
        %2189 = vmatpush.msra.mxu0 %v2163
        %2190 = vmatpush.msra.mxu0 %v2162
        %2191 = vmatpush.msra.mxu0 %v2161
        %2192 = vmatmul.f32.gmra.mxu0 %v2171
        %v2193 = vpop.f32.mrf.mxu0
        %v2194 = vadd.f32 %v2168, %v2193
        %2195 = vmatmul.f32.gmra.mxu0 %v2174
        %v2196 = vpop.f32.mrf.mxu0
        %v2197 = vadd.f32 %v2168, %v2196
        %2198 = vdwg.mxu0
        %v2199 = vmul.f32 %v2194, 0.5
        %v2200 = vmul.f32 %v2197, 0.5
        %v2201 = vmul.f32 %v2194, 0.044715
        %v2202 = vmul.f32 %v2197, 0.044715
        %v2203 = vmul.f32 %v2201, %v2194
        %v2204 = vmul.f32 %v2202, %v2197
        %v2205 = vmul.f32 %v2203, %v2194
        %v2206 = vmul.f32 %v2204, %v2197
        %v2207 = vadd.f32 %v2194, %v2205
        %v2208 = vadd.f32 %v2197, %v2206
        %v2209 = vmul.f32 %v2207, 0.7978846
        %v2210 = vmul.f32 %v2208, 0.7978846
        %v2211 = vtanh.pop %v2209
        %v2212 = vtanh.pop %v2210
        %v2213 = vadd.f32 %v2211, 1.0
        %v2214 = vadd.f32 %v2212, 1.0
        %v2215 = vmul.f32 %v2199, %v2213
        %v2216 = vmul.f32 %v2200, %v2214
        %s2217 = scalar_lea.vmem %s13, 128
        %v2218 = vld [vmem:[%s2217] sm:$0xff]
        %v2219 = vld [vmem:[%s2217 + $0x8] sm:$0xff]
        %v2220 = vld [vmem:[%s2217 + $0x10] sm:$0xff]
        %v2221 = vld [vmem:[%s2217 + $0x18] sm:$0xff]
        %v2222 = vld [vmem:[%s2217 + $0x20] sm:$0xff]
        %v2223 = vld [vmem:[%s2217 + $0x28] sm:$0xff]
        %v2224 = vld [vmem:[%s2217 + $0x30] sm:$0xff]
        %v2225 = vld [vmem:[%s2217 + $0x38] sm:$0xff]
        %v2226 = vld [vmem:[%s2217 + $0x40] sm:$0xff]
        %v2227 = vld [vmem:[%s2217 + $0x48] sm:$0xff]
        %v2228 = vld [vmem:[%s2217 + $0x50] sm:$0xff]
        %v2229 = vld [vmem:[%s2217 + $0x58] sm:$0xff]
        %v2230 = vld [vmem:[%s2217 + $0x60] sm:$0xff]
        %v2231 = vld [vmem:[%s2217 + $0x68] sm:$0xff]
        %v2232 = vld [vmem:[%s2217 + $0x70] sm:$0xff]
        %v2233 = vld [vmem:[%s2217 + $0x78] sm:$0xff]
        %s2234 = scalar_lea.vmem %s14, 1
        %v2235 = vld [vmem:[%s2234] sm:$0x1]
        %v2237 = vperm.slane %v2235, 0
        %2239 = vmatpush.msra.mxu0 %v2233
        %2240 = vmatpush.msra.mxu0 %v2232
        %2241 = vmatpush.msra.mxu0 %v2231
        %2242 = vmatpush.msra.mxu0 %v2230
        %2243 = vmatpush.msra.mxu0 %v2229
        %2244 = vmatpush.msra.mxu0 %v2228
        %2245 = vmatpush.msra.mxu0 %v2227
        %2246 = vmatpush.msra.mxu0 %v2226
        %2247 = vmatpush.msra.mxu0 %v2225
        %2248 = vmatpush.msra.mxu0 %v2224
        %2249 = vmatpush.msra.mxu0 %v2223
        %2250 = vmatpush.msra.mxu0 %v2222
        %2251 = vmatpush.msra.mxu0 %v2221
        %2252 = vmatpush.msra.mxu0 %v2220
        %2253 = vmatpush.msra.mxu0 %v2219
        %2254 = vmatpush.msra.mxu0 %v2218
        %2255 = vmatmul.f32.gmra.mxu0 %v2215
        %v2256 = vpop.f32.mrf.mxu0
        %v2257 = vadd.f32 %v2237, %v2256
        %2258 = vmatmul.f32.gmra.mxu0 %v2216
        %v2259 = vpop.f32.mrf.mxu0
        %v2260 = vadd.f32 %v2237, %v2259
        %2261 = vdwg.mxu0
        %v2262 = vadd.f32 %v2100, %v2257
        %v2263 = vadd.f32 %v2101, %v2260
        %2264 = vst.msk [vmem:[%s610] sm:$0xff] %vm655, %v2262
        %v2265 = vld [vmem:[%s15] sm:$0x1]
        %v2266 = vld [vmem:[%s16] sm:$0x1]
        %v2267 = vsel %vm659, %v2263, 0.0
        %2268 = vadd.xlane.f32.xlu0 %v2267
        %v2269 = vpop.xlane.xlu0 %2268
        %v2270 = vmul.f32 %v2269, %v669
        %v2271 = vsub.f32 %v2263, %v2270
        %v2272 = vmul.f32 %v2271, %v2271
        %v2273 = vsel %vm659, %v2272, 0.0
        %2274 = vadd.xlane.f32.xlu0 %v2273
        %v2275 = vpop.xlane.xlu0 %2274
        %v2276 = vmul.f32 %v2275, %v669
        %v2277 = vadd.f32 %v2276, 1e-05
        %v2278 = vrsqrt.pop %v2277
        %v2279 = vmul.f32 %v2278, %v2277
        %v2280 = vmul.f32 %v2279, %v2278
        %v2281 = vmul.f32 0.5, %v2280
        %v2282 = vsub.f32 1.5, %v2281
        %v2283 = vmul.f32 %v2278, %v2282
        %vm2284 = vweird.f32 %v2277
        %vm2285 = vweird.f32 %v2278
        %vm2286 = vmor %vm2284, %vm2285
        %v2287 = vsel %vm2286, %v2278, %v2283
        %v2288 = vmul.f32 %v2271, %v2287
        %v2289 = vmul.f32 %v2288, %v2265
        %v2290 = vadd.f32 %v2289, %v2266
        %v2291 = vld [vmem:[%s17] sm:$0xff]
        %v2292 = vld [vmem:[%s17 + $0x8] sm:$0xff]
        %v2293 = vld [vmem:[%s17 + $0x10] sm:$0xff]
        %v2294 = vld [vmem:[%s17 + $0x18] sm:$0xff]
        %v2296 = vsel %vm655, %v2290, 0
        %2298 = vmatpush.msra.mxu0 0.0
        %2299 = vmatpush.msra.mxu0 0.0
        %2300 = vmatpush.msra.mxu0 0.0
        %2301 = vmatpush.msra.mxu0 0.0
        %2302 = vmatpush.msra.mxu0 0.0
        %2303 = vmatpush.msra.mxu0 0.0
        %2304 = vmatpush.msra.mxu0 0.0
        %2305 = vmatpush.msra.mxu0 0.0
        %2306 = vmatpush.msra.mxu0 0.0
        %2307 = vmatpush.msra.mxu0 0.0
        %2308 = vmatpush.msra.mxu0 0.0
        %2309 = vmatpush.msra.mxu0 0.0
        %2310 = vmatpush.msra.mxu0 %v2294
        %2311 = vmatpush.msra.mxu0 %v2293
        %2312 = vmatpush.msra.mxu0 %v2292
        %2313 = vmatpush.msra.mxu0 %v2291
        %2314 = vmatmul.f32.gmra.mxu0 %v2296
        %v2315 = vpop.f32.mrf.mxu0
        %v2316 = vadd.f32 0.0, %v2315
        %2317 = vdwg.mxu0
        %v2318 = vmul.f32 %v2316, %v2316
        %v2319 = vsel %vm659, %v2318, 0.0
        %2320 = vadd.xlane.f32.xlu0 %v2319
        %v2321 = vpop.xlane.xlu0 %2320
        %v2322 = vmax.f32 %v2321, 1e-24
        %v2323 = vrsqrt.pop %v2322
        %v2324 = vmul.f32 %v2323, %v2322
        %v2325 = vmul.f32 %v2324, %v2323
        %v2326 = vmul.f32 0.5, %v2325
        %v2327 = vsub.f32 1.5, %v2326
        %v2328 = vmul.f32 %v2323, %v2327
        %vm2329 = vweird.f32 %v2322
        %vm2330 = vweird.f32 %v2323
        %vm2331 = vmor %vm2329, %vm2330
        %v2332 = vsel %vm2331, %v2323, %v2328
        %v2333 = vmul.f32 %v2316, %v2332
        %2334 = vst.msk [vmem:[%s616] sm:$0x1] %vm659, %v2333
        %s2335 = sand.u32 %s433, 1
        %s2336 = scalar_lea.sflag [#allocation3], %s2335
        %s2337 = sand.u32 %s433, 1
        %s2338 = smul.addr %s2337, 8
        %s2339 = scalar_lea.vmem [#allocation2], %s2338
        %s2340 = sand.u32 %s459, 1
        %s2341 = scalar_lea.sflag [#allocation5], %s2340
        %s2342 = sand.u32 %s459, 1
        %s2343 = scalar_lea.vmem [#allocation4], %s2342
        // Predicated region
        $region93: #{coca_text_encoder.1} parent=91 // pred_check
          %p2344 = pneg %p443
        $region94: #{coca_text_encoder.1} parent=91 // pred_check_branch
          %2346 = sbr.rel (%p2344) target = $region96
        $region95: #{coca_text_encoder.1} parent=91 // pred_region
          %2348 = vsyncadd %s2336, 0
          %s2349 = smul.addr %s37, 8
          %s2350 = scalar_lea.hbm %s18, %s2349
          %s2352 = sshll.u32 %s2339, 4
          %s2353 = int_to_ptr.vmem [resolvable:$true] %s2352
          %s2354 = sshll.u32 %s2350, 4
          %s2355 = int_to_ptr.hbm [resolvable:$true] %s2354
          %2357 = dma.vmem_to_hbm [thread:$0]  %s2353, 128, %s2355, %s2336
        $region96: #{coca_text_encoder.1} parent=91 // pred_fallthru
          _
        // Predicated region
        $region97: #{coca_text_encoder.1} parent=91 // pred_check
          %p2358 = pneg %p469
        $region98: #{coca_text_encoder.1} parent=91 // pred_check_branch
          %2360 = sbr.rel (%p2358) target = $region100
        $region99: #{coca_text_encoder.1} parent=91 // pred_region
          %2362 = vsyncadd %s2341, 0
          %s2363 = scalar_lea.hbm %s19, %s37
          %s2365 = sshll.u32 %s2343, 4
          %s2366 = int_to_ptr.vmem [resolvable:$true] %s2365
          %s2367 = sshll.u32 %s2363, 4
          %s2368 = int_to_ptr.hbm [resolvable:$true] %s2367
          %2370 = dma.vmem_to_hbm [thread:$0]  %s2366, 16, %s2368, %s2341
        $region100: #{coca_text_encoder.1} parent=91 // pred_fallthru
          _
      $region92: #{coca_text_encoder.1} parent=5 // pred_fallthru
        _
      %p2371 = scmp.le.s32.totalorder 2, %s32
      // Predicated region
      $region101: #{coca_text_encoder.1} parent=5 // pred_check
        %p2372 = pneg %p2371
      $region102: #{coca_text_encoder.1} parent=5 // pred_check_branch
        %2374 = sbr.rel (%p2372) target = $region104
      $region103: #{coca_text_encoder.1} parent=5 // pred_region
        %s2375 = ssub.s32 %s32, 2
        // Predicated region
        $region105: #{coca_text_encoder.1} parent=103 // pred_check
          %p2376 = pneg %p449
        $region106: #{coca_text_encoder.1} parent=103 // pred_check_branch
          %2378 = sbr.rel (%p2376) target = $region108
        $region107: #{coca_text_encoder.1} parent=103 // pred_region
          %s2379 = sand.u32 %s434, 1
          %s2380 = scalar_lea.sflag [#allocation3], %s2379
          %s2381 = sand.u32 %s434, 1
          %s2382 = smul.addr %s2381, 8
          %s2383 = scalar_lea.vmem [#allocation2], %s2382
          %2385 = dma.done %s2380, 128
        $region108: #{coca_text_encoder.1} parent=103 // pred_fallthru
          _
        // Predicated region
        $region109: #{coca_text_encoder.1} parent=103 // pred_check
          %p2386 = pneg %p475
        $region110: #{coca_text_encoder.1} parent=103 // pred_check_branch
          %2388 = sbr.rel (%p2386) target = $region112
        $region111: #{coca_text_encoder.1} parent=103 // pred_region
          %s2389 = sand.u32 %s460, 1
          %s2390 = scalar_lea.sflag [#allocation5], %s2389
          %s2391 = sand.u32 %s460, 1
          %s2392 = scalar_lea.vmem [#allocation4], %s2391
          %2394 = dma.done %s2390, 16
        $region112: #{coca_text_encoder.1} parent=103 // pred_fallthru
          _
      $region104: #{coca_text_encoder.1} parent=5 // pred_fallthru
        _
    $region6: #{coca_text_encoder.1} parent=1 // loop_footer
      %s36 = sadd.s32 1, %s32
    $region7: #{coca_text_encoder.1} parent=1 // loop_footer_branch
      %31 = sbr.rel target = $region3
    $region8: #{coca_text_encoder.1} parent=1 // loop_exit
      _
    %2395 = vsyncpa [#allocation3], 1
    %s2396 = scalar_lea.sflag [#allocation3], 1
    %2397 = vsyncpa %s2396, 1
    %2398 = vsyncpa [#allocation5], 1
    %s2399 = scalar_lea.sflag [#allocation5], 1
    %2400 = vsyncpa %s2399, 1

</llo_original>
